<compile_context>
chip_gen: v5e
topology: v5e:2x2
jax: 0.10.0
libtpu: 0.0.40
codegen_flags: <defaults>
</compile_context>

<pallas_src>
import functools

import numpy as np
import jax
import jax.numpy as jnp
from jax import lax
from jax.experimental import pallas as pl
from jax.experimental.pallas import tpu as pltpu


# ---------------------------------------------------------------------------
# Pallas kernel: group-conv-attention hot path.  One grid step per batch item;
# heads (H) and key-group elements (M) are fused into the body.
#
# Per batch item b and head h:
#   s[g*P+p, m*KL+kl] = sum_c q[g,p,c] * k[m,c,kl]            (one MXU matmul)
#   attn[g,p,m,kl]    = softmax_{kl}(scale * s[...])          (per m, as in ref)
#   out[p,c]         += sum_{g,m,kl} attn[g,p,m,kl] * v[m,kl,c]
# The group-embedding score of the reference is constant along the softmax
# (kl) axis and cancels exactly, so it is omitted and the result is broadcast
# over the output group axis V in the wrapper.
# ---------------------------------------------------------------------------
def _attn_kernel(q_ref, k_ref, v_ref, o_ref, *, scale, G):
    _, H, GP, C = q_ref.shape          # q: (1, H, G*P, C)
    _, _, M, KL, _ = v_ref.shape       # v: (1, H, M, KL, C);  k: (1, H, C, M*KL)
    P = GP // G

    out_cols = []
    for h in range(H):                 # tiny static loop, unrolled at trace time
        qf = q_ref[0, h]               # (G*P, C)
        ks = k_ref[0, h]               # (C, M*KL): all key-group elements stacked
        # content scores: a single (G*P, C) x (C, M*KL) MXU matmul per head
        s = jnp.dot(qf, ks, preferred_element_type=jnp.float32) * scale

        acc = jnp.zeros((P, C), jnp.float32)
        for m in range(M):             # softmax is per key-group element m, over KL
            sm = s[:, m * KL:(m + 1) * KL].reshape(G, P, KL)
            sm = sm - jnp.max(sm, axis=-1, keepdims=True)
            e = jnp.exp(sm)
            z = jnp.sum(e, axis=-1, keepdims=True)
            attn = e * pl.reciprocal(z, approx=True)   # EUP reciprocal, not VPU divide
            # TODO(synk): attn_drop is eval-mode identity here (no dropout applied).
            a = jnp.sum(attn, axis=0)                  # (P, KL): sum over query group g
            acc = acc + jnp.dot(a, v_ref[0, h, m],
                                preferred_element_type=jnp.float32)   # (P, C)
        out_cols.append(acc.T)         # (C, P): spatial axis goes onto lanes

    # Single lane-dense store: (C, H*P)  (last dim = 128 in the test config).
    o_ref[0] = jnp.concatenate(out_cols, axis=-1)


def pallas_group_attention(q, k, v, *, scale, G):
    # q: (B, H, G*P, C)   k: (B, H, C, M*KL)   v: (B, H, M, KL, C)
    B, H, GP, C = q.shape
    M, KL = v.shape[2], v.shape[3]
    P = GP // G
    kernel = functools.partial(_attn_kernel, scale=scale, G=G)
    return pl.pallas_call(
        kernel,
        out_shape=jax.ShapeDtypeStruct((B, C, H * P), jnp.float32),
        grid_spec=pltpu.PrefetchScalarGridSpec(
            num_scalar_prefetch=0,
            grid=(B,),
            in_specs=[
                pl.BlockSpec((1, H, GP, C), lambda b: (b, 0, 0, 0)),
                pl.BlockSpec((1, H, C, M * KL), lambda b: (b, 0, 0, 0)),
                pl.BlockSpec((1, H, M, KL, C), lambda b: (b, 0, 0, 0, 0)),
            ],
            out_specs=pl.BlockSpec((1, C, H * P), lambda b: (b, 0, 0)),
        ),
        compiler_params=pltpu.CompilerParams(
            dimension_semantics=("parallel",)),     # both v7x TensorCores get a batch item
    )(q, k, v)


# ---------------------------------------------------------------------------
# Plain-JAX glue: depthwise 3D conv + BatchNorm (eval), 1x1 conv projections.
# ---------------------------------------------------------------------------
def depthwise_conv3d(x, w, stride, padding):
    # x: (B, Cin, D, H, W), w: (Cin, 1, 3, 3, 3), groups = Cin, no bias
    return lax.conv_general_dilated(
        x, w, window_strides=stride, padding=padding,
        dimension_numbers=("NCDHW", "OIDHW", "NCDHW"),
        feature_group_count=x.shape[1])


def batchnorm3d(x, p, eps=1e-5):
    # eval-mode BatchNorm3d with synthetic running stats
    inv = p["gamma"] / jnp.sqrt(p["var"] + eps)
    shift = p["beta"] - p["mean"] * inv
    return x * inv[None, :, None, None, None] + shift[None, :, None, None, None]


def conv1x1(x, w, b):
    # Conv3d with kernel_size=1 == per-position channel matmul
    return jnp.einsum("bcdhw,oc->bodhw", x, w) + b[None, :, None, None, None]


def pallas_attention(q, k, v, ge, nh, Co, scale):
    # q: (B, nh*Co, G, I, J),  k/v: (B, nh*Co, M, K, L),  ge: (V, G, M, Co)
    B, _, G, I, J = q.shape
    M, K, L = k.shape[2], k.shape[3], k.shape[4]
    V = ge.shape[0]
    P, KL = I * J, K * L
    # channels-last layouts for the kernel (channel index = h*Co + c)
    q5 = (q.reshape(B, nh, Co, G, I, J)
           .transpose(0, 1, 3, 4, 5, 2).reshape(B, nh, G * P, Co))
    k5 = k.reshape(B, nh, Co, M, K, L).reshape(B, nh, Co, M * KL)
    v5 = (v.reshape(B, nh, Co, M, K, L)
           .transpose(0, 1, 3, 4, 5, 2).reshape(B, nh, M, KL, Co))
    # Note: g_emb (ge) is intentionally NOT passed to the kernel -- its score is
    # constant along the softmax (K*L) axis of the reference module and cancels
    # exactly, so the output is independent of the group-embedding values.
    out = pallas_group_attention(q5, k5, v5, scale=scale, G=G)   # (B, Co, nh*P)
    out = out.reshape(B, Co, nh, I, J)
    # the result is identical for every output group element v -> broadcast over V
    return jnp.broadcast_to(out[:, :, :, None, :, :], (B, Co, nh, V, I, J))


def reference_attention(q, k, v, ge, nh, Co, scale):
    # pure-JAX replica of the PyTorch einsum chain (for validation), including
    # the group-embedding score term that cancels mathematically.
    B, _, G, I, J = q.shape
    M, K, L = k.shape[2], k.shape[3], k.shape[4]
    q6 = q.reshape(B, nh, Co, G, I, J).transpose(0, 2, 1, 3, 4, 5)  # (B,C,H,G,I,J)
    k6 = k.reshape(B, nh, Co, M, K, L).transpose(0, 2, 1, 3, 4, 5)
    v6 = v.reshape(B, nh, Co, M, K, L).transpose(0, 2, 1, 3, 4, 5)
    g_scores = jnp.einsum("bchgij,vgmc->bhvgijm", q6, ge)
    attn_c = jnp.einsum("bchgij,bchmkl->bhgijmkl", q6, k6)
    score = (g_scores[..., None, None] + attn_c[:, :, None]) * scale
    sh = score.shape
    attn = jax.nn.softmax(score.reshape(*sh[:-2], -1), axis=-1).reshape(sh)
    return jnp.einsum("bhvgijmkl,bchmkl->bchvij", attn, v6)


def group_conv_attention_forward(x, params, cfg, attention_fn):
    nh, Co = cfg["num_heads"], cfg["out_channels"]
    dim_out = nh * Co
    scale = dim_out ** (-0.5)

    # forward_conv: depthwise conv + BN projections (method='dw_bn')
    q = batchnorm3d(depthwise_conv3d(x, params["dw_q"], (1, 1, 1),
                                     [(1, 1), (1, 1), (1, 1)]), params["bn_q"])
    k = batchnorm3d(depthwise_conv3d(x, params["dw_k"], (1, 2, 2),
                                     [(1, 1), (3, 3), (3, 3)]), params["bn_k"])
    v = batchnorm3d(depthwise_conv3d(x, params["dw_v"], (1, 2, 2),
                                     [(1, 1), (3, 3), (3, 3)]), params["bn_v"])

    # proj_q/k/v: Conv3d kernel_size=1
    q = conv1x1(q, params["pq_w"], params["pq_b"])     # (B, dim_out, G, I, J)
    k = conv1x1(k, params["pk_w"], params["pk_b"])     # (B, dim_out, M, K, L)
    v = conv1x1(v, params["pv_w"], params["pv_b"])

    # group embedding lookup: (V, G, M, C_head)
    ge = params["g_emb"][cfg["g_indices"]]

    x_att = attention_fn(q, k, v, ge, nh, Co, scale)   # (B, Co, nh, V, I, J)

    # 'b c h g i j -> b (c h) g i j' then proj_out (1x1 Conv3d)
    B, _, _, V, I, J = x_att.shape
    y = x_att.reshape(B, Co * nh, V, I, J)
    y = conv1x1(y, params["po_w"], params["po_b"])     # (B, Co, V, I, J)
    return y


# ---------------------------------------------------------------------------
# Deterministic synthetic group (cyclic C4) and parameter init.
# ---------------------------------------------------------------------------
def make_cyclic_group_indices(n):
    a = jnp.arange(n)
    rel = (a[None, :] - a[:, None]) % n            # relative positions on G: (G, M)
    g_idx = (a[:, None, None] + rel[None]) % n     # left action of each element: (V, G, M)
    return g_idx


def init_params(key, cfg):
    Cin, Co, nh, Gn = (cfg["in_channels"], cfg["out_channels"],
                       cfg["num_heads"], cfg["group_order"])
    dim_out = Co * nh
    ks = iter(jax.random.split(key, 32))

    def nrm(shape, s=0.1):
        return s * jax.random.normal(next(ks), shape, jnp.float32)

    def bn():
        return {"gamma": 1.0 + nrm((Cin,)),
                "beta": nrm((Cin,)),
                "mean": nrm((Cin,)),
                "var": 1.0 + 0.2 * jnp.abs(jax.random.normal(next(ks), (Cin,), jnp.float32))}

    return {
        "dw_q": nrm((Cin, 1, 3, 3, 3)),
        "dw_k": nrm((Cin, 1, 3, 3, 3)),
        "dw_v": nrm((Cin, 1, 3, 3, 3)),
        "bn_q": bn(), "bn_k": bn(), "bn_v": bn(),
        "pq_w": nrm((dim_out, Cin)), "pq_b": nrm((dim_out,)),
        "pk_w": nrm((dim_out, Cin)), "pk_b": nrm((dim_out,)),
        "pv_w": nrm((dim_out, Cin)), "pv_b": nrm((dim_out,)),
        "po_w": nrm((Co, dim_out)), "po_b": nrm((Co,)),
        "g_emb": nrm((Gn, Co), s=1.0),               # nn.Embedding(|G|, dim // num_heads)
    }


if __name__ == "__main__":
    cfg = dict(in_channels=4, mid_channels=12, out_channels=4, num_heads=2,
               group_order=4, max_pos_embedding=8, attention_dropout_rate=0.0)
    cfg["g_indices"] = make_cyclic_group_indices(cfg["group_order"])

    B, Cin, G, W, H = 2, cfg["in_channels"], cfg["group_order"], 8, 8
    key = jax.random.PRNGKey(0)
    kx, kp = jax.random.split(key)
    x = jax.random.normal(kx, (B, Cin, G, W, H), jnp.float32)
    params = init_params(kp, cfg)

    out = group_conv_attention_forward(x, params, cfg, pallas_attention)
    out = jax.block_until_ready(out)

    ref = group_conv_attention_forward(x, params, cfg, reference_attention)
    ref = jax.block_until_ready(ref)

    assert out.shape == (B, cfg["out_channels"], G, W, H), out.shape
    # tolerance covers the EUP approximate reciprocal used for the softmax denom
    np.testing.assert_allclose(np.asarray(out), np.asarray(ref), rtol=5e-3, atol=5e-4)
    print("KERNEL_OK")
</pallas_src>

<mosaic_0001>
module attributes {stable_mosaic.version = 11 : i64} {
  func.func @_attn_kernel(%arg0: i32, %arg1: memref<1x2x256x4xf32, #tpu.memory_space<vmem>>, %arg2: memref<1x2x4x144xf32, #tpu.memory_space<vmem>>, %arg3: memref<1x2x4x36x4xf32, #tpu.memory_space<vmem>>, %arg4: memref<1x4x128xf32, #tpu.memory_space<vmem>>) attributes {dimension_semantics = [#tpu.dimension_semantics<parallel>], iteration_bounds = array<i64: 2>, scalar_prefetch = 0 : i64, scratch_operands = 0 : i64, tpu.core_type = #tpu.core_type<tc>, window_params = [{transform_indices = @transform_0, window_bounds = array<i64: 1, 2, 256, 4>}, {transform_indices = @transform_1, window_bounds = array<i64: 1, 2, 4, 144>}, {transform_indices = @transform_2, window_bounds = array<i64: 1, 2, 4, 36, 4>}, {transform_indices = @transform_3, window_bounds = array<i64: 1, 4, 128>}]} {
    %c0 = arith.constant 0 : index
    %c0_0 = arith.constant 0 : index
    %c0_1 = arith.constant 0 : index
    %c0_2 = arith.constant 0 : index
    %0 = vector.load %arg1[%c0, %c0_0, %c0_1, %c0_2] : memref<1x2x256x4xf32, #tpu.memory_space<vmem>>, vector<1x1x256x4xf32>
    %1 = vector.shape_cast %0 : vector<1x1x256x4xf32> to vector<256x4xf32>
    %c0_3 = arith.constant 0 : index
    %c0_4 = arith.constant 0 : index
    %c0_5 = arith.constant 0 : index
    %c0_6 = arith.constant 0 : index
    %2 = vector.load %arg2[%c0_3, %c0_4, %c0_5, %c0_6] : memref<1x2x4x144xf32, #tpu.memory_space<vmem>>, vector<1x1x4x144xf32>
    %3 = vector.shape_cast %2 : vector<1x1x4x144xf32> to vector<4x144xf32>
    %cst = arith.constant dense<0.000000e+00> : vector<256x144xf32>
    %4 = tpu.matmul %1, %3, %cst {dimension_numbers = #tpu.dot_dimension_numbers<[1], [0], [0], [1], [0, 0, 1, 1], [], []>} : vector<256x4xf32>, vector<4x144xf32>, vector<256x144xf32> -> vector<256x144xf32>
    %cst_7 = arith.constant 0.353553385 : f32
    %5 = vector.broadcast %cst_7 : f32 to vector<256x144xf32>
    %6 = arith.mulf %4, %5 : vector<256x144xf32>
    %cst_8 = arith.constant 0.000000e+00 : f32
    %7 = vector.broadcast %cst_8 : f32 to vector<64x4xf32>
    %8 = vector.extract_strided_slice %6 {offsets = [0, 0], sizes = [256, 36], strides = [1, 1]} : vector<256x144xf32> to vector<256x36xf32>
    %9 = vector.shape_cast %8 : vector<256x36xf32> to vector<4x64x36xf32>
    %cst_9 = arith.constant dense<0xFF800000> : vector<4x64xf32>
    %10 = vector.multi_reduction <maximumf>, %9, %cst_9 [2] : vector<4x64x36xf32> to vector<4x64xf32>
    %11 = vector.shape_cast %10 : vector<4x64xf32> to vector<4x64x1xf32>
    %12 = vector.broadcast %11 : vector<4x64x1xf32> to vector<4x64x36xf32>
    %13 = arith.subf %9, %12 : vector<4x64x36xf32>
    %14 = math.exp %13 : vector<4x64x36xf32>
    %cst_10 = arith.constant dense<0.000000e+00> : vector<4x64xf32>
    %15 = vector.multi_reduction <add>, %14, %cst_10 [2] : vector<4x64x36xf32> to vector<4x64xf32>
    %16 = vector.shape_cast %15 : vector<4x64xf32> to vector<4x64x1xf32>
    %17 = tpu.reciprocal %16 {approx = true} : vector<4x64x1xf32> -> vector<4x64x1xf32>
    %18 = vector.broadcast %17 : vector<4x64x1xf32> to vector<4x64x36xf32>
    %19 = arith.mulf %14, %18 : vector<4x64x36xf32>
    %cst_11 = arith.constant dense<0.000000e+00> : vector<64x36xf32>
    %20 = vector.multi_reduction <add>, %19, %cst_11 [0] : vector<4x64x36xf32> to vector<64x36xf32>
    %c0_12 = arith.constant 0 : index
    %c0_13 = arith.constant 0 : index
    %c0_14 = arith.constant 0 : index
    %c0_15 = arith.constant 0 : index
    %c0_16 = arith.constant 0 : index
    %21 = vector.load %arg3[%c0_12, %c0_13, %c0_14, %c0_15, %c0_16] : memref<1x2x4x36x4xf32, #tpu.memory_space<vmem>>, vector<1x1x1x36x4xf32>
    %22 = vector.shape_cast %21 : vector<1x1x1x36x4xf32> to vector<36x4xf32>
    %cst_17 = arith.constant dense<0.000000e+00> : vector<64x4xf32>
    %23 = tpu.matmul %20, %22, %cst_17 {dimension_numbers = #tpu.dot_dimension_numbers<[1], [0], [0], [1], [0, 0, 1, 1], [], []>} : vector<64x36xf32>, vector<36x4xf32>, vector<64x4xf32> -> vector<64x4xf32>
    %24 = arith.addf %7, %23 : vector<64x4xf32>
    %25 = vector.extract_strided_slice %6 {offsets = [0, 36], sizes = [256, 36], strides = [1, 1]} : vector<256x144xf32> to vector<256x36xf32>
    %26 = vector.shape_cast %25 : vector<256x36xf32> to vector<4x64x36xf32>
    %cst_18 = arith.constant dense<0xFF800000> : vector<4x64xf32>
    %27 = vector.multi_reduction <maximumf>, %26, %cst_18 [2] : vector<4x64x36xf32> to vector<4x64xf32>
    %28 = vector.shape_cast %27 : vector<4x64xf32> to vector<4x64x1xf32>
    %29 = vector.broadcast %28 : vector<4x64x1xf32> to vector<4x64x36xf32>
    %30 = arith.subf %26, %29 : vector<4x64x36xf32>
    %31 = math.exp %30 : vector<4x64x36xf32>
    %cst_19 = arith.constant dense<0.000000e+00> : vector<4x64xf32>
    %32 = vector.multi_reduction <add>, %31, %cst_19 [2] : vector<4x64x36xf32> to vector<4x64xf32>
    %33 = vector.shape_cast %32 : vector<4x64xf32> to vector<4x64x1xf32>
    %34 = tpu.reciprocal %33 {approx = true} : vector<4x64x1xf32> -> vector<4x64x1xf32>
    %35 = vector.broadcast %34 : vector<4x64x1xf32> to vector<4x64x36xf32>
    %36 = arith.mulf %31, %35 : vector<4x64x36xf32>
    %cst_20 = arith.constant dense<0.000000e+00> : vector<64x36xf32>
    %37 = vector.multi_reduction <add>, %36, %cst_20 [0] : vector<4x64x36xf32> to vector<64x36xf32>
    %c0_21 = arith.constant 0 : index
    %c0_22 = arith.constant 0 : index
    %c1 = arith.constant 1 : index
    %c0_23 = arith.constant 0 : index
    %c0_24 = arith.constant 0 : index
    %38 = vector.load %arg3[%c0_21, %c0_22, %c1, %c0_23, %c0_24] : memref<1x2x4x36x4xf32, #tpu.memory_space<vmem>>, vector<1x1x1x36x4xf32>
    %39 = vector.shape_cast %38 : vector<1x1x1x36x4xf32> to vector<36x4xf32>
    %cst_25 = arith.constant dense<0.000000e+00> : vector<64x4xf32>
    %40 = tpu.matmul %37, %39, %cst_25 {dimension_numbers = #tpu.dot_dimension_numbers<[1], [0], [0], [1], [0, 0, 1, 1], [], []>} : vector<64x36xf32>, vector<36x4xf32>, vector<64x4xf32> -> vector<64x4xf32>
    %41 = arith.addf %24, %40 : vector<64x4xf32>
    %42 = vector.extract_strided_slice %6 {offsets = [0, 72], sizes = [256, 36], strides = [1, 1]} : vector<256x144xf32> to vector<256x36xf32>
    %43 = vector.shape_cast %42 : vector<256x36xf32> to vector<4x64x36xf32>
    %cst_26 = arith.constant dense<0xFF800000> : vector<4x64xf32>
    %44 = vector.multi_reduction <maximumf>, %43, %cst_26 [2] : vector<4x64x36xf32> to vector<4x64xf32>
    %45 = vector.shape_cast %44 : vector<4x64xf32> to vector<4x64x1xf32>
    %46 = vector.broadcast %45 : vector<4x64x1xf32> to vector<4x64x36xf32>
    %47 = arith.subf %43, %46 : vector<4x64x36xf32>
    %48 = math.exp %47 : vector<4x64x36xf32>
    %cst_27 = arith.constant dense<0.000000e+00> : vector<4x64xf32>
    %49 = vector.multi_reduction <add>, %48, %cst_27 [2] : vector<4x64x36xf32> to vector<4x64xf32>
    %50 = vector.shape_cast %49 : vector<4x64xf32> to vector<4x64x1xf32>
    %51 = tpu.reciprocal %50 {approx = true} : vector<4x64x1xf32> -> vector<4x64x1xf32>
    %52 = vector.broadcast %51 : vector<4x64x1xf32> to vector<4x64x36xf32>
    %53 = arith.mulf %48, %52 : vector<4x64x36xf32>
    %cst_28 = arith.constant dense<0.000000e+00> : vector<64x36xf32>
    %54 = vector.multi_reduction <add>, %53, %cst_28 [0] : vector<4x64x36xf32> to vector<64x36xf32>
    %c0_29 = arith.constant 0 : index
    %c0_30 = arith.constant 0 : index
    %c2 = arith.constant 2 : index
    %c0_31 = arith.constant 0 : index
    %c0_32 = arith.constant 0 : index
    %55 = vector.load %arg3[%c0_29, %c0_30, %c2, %c0_31, %c0_32] : memref<1x2x4x36x4xf32, #tpu.memory_space<vmem>>, vector<1x1x1x36x4xf32>
    %56 = vector.shape_cast %55 : vector<1x1x1x36x4xf32> to vector<36x4xf32>
    %cst_33 = arith.constant dense<0.000000e+00> : vector<64x4xf32>
    %57 = tpu.matmul %54, %56, %cst_33 {dimension_numbers = #tpu.dot_dimension_numbers<[1], [0], [0], [1], [0, 0, 1, 1], [], []>} : vector<64x36xf32>, vector<36x4xf32>, vector<64x4xf32> -> vector<64x4xf32>
    %58 = arith.addf %41, %57 : vector<64x4xf32>
    %59 = vector.extract_strided_slice %6 {offsets = [0, 108], sizes = [256, 36], strides = [1, 1]} : vector<256x144xf32> to vector<256x36xf32>
    %60 = vector.shape_cast %59 : vector<256x36xf32> to vector<4x64x36xf32>
    %cst_34 = arith.constant dense<0xFF800000> : vector<4x64xf32>
    %61 = vector.multi_reduction <maximumf>, %60, %cst_34 [2] : vector<4x64x36xf32> to vector<4x64xf32>
    %62 = vector.shape_cast %61 : vector<4x64xf32> to vector<4x64x1xf32>
    %63 = vector.broadcast %62 : vector<4x64x1xf32> to vector<4x64x36xf32>
    %64 = arith.subf %60, %63 : vector<4x64x36xf32>
    %65 = math.exp %64 : vector<4x64x36xf32>
    %cst_35 = arith.constant dense<0.000000e+00> : vector<4x64xf32>
    %66 = vector.multi_reduction <add>, %65, %cst_35 [2] : vector<4x64x36xf32> to vector<4x64xf32>
    %67 = vector.shape_cast %66 : vector<4x64xf32> to vector<4x64x1xf32>
    %68 = tpu.reciprocal %67 {approx = true} : vector<4x64x1xf32> -> vector<4x64x1xf32>
    %69 = vector.broadcast %68 : vector<4x64x1xf32> to vector<4x64x36xf32>
    %70 = arith.mulf %65, %69 : vector<4x64x36xf32>
    %cst_36 = arith.constant dense<0.000000e+00> : vector<64x36xf32>
    %71 = vector.multi_reduction <add>, %70, %cst_36 [0] : vector<4x64x36xf32> to vector<64x36xf32>
    %c0_37 = arith.constant 0 : index
    %c0_38 = arith.constant 0 : index
    %c3 = arith.constant 3 : index
    %c0_39 = arith.constant 0 : index
    %c0_40 = arith.constant 0 : index
    %72 = vector.load %arg3[%c0_37, %c0_38, %c3, %c0_39, %c0_40] : memref<1x2x4x36x4xf32, #tpu.memory_space<vmem>>, vector<1x1x1x36x4xf32>
    %73 = vector.shape_cast %72 : vector<1x1x1x36x4xf32> to vector<36x4xf32>
    %cst_41 = arith.constant dense<0.000000e+00> : vector<64x4xf32>
    %74 = tpu.matmul %71, %73, %cst_41 {dimension_numbers = #tpu.dot_dimension_numbers<[1], [0], [0], [1], [0, 0, 1, 1], [], []>} : vector<64x36xf32>, vector<36x4xf32>, vector<64x4xf32> -> vector<64x4xf32>
    %75 = arith.addf %58, %74 : vector<64x4xf32>
    %76 = tpu.transpose %75, [1, 0] : vector<64x4xf32> -> vector<4x64xf32>
    %c0_42 = arith.constant 0 : index
    %c1_43 = arith.constant 1 : index
    %c0_44 = arith.constant 0 : index
    %c0_45 = arith.constant 0 : index
    %77 = vector.load %arg1[%c0_42, %c1_43, %c0_44, %c0_45] : memref<1x2x256x4xf32, #tpu.memory_space<vmem>>, vector<1x1x256x4xf32>
    %78 = vector.shape_cast %77 : vector<1x1x256x4xf32> to vector<256x4xf32>
    %c0_46 = arith.constant 0 : index
    %c1_47 = arith.constant 1 : index
    %c0_48 = arith.constant 0 : index
    %c0_49 = arith.constant 0 : index
    %79 = vector.load %arg2[%c0_46, %c1_47, %c0_48, %c0_49] : memref<1x2x4x144xf32, #tpu.memory_space<vmem>>, vector<1x1x4x144xf32>
    %80 = vector.shape_cast %79 : vector<1x1x4x144xf32> to vector<4x144xf32>
    %cst_50 = arith.constant dense<0.000000e+00> : vector<256x144xf32>
    %81 = tpu.matmul %78, %80, %cst_50 {dimension_numbers = #tpu.dot_dimension_numbers<[1], [0], [0], [1], [0, 0, 1, 1], [], []>} : vector<256x4xf32>, vector<4x144xf32>, vector<256x144xf32> -> vector<256x144xf32>
    %cst_51 = arith.constant 0.353553385 : f32
    %82 = vector.broadcast %cst_51 : f32 to vector<256x144xf32>
    %83 = arith.mulf %81, %82 : vector<256x144xf32>
    %cst_52 = arith.constant 0.000000e+00 : f32
    %84 = vector.broadcast %cst_52 : f32 to vector<64x4xf32>
    %85 = vector.extract_strided_slice %83 {offsets = [0, 0], sizes = [256, 36], strides = [1, 1]} : vector<256x144xf32> to vector<256x36xf32>
    %86 = vector.shape_cast %85 : vector<256x36xf32> to vector<4x64x36xf32>
    %cst_53 = arith.constant dense<0xFF800000> : vector<4x64xf32>
    %87 = vector.multi_reduction <maximumf>, %86, %cst_53 [2] : vector<4x64x36xf32> to vector<4x64xf32>
    %88 = vector.shape_cast %87 : vector<4x64xf32> to vector<4x64x1xf32>
    %89 = vector.broadcast %88 : vector<4x64x1xf32> to vector<4x64x36xf32>
    %90 = arith.subf %86, %89 : vector<4x64x36xf32>
    %91 = math.exp %90 : vector<4x64x36xf32>
    %cst_54 = arith.constant dense<0.000000e+00> : vector<4x64xf32>
    %92 = vector.multi_reduction <add>, %91, %cst_54 [2] : vector<4x64x36xf32> to vector<4x64xf32>
    %93 = vector.shape_cast %92 : vector<4x64xf32> to vector<4x64x1xf32>
    %94 = tpu.reciprocal %93 {approx = true} : vector<4x64x1xf32> -> vector<4x64x1xf32>
    %95 = vector.broadcast %94 : vector<4x64x1xf32> to vector<4x64x36xf32>
    %96 = arith.mulf %91, %95 : vector<4x64x36xf32>
    %cst_55 = arith.constant dense<0.000000e+00> : vector<64x36xf32>
    %97 = vector.multi_reduction <add>, %96, %cst_55 [0] : vector<4x64x36xf32> to vector<64x36xf32>
    %c0_56 = arith.constant 0 : index
    %c1_57 = arith.constant 1 : index
    %c0_58 = arith.constant 0 : index
    %c0_59 = arith.constant 0 : index
    %c0_60 = arith.constant 0 : index
    %98 = vector.load %arg3[%c0_56, %c1_57, %c0_58, %c0_59, %c0_60] : memref<1x2x4x36x4xf32, #tpu.memory_space<vmem>>, vector<1x1x1x36x4xf32>
    %99 = vector.shape_cast %98 : vector<1x1x1x36x4xf32> to vector<36x4xf32>
    %cst_61 = arith.constant dense<0.000000e+00> : vector<64x4xf32>
    %100 = tpu.matmul %97, %99, %cst_61 {dimension_numbers = #tpu.dot_dimension_numbers<[1], [0], [0], [1], [0, 0, 1, 1], [], []>} : vector<64x36xf32>, vector<36x4xf32>, vector<64x4xf32> -> vector<64x4xf32>
    %101 = arith.addf %84, %100 : vector<64x4xf32>
    %102 = vector.extract_strided_slice %83 {offsets = [0, 36], sizes = [256, 36], strides = [1, 1]} : vector<256x144xf32> to vector<256x36xf32>
    %103 = vector.shape_cast %102 : vector<256x36xf32> to vector<4x64x36xf32>
    %cst_62 = arith.constant dense<0xFF800000> : vector<4x64xf32>
    %104 = vector.multi_reduction <maximumf>, %103, %cst_62 [2] : vector<4x64x36xf32> to vector<4x64xf32>
    %105 = vector.shape_cast %104 : vector<4x64xf32> to vector<4x64x1xf32>
    %106 = vector.broadcast %105 : vector<4x64x1xf32> to vector<4x64x36xf32>
    %107 = arith.subf %103, %106 : vector<4x64x36xf32>
    %108 = math.exp %107 : vector<4x64x36xf32>
    %cst_63 = arith.constant dense<0.000000e+00> : vector<4x64xf32>
    %109 = vector.multi_reduction <add>, %108, %cst_63 [2] : vector<4x64x36xf32> to vector<4x64xf32>
    %110 = vector.shape_cast %109 : vector<4x64xf32> to vector<4x64x1xf32>
    %111 = tpu.reciprocal %110 {approx = true} : vector<4x64x1xf32> -> vector<4x64x1xf32>
    %112 = vector.broadcast %111 : vector<4x64x1xf32> to vector<4x64x36xf32>
    %113 = arith.mulf %108, %112 : vector<4x64x36xf32>
    %cst_64 = arith.constant dense<0.000000e+00> : vector<64x36xf32>
    %114 = vector.multi_reduction <add>, %113, %cst_64 [0] : vector<4x64x36xf32> to vector<64x36xf32>
    %c0_65 = arith.constant 0 : index
    %c1_66 = arith.constant 1 : index
    %c1_67 = arith.constant 1 : index
    %c0_68 = arith.constant 0 : index
    %c0_69 = arith.constant 0 : index
    %115 = vector.load %arg3[%c0_65, %c1_66, %c1_67, %c0_68, %c0_69] : memref<1x2x4x36x4xf32, #tpu.memory_space<vmem>>, vector<1x1x1x36x4xf32>
    %116 = vector.shape_cast %115 : vector<1x1x1x36x4xf32> to vector<36x4xf32>
    %cst_70 = arith.constant dense<0.000000e+00> : vector<64x4xf32>
    %117 = tpu.matmul %114, %116, %cst_70 {dimension_numbers = #tpu.dot_dimension_numbers<[1], [0], [0], [1], [0, 0, 1, 1], [], []>} : vector<64x36xf32>, vector<36x4xf32>, vector<64x4xf32> -> vector<64x4xf32>
    %118 = arith.addf %101, %117 : vector<64x4xf32>
    %119 = vector.extract_strided_slice %83 {offsets = [0, 72], sizes = [256, 36], strides = [1, 1]} : vector<256x144xf32> to vector<256x36xf32>
    %120 = vector.shape_cast %119 : vector<256x36xf32> to vector<4x64x36xf32>
    %cst_71 = arith.constant dense<0xFF800000> : vector<4x64xf32>
    %121 = vector.multi_reduction <maximumf>, %120, %cst_71 [2] : vector<4x64x36xf32> to vector<4x64xf32>
    %122 = vector.shape_cast %121 : vector<4x64xf32> to vector<4x64x1xf32>
    %123 = vector.broadcast %122 : vector<4x64x1xf32> to vector<4x64x36xf32>
    %124 = arith.subf %120, %123 : vector<4x64x36xf32>
    %125 = math.exp %124 : vector<4x64x36xf32>
    %cst_72 = arith.constant dense<0.000000e+00> : vector<4x64xf32>
    %126 = vector.multi_reduction <add>, %125, %cst_72 [2] : vector<4x64x36xf32> to vector<4x64xf32>
    %127 = vector.shape_cast %126 : vector<4x64xf32> to vector<4x64x1xf32>
    %128 = tpu.reciprocal %127 {approx = true} : vector<4x64x1xf32> -> vector<4x64x1xf32>
    %129 = vector.broadcast %128 : vector<4x64x1xf32> to vector<4x64x36xf32>
    %130 = arith.mulf %125, %129 : vector<4x64x36xf32>
    %cst_73 = arith.constant dense<0.000000e+00> : vector<64x36xf32>
    %131 = vector.multi_reduction <add>, %130, %cst_73 [0] : vector<4x64x36xf32> to vector<64x36xf32>
    %c0_74 = arith.constant 0 : index
    %c1_75 = arith.constant 1 : index
    %c2_76 = arith.constant 2 : index
    %c0_77 = arith.constant 0 : index
    %c0_78 = arith.constant 0 : index
    %132 = vector.load %arg3[%c0_74, %c1_75, %c2_76, %c0_77, %c0_78] : memref<1x2x4x36x4xf32, #tpu.memory_space<vmem>>, vector<1x1x1x36x4xf32>
    %133 = vector.shape_cast %132 : vector<1x1x1x36x4xf32> to vector<36x4xf32>
    %cst_79 = arith.constant dense<0.000000e+00> : vector<64x4xf32>
    %134 = tpu.matmul %131, %133, %cst_79 {dimension_numbers = #tpu.dot_dimension_numbers<[1], [0], [0], [1], [0, 0, 1, 1], [], []>} : vector<64x36xf32>, vector<36x4xf32>, vector<64x4xf32> -> vector<64x4xf32>
    %135 = arith.addf %118, %134 : vector<64x4xf32>
    %136 = vector.extract_strided_slice %83 {offsets = [0, 108], sizes = [256, 36], strides = [1, 1]} : vector<256x144xf32> to vector<256x36xf32>
    %137 = vector.shape_cast %136 : vector<256x36xf32> to vector<4x64x36xf32>
    %cst_80 = arith.constant dense<0xFF800000> : vector<4x64xf32>
    %138 = vector.multi_reduction <maximumf>, %137, %cst_80 [2] : vector<4x64x36xf32> to vector<4x64xf32>
    %139 = vector.shape_cast %138 : vector<4x64xf32> to vector<4x64x1xf32>
    %140 = vector.broadcast %139 : vector<4x64x1xf32> to vector<4x64x36xf32>
    %141 = arith.subf %137, %140 : vector<4x64x36xf32>
    %142 = math.exp %141 : vector<4x64x36xf32>
    %cst_81 = arith.constant dense<0.000000e+00> : vector<4x64xf32>
    %143 = vector.multi_reduction <add>, %142, %cst_81 [2] : vector<4x64x36xf32> to vector<4x64xf32>
    %144 = vector.shape_cast %143 : vector<4x64xf32> to vector<4x64x1xf32>
    %145 = tpu.reciprocal %144 {approx = true} : vector<4x64x1xf32> -> vector<4x64x1xf32>
    %146 = vector.broadcast %145 : vector<4x64x1xf32> to vector<4x64x36xf32>
    %147 = arith.mulf %142, %146 : vector<4x64x36xf32>
    %cst_82 = arith.constant dense<0.000000e+00> : vector<64x36xf32>
    %148 = vector.multi_reduction <add>, %147, %cst_82 [0] : vector<4x64x36xf32> to vector<64x36xf32>
    %c0_83 = arith.constant 0 : index
    %c1_84 = arith.constant 1 : index
    %c3_85 = arith.constant 3 : index
    %c0_86 = arith.constant 0 : index
    %c0_87 = arith.constant 0 : index
    %149 = vector.load %arg3[%c0_83, %c1_84, %c3_85, %c0_86, %c0_87] : memref<1x2x4x36x4xf32, #tpu.memory_space<vmem>>, vector<1x1x1x36x4xf32>
    %150 = vector.shape_cast %149 : vector<1x1x1x36x4xf32> to vector<36x4xf32>
    %cst_88 = arith.constant dense<0.000000e+00> : vector<64x4xf32>
    %151 = tpu.matmul %148, %150, %cst_88 {dimension_numbers = #tpu.dot_dimension_numbers<[1], [0], [0], [1], [0, 0, 1, 1], [], []>} : vector<64x36xf32>, vector<36x4xf32>, vector<64x4xf32> -> vector<64x4xf32>
    %152 = arith.addf %135, %151 : vector<64x4xf32>
    %153 = tpu.transpose %152, [1, 0] : vector<64x4xf32> -> vector<4x64xf32>
    %154 = tpu.concatenate %76, %153 in 1 : vector<4x64xf32>, vector<4x64xf32> -> vector<4x128xf32>
    %c0_89 = arith.constant 0 : index
    %c0_90 = arith.constant 0 : index
    %c0_91 = arith.constant 0 : index
    %155 = vector.load %arg4[%c0_89, %c0_90, %c0_91] : memref<1x4x128xf32, #tpu.memory_space<vmem>>, vector<1x4x128xf32>
    %156 = vector.shape_cast %155 : vector<1x4x128xf32> to vector<4x128xf32>
    %157 = vector.shape_cast %154 : vector<4x128xf32> to vector<1x4x128xf32>
    tpu.vector_store %arg4[%c0_89, %c0_90, %c0_91], %157 {strides = array<i32>} : memref<1x4x128xf32, #tpu.memory_space<vmem>>, vector<1x4x128xf32>,
    return
  }
  func.func @transform_0(%arg0: i32) -> (i32, i32, i32, i32) {
    %c0_i32 = arith.constant 0 : i32
    %c0_i32_0 = arith.constant 0 : i32
    %c0_i32_1 = arith.constant 0 : i32
    %c0_i32_2 = arith.constant 0 : i32
    return %arg0, %c0_i32, %c0_i32_0, %c0_i32_1 : i32, i32, i32, i32
  }
  func.func @transform_1(%arg0: i32) -> (i32, i32, i32, i32) {
    %c0_i32 = arith.constant 0 : i32
    %c0_i32_0 = arith.constant 0 : i32
    %c0_i32_1 = arith.constant 0 : i32
    %c0_i32_2 = arith.constant 0 : i32
    return %arg0, %c0_i32, %c0_i32_0, %c0_i32_1 : i32, i32, i32, i32
  }
  func.func @transform_2(%arg0: i32) -> (i32, i32, i32, i32, i32) {
    %c0_i32 = arith.constant 0 : i32
    %c0_i32_0 = arith.constant 0 : i32
    %c0_i32_1 = arith.constant 0 : i32
    %c0_i32_2 = arith.constant 0 : i32
    %c0_i32_3 = arith.constant 0 : i32
    return %arg0, %c0_i32, %c0_i32_0, %c0_i32_1, %c0_i32_2 : i32, i32, i32, i32, i32
  }
  func.func @transform_3(%arg0: i32) -> (i32, i32, i32) {
    %c0_i32 = arith.constant 0 : i32
    %c0_i32_0 = arith.constant 0 : i32
    %c0_i32_1 = arith.constant 0 : i32
    return %arg0, %c0_i32, %c0_i32_0 : i32, i32, i32
  }
}

</mosaic_0001>

<llo_original>
// kernel: tpu_custom_call.1
$region0: #{tpu_custom_call.1}
  #allocation0 [shape = 'u32[]', space=smem, size = 0x4, offset = 0x4, fixed_abs, tag = 'smem constant byte address 0x4 - core index']
  #allocation1 [shape = 'u32[72,128]{1,0:T(1,128)}', space=vmem, size = 0x9000, scoped, tag = 'internal scratch']
  %s0 = inlined_call_operand.vmem [shape: f32[2,2,256,4], index: 0, kind: input, shape index: {}]
  %s1 = inlined_call_operand.vmem [shape: f32[2,2,4,144], index: 1, kind: input, shape index: {}]
  %s2 = inlined_call_operand.vmem [shape: f32[2,2,4,36,4], index: 2, kind: input, shape index: {}]
  %s3 = inlined_call_operand.hbm [shape: f32[2,4,128], index: 3, kind: output, shape index: {}]
  %s4 = sld [smem:[#allocation0]]
  $region45: #{tpu_custom_call.1} parent=0
    _
  %s6 = ssub.s32 1, %s4
  %s7 = scalar_select 0, %s6, %s4
  $region1: #{tpu_custom_call.1} parent=0
    #allocation2 [shape = 'u8[4096]{0}', space=vmem, size = 0x1000, scoped, tag = 'output window, operand 0']
    #allocation3 [shape = 's32[2]{0}', space=sflag, size = 0x8, scoped, tag = 'scoped memory for tpu_custom_call.1']
    %8 = vsyncpa [#allocation3], 0
    %s9 = scalar_lea.sflag [#allocation3], 1
    %10 = vsyncpa %s9, 0
    loop: start=0, step=1, limit=4
    $region2: #{tpu_custom_call.1} parent=1 // loop_pre_header
      _
    $region3: #{tpu_custom_call.1} parent=1 // loop_header
      %s12 = sphi 0, %s16
      %p13 = scmp.ge.s32.totalorder %s12, 4
      %s22 = sphi 0, %s24
      %s25 = sphi 0, %s22
      %s26 = sphi 0, %s25
      %s42 = sphi 0, %s26
      %s48 = sphi 0, %s50
      %s51 = sphi 0, %s48
      %s52 = sphi 0, %s51
      %s68 = sphi 0, %s52
      %s74 = sphi 0, %s76
      %s77 = sphi 0, %s74
      %s78 = sphi 0, %s77
      %s94 = sphi 0, %s78
      %s100 = sphi 0, %s102
      %s103 = sphi 0, %s100
      %s104 = sphi 0, %s103
      %s120 = sphi 0, %s104
    $region4: #{tpu_custom_call.1} parent=1 // loop_header_branch
      %15 = sbr.rel (%p13) target = $region8
    $region5: #{tpu_custom_call.1} parent=1 // loop_body
      %s17 = ssub.s32 %s12, 1
      %s18 = ssub.s32 %s12, 2
      %s19 = sadd.s32 %s12, 1
      %s20 = ssub.s32 %s12, %s19
      %p21 = scmp.eq.s32.totalorder %s20, 0
      %s23 = sadd.s32 %s22, 1
      %s24 = scalar_select %p21, %s22, %s23
      %p27 = pneg %p21
      %p28 = scmp.eq.s32.totalorder %s12, 1
      %p29 = por %p27, %p28
      %p30 = scmp.ne.s32.totalorder %s22, %s25
      %p31 = scmp.eq.s32.totalorder %s12, 0
      %p32 = por %p30, %p31
      %p33 = scmp.ne.s32.totalorder %s22, %s25
      %p34 = scmp.eq.s32.totalorder %s17, 1
      %p35 = por %p33, %p34
      %p36 = scmp.ne.s32.totalorder %s25, %s26
      %p37 = scmp.eq.s32.totalorder %s17, 0
      %p38 = por %p36, %p37
      %p39 = scmp.ne.s32.totalorder %s25, %s26
      %p40 = scmp.eq.s32.totalorder %s18, 1
      %p41 = por %p39, %p40
      %p43 = scmp.ne.s32.totalorder %s26, %s42
      %p44 = scmp.eq.s32.totalorder %s18, 0
      %p45 = por %p43, %p44
      %s46 = ssub.s32 %s12, %s19
      %p47 = scmp.eq.s32.totalorder %s46, 0
      %s49 = sadd.s32 %s48, 1
      %s50 = scalar_select %p47, %s48, %s49
      %p53 = pneg %p47
      %p54 = scmp.eq.s32.totalorder %s12, 1
      %p55 = por %p53, %p54
      %p56 = scmp.ne.s32.totalorder %s48, %s51
      %p57 = scmp.eq.s32.totalorder %s12, 0
      %p58 = por %p56, %p57
      %p59 = scmp.ne.s32.totalorder %s48, %s51
      %p60 = scmp.eq.s32.totalorder %s17, 1
      %p61 = por %p59, %p60
      %p62 = scmp.ne.s32.totalorder %s51, %s52
      %p63 = scmp.eq.s32.totalorder %s17, 0
      %p64 = por %p62, %p63
      %p65 = scmp.ne.s32.totalorder %s51, %s52
      %p66 = scmp.eq.s32.totalorder %s18, 1
      %p67 = por %p65, %p66
      %p69 = scmp.ne.s32.totalorder %s52, %s68
      %p70 = scmp.eq.s32.totalorder %s18, 0
      %p71 = por %p69, %p70
      %s72 = ssub.s32 %s12, %s19
      %p73 = scmp.eq.s32.totalorder %s72, 0
      %s75 = sadd.s32 %s74, 1
      %s76 = scalar_select %p73, %s74, %s75
      %p79 = pneg %p73
      %p80 = scmp.eq.s32.totalorder %s12, 1
      %p81 = por %p79, %p80
      %p82 = scmp.ne.s32.totalorder %s74, %s77
      %p83 = scmp.eq.s32.totalorder %s12, 0
      %p84 = por %p82, %p83
      %p85 = scmp.ne.s32.totalorder %s74, %s77
      %p86 = scmp.eq.s32.totalorder %s17, 1
      %p87 = por %p85, %p86
      %p88 = scmp.ne.s32.totalorder %s77, %s78
      %p89 = scmp.eq.s32.totalorder %s17, 0
      %p90 = por %p88, %p89
      %p91 = scmp.ne.s32.totalorder %s77, %s78
      %p92 = scmp.eq.s32.totalorder %s18, 1
      %p93 = por %p91, %p92
      %p95 = scmp.ne.s32.totalorder %s78, %s94
      %p96 = scmp.eq.s32.totalorder %s18, 0
      %p97 = por %p95, %p96
      %s98 = ssub.s32 %s12, %s19
      %p99 = scmp.eq.s32.totalorder %s98, 0
      %s101 = sadd.s32 %s100, 1
      %s102 = scalar_select %p99, %s100, %s101
      %p105 = pneg %p99
      %p106 = scmp.eq.s32.totalorder %s12, 1
      %p107 = por %p105, %p106
      %p108 = scmp.ne.s32.totalorder %s100, %s103
      %p109 = scmp.eq.s32.totalorder %s12, 0
      %p110 = por %p108, %p109
      %p111 = scmp.ne.s32.totalorder %s100, %s103
      %p112 = scmp.eq.s32.totalorder %s17, 1
      %p113 = por %p111, %p112
      %p114 = scmp.ne.s32.totalorder %s103, %s104
      %p115 = scmp.eq.s32.totalorder %s17, 0
      %p116 = por %p114, %p115
      %p117 = scmp.ne.s32.totalorder %s103, %s104
      %p118 = scmp.eq.s32.totalorder %s18, 1
      %p119 = por %p117, %p118
      %p121 = scmp.ne.s32.totalorder %s104, %s120
      %p122 = scmp.eq.s32.totalorder %s18, 0
      %p123 = por %p121, %p122
      %p124 = scmp.le.s32.totalorder 1, %s12
      %p125 = scmp.lt.s32.totalorder %s12, 3
      %p126 = pnand %p124, %p125
      %p127 = pneg %p126
      // Predicated region
      $region9: #{tpu_custom_call.1} parent=5 // pred_check
        _
      $region10: #{tpu_custom_call.1} parent=5 // pred_check_branch
        %129 = sbr.rel (%p126) target = $region12
      $region11: #{tpu_custom_call.1} parent=5 // pred_region
        %s130 = ssub.s32 %s12, 1
      $region12: #{tpu_custom_call.1} parent=5 // pred_fallthru
        _
      %p131 = scmp.lt.s32.totalorder %s12, 2
      // Predicated region
      $region13: #{tpu_custom_call.1} parent=5 // pred_check
        %p132 = pneg %p131
      $region14: #{tpu_custom_call.1} parent=5 // pred_check_branch
        %134 = sbr.rel (%p132) target = $region16
      $region15: #{tpu_custom_call.1} parent=5 // pred_region
        // Predicated region
        $region17: #{tpu_custom_call.1} parent=15 // pred_check
          %p135 = pneg %p32
        $region18: #{tpu_custom_call.1} parent=15 // pred_check_branch
          %137 = sbr.rel (%p135) target = $region20
        $region19: #{tpu_custom_call.1} parent=15 // pred_region
          %p138 = scmp.lt.s32.totalorder %s12, 1
          %s139 = scalar_select %p138, %s12, 1
          %s140 = smul.addr %s139, 64
          %s141 = smul.addr %s140, 8
          %s142 = scalar_lea.vmem %s0, %s141
        $region20: #{tpu_custom_call.1} parent=15 // pred_fallthru
          _
        // Predicated region
        $region21: #{tpu_custom_call.1} parent=15 // pred_check
          %p143 = pneg %p58
        $region22: #{tpu_custom_call.1} parent=15 // pred_check_branch
          %145 = sbr.rel (%p143) target = $region24
        $region23: #{tpu_custom_call.1} parent=15 // pred_region
          %p146 = scmp.lt.s32.totalorder %s12, 1
          %s147 = scalar_select %p146, %s12, 1
          %s148 = smul.addr %s147, 4
          %s149 = smul.addr %s148, 4
          %s150 = scalar_lea.vmem %s1, %s149
        $region24: #{tpu_custom_call.1} parent=15 // pred_fallthru
          _
        // Predicated region
        $region25: #{tpu_custom_call.1} parent=15 // pred_check
          %p151 = pneg %p84
        $region26: #{tpu_custom_call.1} parent=15 // pred_check_branch
          %153 = sbr.rel (%p151) target = $region28
        $region27: #{tpu_custom_call.1} parent=15 // pred_region
          %p154 = scmp.lt.s32.totalorder %s12, 1
          %s155 = scalar_select %p154, %s12, 1
          %s156 = smul.addr %s155, 40
          %s157 = smul.addr %s156, 8
          %s158 = scalar_lea.vmem %s2, %s157
        $region28: #{tpu_custom_call.1} parent=15 // pred_fallthru
          _
      $region16: #{tpu_custom_call.1} parent=5 // pred_fallthru
        _
      %p159 = scmp.le.s32.totalorder 1, %s12
      %p160 = scmp.lt.s32.totalorder %s12, 3
      %p161 = pnand %p159, %p160
      %p162 = pneg %p161
      // Predicated region
      $region29: #{tpu_custom_call.1} parent=5 // pred_check
        _
      $region30: #{tpu_custom_call.1} parent=5 // pred_check_branch
        %164 = sbr.rel (%p161) target = $region32
      $region31: #{tpu_custom_call.1} parent=5 // pred_region
        %s165 = ssub.s32 %s12, 1
        %p166 = scmp.lt.s32.totalorder %s17, 1
        %s167 = scalar_select %p166, %s17, 1
        %s168 = smul.addr %s167, 64
        %s169 = smul.addr %s168, 8
        %s170 = scalar_lea.vmem %s0, %s169
        %p171 = pneg %p38
        %p172 = pneg %p35
        %p173 = scmp.lt.s32.totalorder %s17, 1
        %s174 = scalar_select %p173, %s17, 1
        %s175 = smul.addr %s174, 4
        %s176 = smul.addr %s175, 4
        %s177 = scalar_lea.vmem %s1, %s176
        %p178 = pneg %p64
        %p179 = pneg %p61
        %p180 = scmp.lt.s32.totalorder %s17, 1
        %s181 = scalar_select %p180, %s17, 1
        %s182 = smul.addr %s181, 40
        %s183 = smul.addr %s182, 8
        %s184 = scalar_lea.vmem %s2, %s183
        %p185 = pneg %p90
        %p186 = pneg %p87
        %p187 = pneg %p116
        %p188 = pneg %p113
        %s189 = sand.u32 %s103, 1
        %s190 = scalar_lea.sflag [#allocation3], %s189
        %s191 = sand.u32 %s103, 1
        %s192 = smul.addr %s191, 4
        %s193 = scalar_lea.vmem [#allocation2], %s192
        %p194 = scmp.lt.s32.totalorder %s17, 1
        %s195 = scalar_select %p194, %s17, 1
        %s196 = smul.addr %s195, 64
        %s197 = smul.addr %s196, 8
        %s198 = scalar_lea.vmem %s0, %s197
        %p199 = scmp.lt.s32.totalorder %s17, 1
        %s200 = scalar_select %p199, %s17, 1
        %s201 = smul.addr %s200, 4
        %s202 = smul.addr %s201, 4
        %s203 = scalar_lea.vmem %s1, %s202
        %p204 = scmp.lt.s32.totalorder %s17, 1
        %s205 = scalar_select %p204, %s17, 1
        %s206 = smul.addr %s205, 40
        %s207 = smul.addr %s206, 8
        %s208 = scalar_lea.vmem %s2, %s207
        %v209 = vld [vmem:[%s198] sm:$0xff]
        %v210 = vld [vmem:[%s198 + $0x8] sm:$0xff]
        %v211 = vld [vmem:[%s198 + $0x10] sm:$0xff]
        %v212 = vld [vmem:[%s198 + $0x18] sm:$0xff]
        %v213 = vld [vmem:[%s198 + $0x20] sm:$0xff]
        %v214 = vld [vmem:[%s198 + $0x28] sm:$0xff]
        %v215 = vld [vmem:[%s198 + $0x30] sm:$0xff]
        %v216 = vld [vmem:[%s198 + $0x38] sm:$0xff]
        %v217 = vld [vmem:[%s198 + $0x40] sm:$0xff]
        %v218 = vld [vmem:[%s198 + $0x48] sm:$0xff]
        %v219 = vld [vmem:[%s198 + $0x50] sm:$0xff]
        %v220 = vld [vmem:[%s198 + $0x58] sm:$0xff]
        %v221 = vld [vmem:[%s198 + $0x60] sm:$0xff]
        %v222 = vld [vmem:[%s198 + $0x68] sm:$0xff]
        %v223 = vld [vmem:[%s198 + $0x70] sm:$0xff]
        %v224 = vld [vmem:[%s198 + $0x78] sm:$0xff]
        %v225 = vld [vmem:[%s198 + $0x80] sm:$0xff]
        %v226 = vld [vmem:[%s198 + $0x88] sm:$0xff]
        %v227 = vld [vmem:[%s198 + $0x90] sm:$0xff]
        %v228 = vld [vmem:[%s198 + $0x98] sm:$0xff]
        %v229 = vld [vmem:[%s198 + $0xa0] sm:$0xff]
        %v230 = vld [vmem:[%s198 + $0xa8] sm:$0xff]
        %v231 = vld [vmem:[%s198 + $0xb0] sm:$0xff]
        %v232 = vld [vmem:[%s198 + $0xb8] sm:$0xff]
        %v233 = vld [vmem:[%s198 + $0xc0] sm:$0xff]
        %v234 = vld [vmem:[%s198 + $0xc8] sm:$0xff]
        %v235 = vld [vmem:[%s198 + $0xd0] sm:$0xff]
        %v236 = vld [vmem:[%s198 + $0xd8] sm:$0xff]
        %v237 = vld [vmem:[%s198 + $0xe0] sm:$0xff]
        %v238 = vld [vmem:[%s198 + $0xe8] sm:$0xff]
        %v239 = vld [vmem:[%s198 + $0xf0] sm:$0xff]
        %v240 = vld [vmem:[%s198 + $0xf8] sm:$0xff]
        %v241 = vld [vmem:[%s203] sm:$0xff]
        %243 = vst [vmem:[#allocation1] ss:$2 sm:$0xff] %v241
        %v244 = vld.sshfl [vmem:[#allocation1] sm:$0xff pattern:$0x75316420]
        %v245 = vld.sshfl [vmem:[#allocation1 + $0x8] sm:$0xff pattern:$0x75316420]
        %vm246 = vcmask 31744
        %v248 = vsel %vm246, %v209, 0
        %v251 = vsel %vm246, %v210, 0
        %v254 = vsel %vm246, %v211, 0
        %v257 = vsel %vm246, %v212, 0
        %v260 = vsel %vm246, %v213, 0
        %v263 = vsel %vm246, %v214, 0
        %v266 = vsel %vm246, %v215, 0
        %v269 = vsel %vm246, %v216, 0
        %v272 = vsel %vm246, %v217, 0
        %v275 = vsel %vm246, %v218, 0
        %v278 = vsel %vm246, %v219, 0
        %v281 = vsel %vm246, %v220, 0
        %v284 = vsel %vm246, %v221, 0
        %v287 = vsel %vm246, %v222, 0
        %v290 = vsel %vm246, %v223, 0
        %v293 = vsel %vm246, %v224, 0
        %v296 = vsel %vm246, %v225, 0
        %v299 = vsel %vm246, %v226, 0
        %v302 = vsel %vm246, %v227, 0
        %v305 = vsel %vm246, %v228, 0
        %v308 = vsel %vm246, %v229, 0
        %v311 = vsel %vm246, %v230, 0
        %v314 = vsel %vm246, %v231, 0
        %v317 = vsel %vm246, %v232, 0
        %v320 = vsel %vm246, %v233, 0
        %v323 = vsel %vm246, %v234, 0
        %v326 = vsel %vm246, %v235, 0
        %v329 = vsel %vm246, %v236, 0
        %v332 = vsel %vm246, %v237, 0
        %v335 = vsel %vm246, %v238, 0
        %v338 = vsel %vm246, %v239, 0
        %v341 = vsel %vm246, %v240, 0
        %vm343 = vcmask 1043456
        %v344 = vsel %vm343, %v244, 0
        %v346 = vsel %vm343, %v245, 0
        %348 = vmatpush.msra.mxu0 0.0
        %349 = vmatpush.msra.mxu0 0.0
        %350 = vmatpush.msra.mxu0 0.0
        %351 = vmatpush.msra.mxu0 0.0
        %352 = vmatpush.msra.mxu0 0.0
        %353 = vmatpush.msra.mxu0 0.0
        %354 = vmatpush.msra.mxu0 0.0
        %355 = vmatpush.msra.mxu0 0.0
        %356 = vmatpush.msra.mxu0 0.0
        %357 = vmatpush.msra.mxu0 0.0
        %358 = vmatpush.msra.mxu0 0.0
        %359 = vmatpush.msra.mxu0 0.0
        %360 = vmatpush.msra.mxu0 0.0
        %361 = vmatpush.msra.mxu0 0.0
        %362 = vmatpush.msra.mxu0 0.0
        %363 = vmatpush.msra.mxu0 %v344
        %364 = vmatmul.f32.gmra.mxu0 %v248
        %v365 = vpop.f32.mrf.mxu0
        %v366 = vadd.f32 0.0, %v365
        %367 = vmatmul.f32.gmra.mxu0 %v251
        %v368 = vpop.f32.mrf.mxu0
        %v369 = vadd.f32 0.0, %v368
        %370 = vmatmul.f32.gmra.mxu0 %v254
        %v371 = vpop.f32.mrf.mxu0
        %v372 = vadd.f32 0.0, %v371
        %373 = vmatmul.f32.gmra.mxu0 %v257
        %v374 = vpop.f32.mrf.mxu0
        %v375 = vadd.f32 0.0, %v374
        %376 = vmatmul.f32.gmra.mxu0 %v260
        %v377 = vpop.f32.mrf.mxu0
        %v378 = vadd.f32 0.0, %v377
        %379 = vmatmul.f32.gmra.mxu0 %v263
        %v380 = vpop.f32.mrf.mxu0
        %v381 = vadd.f32 0.0, %v380
        %382 = vmatmul.f32.gmra.mxu0 %v266
        %v383 = vpop.f32.mrf.mxu0
        %v384 = vadd.f32 0.0, %v383
        %385 = vmatmul.f32.gmra.mxu0 %v269
        %v386 = vpop.f32.mrf.mxu0
        %v387 = vadd.f32 0.0, %v386
        %388 = vmatmul.f32.gmra.mxu0 %v272
        %v389 = vpop.f32.mrf.mxu0
        %v390 = vadd.f32 0.0, %v389
        %391 = vmatmul.f32.gmra.mxu0 %v275
        %v392 = vpop.f32.mrf.mxu0
        %v393 = vadd.f32 0.0, %v392
        %394 = vmatmul.f32.gmra.mxu0 %v278
        %v395 = vpop.f32.mrf.mxu0
        %v396 = vadd.f32 0.0, %v395
        %397 = vmatmul.f32.gmra.mxu0 %v281
        %v398 = vpop.f32.mrf.mxu0
        %v399 = vadd.f32 0.0, %v398
        %400 = vmatmul.f32.gmra.mxu0 %v284
        %v401 = vpop.f32.mrf.mxu0
        %v402 = vadd.f32 0.0, %v401
        %403 = vmatmul.f32.gmra.mxu0 %v287
        %v404 = vpop.f32.mrf.mxu0
        %v405 = vadd.f32 0.0, %v404
        %406 = vmatmul.f32.gmra.mxu0 %v290
        %v407 = vpop.f32.mrf.mxu0
        %v408 = vadd.f32 0.0, %v407
        %409 = vmatmul.f32.gmra.mxu0 %v293
        %v410 = vpop.f32.mrf.mxu0
        %v411 = vadd.f32 0.0, %v410
        %412 = vmatmul.f32.gmra.mxu0 %v296
        %v413 = vpop.f32.mrf.mxu0
        %v414 = vadd.f32 0.0, %v413
        %415 = vmatmul.f32.gmra.mxu0 %v299
        %v416 = vpop.f32.mrf.mxu0
        %v417 = vadd.f32 0.0, %v416
        %418 = vmatmul.f32.gmra.mxu0 %v302
        %v419 = vpop.f32.mrf.mxu0
        %v420 = vadd.f32 0.0, %v419
        %421 = vmatmul.f32.gmra.mxu0 %v305
        %v422 = vpop.f32.mrf.mxu0
        %v423 = vadd.f32 0.0, %v422
        %424 = vmatmul.f32.gmra.mxu0 %v308
        %v425 = vpop.f32.mrf.mxu0
        %v426 = vadd.f32 0.0, %v425
        %427 = vmatmul.f32.gmra.mxu0 %v311
        %v428 = vpop.f32.mrf.mxu0
        %v429 = vadd.f32 0.0, %v428
        %430 = vmatmul.f32.gmra.mxu0 %v314
        %v431 = vpop.f32.mrf.mxu0
        %v432 = vadd.f32 0.0, %v431
        %433 = vmatmul.f32.gmra.mxu0 %v317
        %v434 = vpop.f32.mrf.mxu0
        %v435 = vadd.f32 0.0, %v434
        %436 = vmatmul.f32.gmra.mxu0 %v320
        %v437 = vpop.f32.mrf.mxu0
        %v438 = vadd.f32 0.0, %v437
        %439 = vmatmul.f32.gmra.mxu0 %v323
        %v440 = vpop.f32.mrf.mxu0
        %v441 = vadd.f32 0.0, %v440
        %442 = vmatmul.f32.gmra.mxu0 %v326
        %v443 = vpop.f32.mrf.mxu0
        %v444 = vadd.f32 0.0, %v443
        %445 = vmatmul.f32.gmra.mxu0 %v329
        %v446 = vpop.f32.mrf.mxu0
        %v447 = vadd.f32 0.0, %v446
        %448 = vmatmul.f32.gmra.mxu0 %v332
        %v449 = vpop.f32.mrf.mxu0
        %v450 = vadd.f32 0.0, %v449
        %451 = vmatmul.f32.gmra.mxu0 %v335
        %v452 = vpop.f32.mrf.mxu0
        %v453 = vadd.f32 0.0, %v452
        %454 = vmatmul.f32.gmra.mxu0 %v338
        %v455 = vpop.f32.mrf.mxu0
        %v456 = vadd.f32 0.0, %v455
        %457 = vmatmul.f32.gmra.mxu0 %v341
        %v458 = vpop.f32.mrf.mxu0
        %v459 = vadd.f32 0.0, %v458
        %460 = vdwg.mxu0
        %461 = vmatpush.msra.mxu0 0.0
        %462 = vmatpush.msra.mxu0 0.0
        %463 = vmatpush.msra.mxu0 0.0
        %464 = vmatpush.msra.mxu0 0.0
        %465 = vmatpush.msra.mxu0 0.0
        %466 = vmatpush.msra.mxu0 0.0
        %467 = vmatpush.msra.mxu0 0.0
        %468 = vmatpush.msra.mxu0 0.0
        %469 = vmatpush.msra.mxu0 0.0
        %470 = vmatpush.msra.mxu0 0.0
        %471 = vmatpush.msra.mxu0 0.0
        %472 = vmatpush.msra.mxu0 0.0
        %473 = vmatpush.msra.mxu0 0.0
        %474 = vmatpush.msra.mxu0 0.0
        %475 = vmatpush.msra.mxu0 0.0
        %476 = vmatpush.msra.mxu0 %v346
        %477 = vmatmul.f32.gmra.mxu0 %v248
        %v478 = vpop.f32.mrf.mxu0
        %v479 = vadd.f32 0.0, %v478
        %480 = vmatmul.f32.gmra.mxu0 %v251
        %v481 = vpop.f32.mrf.mxu0
        %v482 = vadd.f32 0.0, %v481
        %483 = vmatmul.f32.gmra.mxu0 %v254
        %v484 = vpop.f32.mrf.mxu0
        %v485 = vadd.f32 0.0, %v484
        %486 = vmatmul.f32.gmra.mxu0 %v257
        %v487 = vpop.f32.mrf.mxu0
        %v488 = vadd.f32 0.0, %v487
        %489 = vmatmul.f32.gmra.mxu0 %v260
        %v490 = vpop.f32.mrf.mxu0
        %v491 = vadd.f32 0.0, %v490
        %492 = vmatmul.f32.gmra.mxu0 %v263
        %v493 = vpop.f32.mrf.mxu0
        %v494 = vadd.f32 0.0, %v493
        %495 = vmatmul.f32.gmra.mxu0 %v266
        %v496 = vpop.f32.mrf.mxu0
        %v497 = vadd.f32 0.0, %v496
        %498 = vmatmul.f32.gmra.mxu0 %v269
        %v499 = vpop.f32.mrf.mxu0
        %v500 = vadd.f32 0.0, %v499
        %501 = vmatmul.f32.gmra.mxu0 %v272
        %v502 = vpop.f32.mrf.mxu0
        %v503 = vadd.f32 0.0, %v502
        %504 = vmatmul.f32.gmra.mxu0 %v275
        %v505 = vpop.f32.mrf.mxu0
        %v506 = vadd.f32 0.0, %v505
        %507 = vmatmul.f32.gmra.mxu0 %v278
        %v508 = vpop.f32.mrf.mxu0
        %v509 = vadd.f32 0.0, %v508
        %510 = vmatmul.f32.gmra.mxu0 %v281
        %v511 = vpop.f32.mrf.mxu0
        %v512 = vadd.f32 0.0, %v511
        %513 = vmatmul.f32.gmra.mxu0 %v284
        %v514 = vpop.f32.mrf.mxu0
        %v515 = vadd.f32 0.0, %v514
        %516 = vmatmul.f32.gmra.mxu0 %v287
        %v517 = vpop.f32.mrf.mxu0
        %v518 = vadd.f32 0.0, %v517
        %519 = vmatmul.f32.gmra.mxu0 %v290
        %v520 = vpop.f32.mrf.mxu0
        %v521 = vadd.f32 0.0, %v520
        %522 = vmatmul.f32.gmra.mxu0 %v293
        %v523 = vpop.f32.mrf.mxu0
        %v524 = vadd.f32 0.0, %v523
        %525 = vmatmul.f32.gmra.mxu0 %v296
        %v526 = vpop.f32.mrf.mxu0
        %v527 = vadd.f32 0.0, %v526
        %528 = vmatmul.f32.gmra.mxu0 %v299
        %v529 = vpop.f32.mrf.mxu0
        %v530 = vadd.f32 0.0, %v529
        %531 = vmatmul.f32.gmra.mxu0 %v302
        %v532 = vpop.f32.mrf.mxu0
        %v533 = vadd.f32 0.0, %v532
        %534 = vmatmul.f32.gmra.mxu0 %v305
        %v535 = vpop.f32.mrf.mxu0
        %v536 = vadd.f32 0.0, %v535
        %537 = vmatmul.f32.gmra.mxu0 %v308
        %v538 = vpop.f32.mrf.mxu0
        %v539 = vadd.f32 0.0, %v538
        %540 = vmatmul.f32.gmra.mxu0 %v311
        %v541 = vpop.f32.mrf.mxu0
        %v542 = vadd.f32 0.0, %v541
        %543 = vmatmul.f32.gmra.mxu0 %v314
        %v544 = vpop.f32.mrf.mxu0
        %v545 = vadd.f32 0.0, %v544
        %546 = vmatmul.f32.gmra.mxu0 %v317
        %v547 = vpop.f32.mrf.mxu0
        %v548 = vadd.f32 0.0, %v547
        %549 = vmatmul.f32.gmra.mxu0 %v320
        %v550 = vpop.f32.mrf.mxu0
        %v551 = vadd.f32 0.0, %v550
        %552 = vmatmul.f32.gmra.mxu0 %v323
        %v553 = vpop.f32.mrf.mxu0
        %v554 = vadd.f32 0.0, %v553
        %555 = vmatmul.f32.gmra.mxu0 %v326
        %v556 = vpop.f32.mrf.mxu0
        %v557 = vadd.f32 0.0, %v556
        %558 = vmatmul.f32.gmra.mxu0 %v329
        %v559 = vpop.f32.mrf.mxu0
        %v560 = vadd.f32 0.0, %v559
        %561 = vmatmul.f32.gmra.mxu0 %v332
        %v562 = vpop.f32.mrf.mxu0
        %v563 = vadd.f32 0.0, %v562
        %564 = vmatmul.f32.gmra.mxu0 %v335
        %v565 = vpop.f32.mrf.mxu0
        %v566 = vadd.f32 0.0, %v565
        %567 = vmatmul.f32.gmra.mxu0 %v338
        %v568 = vpop.f32.mrf.mxu0
        %v569 = vadd.f32 0.0, %v568
        %570 = vmatmul.f32.gmra.mxu0 %v341
        %v571 = vpop.f32.mrf.mxu0
        %v572 = vadd.f32 0.0, %v571
        %573 = vdwg.mxu0
        %v574 = vmul.f32 %v366, 0.35355338
        %v575 = vmul.f32 %v479, 0.35355338
        %v576 = vmul.f32 %v369, 0.35355338
        %v577 = vmul.f32 %v482, 0.35355338
        %v578 = vmul.f32 %v372, 0.35355338
        %v579 = vmul.f32 %v485, 0.35355338
        %v580 = vmul.f32 %v375, 0.35355338
        %v581 = vmul.f32 %v488, 0.35355338
        %v582 = vmul.f32 %v378, 0.35355338
        %v583 = vmul.f32 %v491, 0.35355338
        %v584 = vmul.f32 %v381, 0.35355338
        %v585 = vmul.f32 %v494, 0.35355338
        %v586 = vmul.f32 %v384, 0.35355338
        %v587 = vmul.f32 %v497, 0.35355338
        %v588 = vmul.f32 %v387, 0.35355338
        %v589 = vmul.f32 %v500, 0.35355338
        %v590 = vmul.f32 %v390, 0.35355338
        %v591 = vmul.f32 %v503, 0.35355338
        %v592 = vmul.f32 %v393, 0.35355338
        %v593 = vmul.f32 %v506, 0.35355338
        %v594 = vmul.f32 %v396, 0.35355338
        %v595 = vmul.f32 %v509, 0.35355338
        %v596 = vmul.f32 %v399, 0.35355338
        %v597 = vmul.f32 %v512, 0.35355338
        %v598 = vmul.f32 %v402, 0.35355338
        %v599 = vmul.f32 %v515, 0.35355338
        %v600 = vmul.f32 %v405, 0.35355338
        %v601 = vmul.f32 %v518, 0.35355338
        %v602 = vmul.f32 %v408, 0.35355338
        %v603 = vmul.f32 %v521, 0.35355338
        %v604 = vmul.f32 %v411, 0.35355338
        %v605 = vmul.f32 %v524, 0.35355338
        %v606 = vmul.f32 %v414, 0.35355338
        %v607 = vmul.f32 %v527, 0.35355338
        %v608 = vmul.f32 %v417, 0.35355338
        %v609 = vmul.f32 %v530, 0.35355338
        %v610 = vmul.f32 %v420, 0.35355338
        %v611 = vmul.f32 %v533, 0.35355338
        %v612 = vmul.f32 %v423, 0.35355338
        %v613 = vmul.f32 %v536, 0.35355338
        %v614 = vmul.f32 %v426, 0.35355338
        %v615 = vmul.f32 %v539, 0.35355338
        %v616 = vmul.f32 %v429, 0.35355338
        %v617 = vmul.f32 %v542, 0.35355338
        %v618 = vmul.f32 %v432, 0.35355338
        %v619 = vmul.f32 %v545, 0.35355338
        %v620 = vmul.f32 %v435, 0.35355338
        %v621 = vmul.f32 %v548, 0.35355338
        %v622 = vmul.f32 %v438, 0.35355338
        %v623 = vmul.f32 %v551, 0.35355338
        %v624 = vmul.f32 %v441, 0.35355338
        %v625 = vmul.f32 %v554, 0.35355338
        %v626 = vmul.f32 %v444, 0.35355338
        %v627 = vmul.f32 %v557, 0.35355338
        %v628 = vmul.f32 %v447, 0.35355338
        %v629 = vmul.f32 %v560, 0.35355338
        %v630 = vmul.f32 %v450, 0.35355338
        %v631 = vmul.f32 %v563, 0.35355338
        %v632 = vmul.f32 %v453, 0.35355338
        %v633 = vmul.f32 %v566, 0.35355338
        %v634 = vmul.f32 %v456, 0.35355338
        %v635 = vmul.f32 %v569, 0.35355338
        %v636 = vmul.f32 %v459, 0.35355338
        %v637 = vmul.f32 %v572, 0.35355338
        %vm638 = vcmask 293888
        %v639 = vsel %vm638, %v574, -inf
        %640 = vmax.xlane.f32.xlu0 %v639
        %v641 = vpop.xlane.xlu0 %640
        %v642 = vsel %vm638, %v576, -inf
        %643 = vmax.xlane.f32.xlu0 %v642
        %v644 = vpop.xlane.xlu0 %643
        %v645 = vsel %vm638, %v578, -inf
        %646 = vmax.xlane.f32.xlu0 %v645
        %v647 = vpop.xlane.xlu0 %646
        %v648 = vsel %vm638, %v580, -inf
        %649 = vmax.xlane.f32.xlu0 %v648
        %v650 = vpop.xlane.xlu0 %649
        %v651 = vsel %vm638, %v582, -inf
        %652 = vmax.xlane.f32.xlu0 %v651
        %v653 = vpop.xlane.xlu0 %652
        %v654 = vsel %vm638, %v584, -inf
        %655 = vmax.xlane.f32.xlu0 %v654
        %v656 = vpop.xlane.xlu0 %655
        %v657 = vsel %vm638, %v586, -inf
        %658 = vmax.xlane.f32.xlu0 %v657
        %v659 = vpop.xlane.xlu0 %658
        %v660 = vsel %vm638, %v588, -inf
        %661 = vmax.xlane.f32.xlu0 %v660
        %v662 = vpop.xlane.xlu0 %661
        %v663 = vsel %vm638, %v590, -inf
        %664 = vmax.xlane.f32.xlu0 %v663
        %v665 = vpop.xlane.xlu0 %664
        %v666 = vsel %vm638, %v592, -inf
        %667 = vmax.xlane.f32.xlu0 %v666
        %v668 = vpop.xlane.xlu0 %667
        %v669 = vsel %vm638, %v594, -inf
        %670 = vmax.xlane.f32.xlu0 %v669
        %v671 = vpop.xlane.xlu0 %670
        %v672 = vsel %vm638, %v596, -inf
        %673 = vmax.xlane.f32.xlu0 %v672
        %v674 = vpop.xlane.xlu0 %673
        %v675 = vsel %vm638, %v598, -inf
        %676 = vmax.xlane.f32.xlu0 %v675
        %v677 = vpop.xlane.xlu0 %676
        %v678 = vsel %vm638, %v600, -inf
        %679 = vmax.xlane.f32.xlu0 %v678
        %v680 = vpop.xlane.xlu0 %679
        %v681 = vsel %vm638, %v602, -inf
        %682 = vmax.xlane.f32.xlu0 %v681
        %v683 = vpop.xlane.xlu0 %682
        %v684 = vsel %vm638, %v604, -inf
        %685 = vmax.xlane.f32.xlu0 %v684
        %v686 = vpop.xlane.xlu0 %685
        %v687 = vsel %vm638, %v606, -inf
        %688 = vmax.xlane.f32.xlu0 %v687
        %v689 = vpop.xlane.xlu0 %688
        %v690 = vsel %vm638, %v608, -inf
        %691 = vmax.xlane.f32.xlu0 %v690
        %v692 = vpop.xlane.xlu0 %691
        %v693 = vsel %vm638, %v610, -inf
        %694 = vmax.xlane.f32.xlu0 %v693
        %v695 = vpop.xlane.xlu0 %694
        %v696 = vsel %vm638, %v612, -inf
        %697 = vmax.xlane.f32.xlu0 %v696
        %v698 = vpop.xlane.xlu0 %697
        %v699 = vsel %vm638, %v614, -inf
        %700 = vmax.xlane.f32.xlu0 %v699
        %v701 = vpop.xlane.xlu0 %700
        %v702 = vsel %vm638, %v616, -inf
        %703 = vmax.xlane.f32.xlu0 %v702
        %v704 = vpop.xlane.xlu0 %703
        %v705 = vsel %vm638, %v618, -inf
        %706 = vmax.xlane.f32.xlu0 %v705
        %v707 = vpop.xlane.xlu0 %706
        %v708 = vsel %vm638, %v620, -inf
        %709 = vmax.xlane.f32.xlu0 %v708
        %v710 = vpop.xlane.xlu0 %709
        %v711 = vsel %vm638, %v622, -inf
        %712 = vmax.xlane.f32.xlu0 %v711
        %v713 = vpop.xlane.xlu0 %712
        %v714 = vsel %vm638, %v624, -inf
        %715 = vmax.xlane.f32.xlu0 %v714
        %v716 = vpop.xlane.xlu0 %715
        %v717 = vsel %vm638, %v626, -inf
        %718 = vmax.xlane.f32.xlu0 %v717
        %v719 = vpop.xlane.xlu0 %718
        %v720 = vsel %vm638, %v628, -inf
        %721 = vmax.xlane.f32.xlu0 %v720
        %v722 = vpop.xlane.xlu0 %721
        %v723 = vsel %vm638, %v630, -inf
        %724 = vmax.xlane.f32.xlu0 %v723
        %v725 = vpop.xlane.xlu0 %724
        %v726 = vsel %vm638, %v632, -inf
        %727 = vmax.xlane.f32.xlu0 %v726
        %v728 = vpop.xlane.xlu0 %727
        %v729 = vsel %vm638, %v634, -inf
        %730 = vmax.xlane.f32.xlu0 %v729
        %v731 = vpop.xlane.xlu0 %730
        %v732 = vsel %vm638, %v636, -inf
        %733 = vmax.xlane.f32.xlu0 %v732
        %v734 = vpop.xlane.xlu0 %733
        %v735 = vsub.f32 %v574, %v641
        %v736 = vsub.f32 %v576, %v644
        %v737 = vsub.f32 %v578, %v647
        %v738 = vsub.f32 %v580, %v650
        %v739 = vsub.f32 %v582, %v653
        %v740 = vsub.f32 %v584, %v656
        %v741 = vsub.f32 %v586, %v659
        %v742 = vsub.f32 %v588, %v662
        %v743 = vsub.f32 %v590, %v665
        %v744 = vsub.f32 %v592, %v668
        %v745 = vsub.f32 %v594, %v671
        %v746 = vsub.f32 %v596, %v674
        %v747 = vsub.f32 %v598, %v677
        %v748 = vsub.f32 %v600, %v680
        %v749 = vsub.f32 %v602, %v683
        %v750 = vsub.f32 %v604, %v686
        %v751 = vsub.f32 %v606, %v689
        %v752 = vsub.f32 %v608, %v692
        %v753 = vsub.f32 %v610, %v695
        %v754 = vsub.f32 %v612, %v698
        %v755 = vsub.f32 %v614, %v701
        %v756 = vsub.f32 %v616, %v704
        %v757 = vsub.f32 %v618, %v707
        %v758 = vsub.f32 %v620, %v710
        %v759 = vsub.f32 %v622, %v713
        %v760 = vsub.f32 %v624, %v716
        %v761 = vsub.f32 %v626, %v719
        %v762 = vsub.f32 %v628, %v722
        %v763 = vsub.f32 %v630, %v725
        %v764 = vsub.f32 %v632, %v728
        %v765 = vsub.f32 %v634, %v731
        %v766 = vsub.f32 %v636, %v734
        %v767 = vmul.f32 %v735, 1.442695
        %v768 = vpow.pop %v767
        %v769 = vmul.f32 %v736, 1.442695
        %v770 = vpow.pop %v769
        %v771 = vmul.f32 %v737, 1.442695
        %v772 = vpow.pop %v771
        %v773 = vmul.f32 %v738, 1.442695
        %v774 = vpow.pop %v773
        %v775 = vmul.f32 %v739, 1.442695
        %v776 = vpow.pop %v775
        %v777 = vmul.f32 %v740, 1.442695
        %v778 = vpow.pop %v777
        %v779 = vmul.f32 %v741, 1.442695
        %v780 = vpow.pop %v779
        %v781 = vmul.f32 %v742, 1.442695
        %v782 = vpow.pop %v781
        %v783 = vmul.f32 %v743, 1.442695
        %v784 = vpow.pop %v783
        %v785 = vmul.f32 %v744, 1.442695
        %v786 = vpow.pop %v785
        %v787 = vmul.f32 %v745, 1.442695
        %v788 = vpow.pop %v787
        %v789 = vmul.f32 %v746, 1.442695
        %v790 = vpow.pop %v789
        %v791 = vmul.f32 %v747, 1.442695
        %v792 = vpow.pop %v791
        %v793 = vmul.f32 %v748, 1.442695
        %v794 = vpow.pop %v793
        %v795 = vmul.f32 %v749, 1.442695
        %v796 = vpow.pop %v795
        %v797 = vmul.f32 %v750, 1.442695
        %v798 = vpow.pop %v797
        %v799 = vmul.f32 %v751, 1.442695
        %v800 = vpow.pop %v799
        %v801 = vmul.f32 %v752, 1.442695
        %v802 = vpow.pop %v801
        %v803 = vmul.f32 %v753, 1.442695
        %v804 = vpow.pop %v803
        %v805 = vmul.f32 %v754, 1.442695
        %v806 = vpow.pop %v805
        %v807 = vmul.f32 %v755, 1.442695
        %v808 = vpow.pop %v807
        %v809 = vmul.f32 %v756, 1.442695
        %v810 = vpow.pop %v809
        %v811 = vmul.f32 %v757, 1.442695
        %v812 = vpow.pop %v811
        %v813 = vmul.f32 %v758, 1.442695
        %v814 = vpow.pop %v813
        %v815 = vmul.f32 %v759, 1.442695
        %v816 = vpow.pop %v815
        %v817 = vmul.f32 %v760, 1.442695
        %v818 = vpow.pop %v817
        %v819 = vmul.f32 %v761, 1.442695
        %v820 = vpow.pop %v819
        %v821 = vmul.f32 %v762, 1.442695
        %v822 = vpow.pop %v821
        %v823 = vmul.f32 %v763, 1.442695
        %v824 = vpow.pop %v823
        %v825 = vmul.f32 %v764, 1.442695
        %v826 = vpow.pop %v825
        %v827 = vmul.f32 %v765, 1.442695
        %v828 = vpow.pop %v827
        %v829 = vmul.f32 %v766, 1.442695
        %v830 = vpow.pop %v829
        %v831 = vsel %vm638, %v768, 0.0
        %832 = vadd.xlane.f32.xlu0 %v831
        %v833 = vpop.xlane.xlu0 %832
        %v834 = vsel %vm638, %v770, 0.0
        %835 = vadd.xlane.f32.xlu0 %v834
        %v836 = vpop.xlane.xlu0 %835
        %v837 = vsel %vm638, %v772, 0.0
        %838 = vadd.xlane.f32.xlu0 %v837
        %v839 = vpop.xlane.xlu0 %838
        %v840 = vsel %vm638, %v774, 0.0
        %841 = vadd.xlane.f32.xlu0 %v840
        %v842 = vpop.xlane.xlu0 %841
        %v843 = vsel %vm638, %v776, 0.0
        %844 = vadd.xlane.f32.xlu0 %v843
        %v845 = vpop.xlane.xlu0 %844
        %v846 = vsel %vm638, %v778, 0.0
        %847 = vadd.xlane.f32.xlu0 %v846
        %v848 = vpop.xlane.xlu0 %847
        %v849 = vsel %vm638, %v780, 0.0
        %850 = vadd.xlane.f32.xlu0 %v849
        %v851 = vpop.xlane.xlu0 %850
        %v852 = vsel %vm638, %v782, 0.0
        %853 = vadd.xlane.f32.xlu0 %v852
        %v854 = vpop.xlane.xlu0 %853
        %v855 = vsel %vm638, %v784, 0.0
        %856 = vadd.xlane.f32.xlu0 %v855
        %v857 = vpop.xlane.xlu0 %856
        %v858 = vsel %vm638, %v786, 0.0
        %859 = vadd.xlane.f32.xlu0 %v858
        %v860 = vpop.xlane.xlu0 %859
        %v861 = vsel %vm638, %v788, 0.0
        %862 = vadd.xlane.f32.xlu0 %v861
        %v863 = vpop.xlane.xlu0 %862
        %v864 = vsel %vm638, %v790, 0.0
        %865 = vadd.xlane.f32.xlu0 %v864
        %v866 = vpop.xlane.xlu0 %865
        %v867 = vsel %vm638, %v792, 0.0
        %868 = vadd.xlane.f32.xlu0 %v867
        %v869 = vpop.xlane.xlu0 %868
        %v870 = vsel %vm638, %v794, 0.0
        %871 = vadd.xlane.f32.xlu0 %v870
        %v872 = vpop.xlane.xlu0 %871
        %v873 = vsel %vm638, %v796, 0.0
        %874 = vadd.xlane.f32.xlu0 %v873
        %v875 = vpop.xlane.xlu0 %874
        %v876 = vsel %vm638, %v798, 0.0
        %877 = vadd.xlane.f32.xlu0 %v876
        %v878 = vpop.xlane.xlu0 %877
        %v879 = vsel %vm638, %v800, 0.0
        %880 = vadd.xlane.f32.xlu0 %v879
        %v881 = vpop.xlane.xlu0 %880
        %v882 = vsel %vm638, %v802, 0.0
        %883 = vadd.xlane.f32.xlu0 %v882
        %v884 = vpop.xlane.xlu0 %883
        %v885 = vsel %vm638, %v804, 0.0
        %886 = vadd.xlane.f32.xlu0 %v885
        %v887 = vpop.xlane.xlu0 %886
        %v888 = vsel %vm638, %v806, 0.0
        %889 = vadd.xlane.f32.xlu0 %v888
        %v890 = vpop.xlane.xlu0 %889
        %v891 = vsel %vm638, %v808, 0.0
        %892 = vadd.xlane.f32.xlu0 %v891
        %v893 = vpop.xlane.xlu0 %892
        %v894 = vsel %vm638, %v810, 0.0
        %895 = vadd.xlane.f32.xlu0 %v894
        %v896 = vpop.xlane.xlu0 %895
        %v897 = vsel %vm638, %v812, 0.0
        %898 = vadd.xlane.f32.xlu0 %v897
        %v899 = vpop.xlane.xlu0 %898
        %v900 = vsel %vm638, %v814, 0.0
        %901 = vadd.xlane.f32.xlu0 %v900
        %v902 = vpop.xlane.xlu0 %901
        %v903 = vsel %vm638, %v816, 0.0
        %904 = vadd.xlane.f32.xlu0 %v903
        %v905 = vpop.xlane.xlu0 %904
        %v906 = vsel %vm638, %v818, 0.0
        %907 = vadd.xlane.f32.xlu0 %v906
        %v908 = vpop.xlane.xlu0 %907
        %v909 = vsel %vm638, %v820, 0.0
        %910 = vadd.xlane.f32.xlu0 %v909
        %v911 = vpop.xlane.xlu0 %910
        %v912 = vsel %vm638, %v822, 0.0
        %913 = vadd.xlane.f32.xlu0 %v912
        %v914 = vpop.xlane.xlu0 %913
        %v915 = vsel %vm638, %v824, 0.0
        %916 = vadd.xlane.f32.xlu0 %v915
        %v917 = vpop.xlane.xlu0 %916
        %v918 = vsel %vm638, %v826, 0.0
        %919 = vadd.xlane.f32.xlu0 %v918
        %v920 = vpop.xlane.xlu0 %919
        %v921 = vsel %vm638, %v828, 0.0
        %922 = vadd.xlane.f32.xlu0 %v921
        %v923 = vpop.xlane.xlu0 %922
        %v924 = vsel %vm638, %v830, 0.0
        %925 = vadd.xlane.f32.xlu0 %v924
        %v926 = vpop.xlane.xlu0 %925
        %v927 = vrcp.pop %v833
        %v928 = vrcp.pop %v836
        %v929 = vrcp.pop %v839
        %v930 = vrcp.pop %v842
        %v931 = vrcp.pop %v845
        %v932 = vrcp.pop %v848
        %v933 = vrcp.pop %v851
        %v934 = vrcp.pop %v854
        %v935 = vrcp.pop %v857
        %v936 = vrcp.pop %v860
        %v937 = vrcp.pop %v863
        %v938 = vrcp.pop %v866
        %v939 = vrcp.pop %v869
        %v940 = vrcp.pop %v872
        %v941 = vrcp.pop %v875
        %v942 = vrcp.pop %v878
        %v943 = vrcp.pop %v881
        %v944 = vrcp.pop %v884
        %v945 = vrcp.pop %v887
        %v946 = vrcp.pop %v890
        %v947 = vrcp.pop %v893
        %v948 = vrcp.pop %v896
        %v949 = vrcp.pop %v899
        %v950 = vrcp.pop %v902
        %v951 = vrcp.pop %v905
        %v952 = vrcp.pop %v908
        %v953 = vrcp.pop %v911
        %v954 = vrcp.pop %v914
        %v955 = vrcp.pop %v917
        %v956 = vrcp.pop %v920
        %v957 = vrcp.pop %v923
        %v958 = vrcp.pop %v926
        %v959 = vmul.f32 %v768, %v927
        %v960 = vmul.f32 %v770, %v928
        %v961 = vmul.f32 %v772, %v929
        %v962 = vmul.f32 %v774, %v930
        %v963 = vmul.f32 %v776, %v931
        %v964 = vmul.f32 %v778, %v932
        %v965 = vmul.f32 %v780, %v933
        %v966 = vmul.f32 %v782, %v934
        %v967 = vmul.f32 %v784, %v935
        %v968 = vmul.f32 %v786, %v936
        %v969 = vmul.f32 %v788, %v937
        %v970 = vmul.f32 %v790, %v938
        %v971 = vmul.f32 %v792, %v939
        %v972 = vmul.f32 %v794, %v940
        %v973 = vmul.f32 %v796, %v941
        %v974 = vmul.f32 %v798, %v942
        %v975 = vmul.f32 %v800, %v943
        %v976 = vmul.f32 %v802, %v944
        %v977 = vmul.f32 %v804, %v945
        %v978 = vmul.f32 %v806, %v946
        %v979 = vmul.f32 %v808, %v947
        %v980 = vmul.f32 %v810, %v948
        %v981 = vmul.f32 %v812, %v949
        %v982 = vmul.f32 %v814, %v950
        %v983 = vmul.f32 %v816, %v951
        %v984 = vmul.f32 %v818, %v952
        %v985 = vmul.f32 %v820, %v953
        %v986 = vmul.f32 %v822, %v954
        %v987 = vmul.f32 %v824, %v955
        %v988 = vmul.f32 %v826, %v956
        %v989 = vmul.f32 %v828, %v957
        %v990 = vmul.f32 %v830, %v958
        %v991 = vsel %vm638, %v959, 0.0
        %v992 = vsel %vm638, %v967, 0.0
        %v993 = vadd.f32 %v991, %v992
        %v994 = vsel %vm638, %v975, 0.0
        %v995 = vadd.f32 %v993, %v994
        %v996 = vsel %vm638, %v983, 0.0
        %v997 = vadd.f32 %v995, %v996
        %v998 = vsel %vm638, %v960, 0.0
        %v999 = vsel %vm638, %v968, 0.0
        %v1000 = vadd.f32 %v998, %v999
        %v1001 = vsel %vm638, %v976, 0.0
        %v1002 = vadd.f32 %v1000, %v1001
        %v1003 = vsel %vm638, %v984, 0.0
        %v1004 = vadd.f32 %v1002, %v1003
        %v1005 = vsel %vm638, %v961, 0.0
        %v1006 = vsel %vm638, %v969, 0.0
        %v1007 = vadd.f32 %v1005, %v1006
        %v1008 = vsel %vm638, %v977, 0.0
        %v1009 = vadd.f32 %v1007, %v1008
        %v1010 = vsel %vm638, %v985, 0.0
        %v1011 = vadd.f32 %v1009, %v1010
        %v1012 = vsel %vm638, %v962, 0.0
        %v1013 = vsel %vm638, %v970, 0.0
        %v1014 = vadd.f32 %v1012, %v1013
        %v1015 = vsel %vm638, %v978, 0.0
        %v1016 = vadd.f32 %v1014, %v1015
        %v1017 = vsel %vm638, %v986, 0.0
        %v1018 = vadd.f32 %v1016, %v1017
        %v1019 = vsel %vm638, %v963, 0.0
        %v1020 = vsel %vm638, %v971, 0.0
        %v1021 = vadd.f32 %v1019, %v1020
        %v1022 = vsel %vm638, %v979, 0.0
        %v1023 = vadd.f32 %v1021, %v1022
        %v1024 = vsel %vm638, %v987, 0.0
        %v1025 = vadd.f32 %v1023, %v1024
        %v1026 = vsel %vm638, %v964, 0.0
        %v1027 = vsel %vm638, %v972, 0.0
        %v1028 = vadd.f32 %v1026, %v1027
        %v1029 = vsel %vm638, %v980, 0.0
        %v1030 = vadd.f32 %v1028, %v1029
        %v1031 = vsel %vm638, %v988, 0.0
        %v1032 = vadd.f32 %v1030, %v1031
        %v1033 = vsel %vm638, %v965, 0.0
        %v1034 = vsel %vm638, %v973, 0.0
        %v1035 = vadd.f32 %v1033, %v1034
        %v1036 = vsel %vm638, %v981, 0.0
        %v1037 = vadd.f32 %v1035, %v1036
        %v1038 = vsel %vm638, %v989, 0.0
        %v1039 = vadd.f32 %v1037, %v1038
        %v1040 = vsel %vm638, %v966, 0.0
        %v1041 = vsel %vm638, %v974, 0.0
        %v1042 = vadd.f32 %v1040, %v1041
        %v1043 = vsel %vm638, %v982, 0.0
        %v1044 = vadd.f32 %v1042, %v1043
        %v1045 = vsel %vm638, %v990, 0.0
        %v1046 = vadd.f32 %v1044, %v1045
        %v1047 = vld [vmem:[%s208] sm:$0xff]
        %v1048 = vld [vmem:[%s208 + $0x8] sm:$0xff]
        %v1049 = vld [vmem:[%s208 + $0x10] sm:$0xff]
        %v1050 = vld [vmem:[%s208 + $0x18] sm:$0xff]
        %v1051 = vld [vmem:[%s208 + $0x20] sm:$0xf]
        %vm1052 = vcmask 589088
        %v1053 = vsel %vm1052, %v574, -inf
        %1054 = vmax.xlane.f32.xlu0 %v1053
        %v1055 = vpop.xlane.xlu0 %1054
        %v1056 = vsel %vm1052, %v576, -inf
        %1057 = vmax.xlane.f32.xlu0 %v1056
        %v1058 = vpop.xlane.xlu0 %1057
        %v1059 = vsel %vm1052, %v578, -inf
        %1060 = vmax.xlane.f32.xlu0 %v1059
        %v1061 = vpop.xlane.xlu0 %1060
        %v1062 = vsel %vm1052, %v580, -inf
        %1063 = vmax.xlane.f32.xlu0 %v1062
        %v1064 = vpop.xlane.xlu0 %1063
        %v1065 = vsel %vm1052, %v582, -inf
        %1066 = vmax.xlane.f32.xlu0 %v1065
        %v1067 = vpop.xlane.xlu0 %1066
        %v1068 = vsel %vm1052, %v584, -inf
        %1069 = vmax.xlane.f32.xlu0 %v1068
        %v1070 = vpop.xlane.xlu0 %1069
        %v1071 = vsel %vm1052, %v586, -inf
        %1072 = vmax.xlane.f32.xlu0 %v1071
        %v1073 = vpop.xlane.xlu0 %1072
        %v1074 = vsel %vm1052, %v588, -inf
        %1075 = vmax.xlane.f32.xlu0 %v1074
        %v1076 = vpop.xlane.xlu0 %1075
        %v1077 = vsel %vm1052, %v590, -inf
        %1078 = vmax.xlane.f32.xlu0 %v1077
        %v1079 = vpop.xlane.xlu0 %1078
        %v1080 = vsel %vm1052, %v592, -inf
        %1081 = vmax.xlane.f32.xlu0 %v1080
        %v1082 = vpop.xlane.xlu0 %1081
        %v1083 = vsel %vm1052, %v594, -inf
        %1084 = vmax.xlane.f32.xlu0 %v1083
        %v1085 = vpop.xlane.xlu0 %1084
        %v1086 = vsel %vm1052, %v596, -inf
        %1087 = vmax.xlane.f32.xlu0 %v1086
        %v1088 = vpop.xlane.xlu0 %1087
        %v1089 = vsel %vm1052, %v598, -inf
        %1090 = vmax.xlane.f32.xlu0 %v1089
        %v1091 = vpop.xlane.xlu0 %1090
        %v1092 = vsel %vm1052, %v600, -inf
        %1093 = vmax.xlane.f32.xlu0 %v1092
        %v1094 = vpop.xlane.xlu0 %1093
        %v1095 = vsel %vm1052, %v602, -inf
        %1096 = vmax.xlane.f32.xlu0 %v1095
        %v1097 = vpop.xlane.xlu0 %1096
        %v1098 = vsel %vm1052, %v604, -inf
        %1099 = vmax.xlane.f32.xlu0 %v1098
        %v1100 = vpop.xlane.xlu0 %1099
        %v1101 = vsel %vm1052, %v606, -inf
        %1102 = vmax.xlane.f32.xlu0 %v1101
        %v1103 = vpop.xlane.xlu0 %1102
        %v1104 = vsel %vm1052, %v608, -inf
        %1105 = vmax.xlane.f32.xlu0 %v1104
        %v1106 = vpop.xlane.xlu0 %1105
        %v1107 = vsel %vm1052, %v610, -inf
        %1108 = vmax.xlane.f32.xlu0 %v1107
        %v1109 = vpop.xlane.xlu0 %1108
        %v1110 = vsel %vm1052, %v612, -inf
        %1111 = vmax.xlane.f32.xlu0 %v1110
        %v1112 = vpop.xlane.xlu0 %1111
        %v1113 = vsel %vm1052, %v614, -inf
        %1114 = vmax.xlane.f32.xlu0 %v1113
        %v1115 = vpop.xlane.xlu0 %1114
        %v1116 = vsel %vm1052, %v616, -inf
        %1117 = vmax.xlane.f32.xlu0 %v1116
        %v1118 = vpop.xlane.xlu0 %1117
        %v1119 = vsel %vm1052, %v618, -inf
        %1120 = vmax.xlane.f32.xlu0 %v1119
        %v1121 = vpop.xlane.xlu0 %1120
        %v1122 = vsel %vm1052, %v620, -inf
        %1123 = vmax.xlane.f32.xlu0 %v1122
        %v1124 = vpop.xlane.xlu0 %1123
        %v1125 = vsel %vm1052, %v622, -inf
        %1126 = vmax.xlane.f32.xlu0 %v1125
        %v1127 = vpop.xlane.xlu0 %1126
        %v1128 = vsel %vm1052, %v624, -inf
        %1129 = vmax.xlane.f32.xlu0 %v1128
        %v1130 = vpop.xlane.xlu0 %1129
        %v1131 = vsel %vm1052, %v626, -inf
        %1132 = vmax.xlane.f32.xlu0 %v1131
        %v1133 = vpop.xlane.xlu0 %1132
        %v1134 = vsel %vm1052, %v628, -inf
        %1135 = vmax.xlane.f32.xlu0 %v1134
        %v1136 = vpop.xlane.xlu0 %1135
        %v1137 = vsel %vm1052, %v630, -inf
        %1138 = vmax.xlane.f32.xlu0 %v1137
        %v1139 = vpop.xlane.xlu0 %1138
        %v1140 = vsel %vm1052, %v632, -inf
        %1141 = vmax.xlane.f32.xlu0 %v1140
        %v1142 = vpop.xlane.xlu0 %1141
        %v1143 = vsel %vm1052, %v634, -inf
        %1144 = vmax.xlane.f32.xlu0 %v1143
        %v1145 = vpop.xlane.xlu0 %1144
        %v1146 = vsel %vm1052, %v636, -inf
        %1147 = vmax.xlane.f32.xlu0 %v1146
        %v1148 = vpop.xlane.xlu0 %1147
        %v1149 = vsub.f32 %v574, %v1055
        %v1150 = vsub.f32 %v576, %v1058
        %v1151 = vsub.f32 %v578, %v1061
        %v1152 = vsub.f32 %v580, %v1064
        %v1153 = vsub.f32 %v582, %v1067
        %v1154 = vsub.f32 %v584, %v1070
        %v1155 = vsub.f32 %v586, %v1073
        %v1156 = vsub.f32 %v588, %v1076
        %v1157 = vsub.f32 %v590, %v1079
        %v1158 = vsub.f32 %v592, %v1082
        %v1159 = vsub.f32 %v594, %v1085
        %v1160 = vsub.f32 %v596, %v1088
        %v1161 = vsub.f32 %v598, %v1091
        %v1162 = vsub.f32 %v600, %v1094
        %v1163 = vsub.f32 %v602, %v1097
        %v1164 = vsub.f32 %v604, %v1100
        %v1165 = vsub.f32 %v606, %v1103
        %v1166 = vsub.f32 %v608, %v1106
        %v1167 = vsub.f32 %v610, %v1109
        %v1168 = vsub.f32 %v612, %v1112
        %v1169 = vsub.f32 %v614, %v1115
        %v1170 = vsub.f32 %v616, %v1118
        %v1171 = vsub.f32 %v618, %v1121
        %v1172 = vsub.f32 %v620, %v1124
        %v1173 = vsub.f32 %v622, %v1127
        %v1174 = vsub.f32 %v624, %v1130
        %v1175 = vsub.f32 %v626, %v1133
        %v1176 = vsub.f32 %v628, %v1136
        %v1177 = vsub.f32 %v630, %v1139
        %v1178 = vsub.f32 %v632, %v1142
        %v1179 = vsub.f32 %v634, %v1145
        %v1180 = vsub.f32 %v636, %v1148
        %v1181 = vmul.f32 %v1149, 1.442695
        %v1182 = vpow.pop %v1181
        %v1183 = vmul.f32 %v1150, 1.442695
        %v1184 = vpow.pop %v1183
        %v1185 = vmul.f32 %v1151, 1.442695
        %v1186 = vpow.pop %v1185
        %v1187 = vmul.f32 %v1152, 1.442695
        %v1188 = vpow.pop %v1187
        %v1189 = vmul.f32 %v1153, 1.442695
        %v1190 = vpow.pop %v1189
        %v1191 = vmul.f32 %v1154, 1.442695
        %v1192 = vpow.pop %v1191
        %v1193 = vmul.f32 %v1155, 1.442695
        %v1194 = vpow.pop %v1193
        %v1195 = vmul.f32 %v1156, 1.442695
        %v1196 = vpow.pop %v1195
        %v1197 = vmul.f32 %v1157, 1.442695
        %v1198 = vpow.pop %v1197
        %v1199 = vmul.f32 %v1158, 1.442695
        %v1200 = vpow.pop %v1199
        %v1201 = vmul.f32 %v1159, 1.442695
        %v1202 = vpow.pop %v1201
        %v1203 = vmul.f32 %v1160, 1.442695
        %v1204 = vpow.pop %v1203
        %v1205 = vmul.f32 %v1161, 1.442695
        %v1206 = vpow.pop %v1205
        %v1207 = vmul.f32 %v1162, 1.442695
        %v1208 = vpow.pop %v1207
        %v1209 = vmul.f32 %v1163, 1.442695
        %v1210 = vpow.pop %v1209
        %v1211 = vmul.f32 %v1164, 1.442695
        %v1212 = vpow.pop %v1211
        %v1213 = vmul.f32 %v1165, 1.442695
        %v1214 = vpow.pop %v1213
        %v1215 = vmul.f32 %v1166, 1.442695
        %v1216 = vpow.pop %v1215
        %v1217 = vmul.f32 %v1167, 1.442695
        %v1218 = vpow.pop %v1217
        %v1219 = vmul.f32 %v1168, 1.442695
        %v1220 = vpow.pop %v1219
        %v1221 = vmul.f32 %v1169, 1.442695
        %v1222 = vpow.pop %v1221
        %v1223 = vmul.f32 %v1170, 1.442695
        %v1224 = vpow.pop %v1223
        %v1225 = vmul.f32 %v1171, 1.442695
        %v1226 = vpow.pop %v1225
        %v1227 = vmul.f32 %v1172, 1.442695
        %v1228 = vpow.pop %v1227
        %v1229 = vmul.f32 %v1173, 1.442695
        %v1230 = vpow.pop %v1229
        %v1231 = vmul.f32 %v1174, 1.442695
        %v1232 = vpow.pop %v1231
        %v1233 = vmul.f32 %v1175, 1.442695
        %v1234 = vpow.pop %v1233
        %v1235 = vmul.f32 %v1176, 1.442695
        %v1236 = vpow.pop %v1235
        %v1237 = vmul.f32 %v1177, 1.442695
        %v1238 = vpow.pop %v1237
        %v1239 = vmul.f32 %v1178, 1.442695
        %v1240 = vpow.pop %v1239
        %v1241 = vmul.f32 %v1179, 1.442695
        %v1242 = vpow.pop %v1241
        %v1243 = vmul.f32 %v1180, 1.442695
        %v1244 = vpow.pop %v1243
        %1277 = vrot.lane.b32.xlu0 %v1182, 92
        %v1278 = vpop.permute.xlu0 %1277
        %1279 = vrot.lane.b32.xlu0 %v1184, 92
        %v1280 = vpop.permute.xlu0 %1279
        %1281 = vrot.lane.b32.xlu0 %v1186, 92
        %v1282 = vpop.permute.xlu0 %1281
        %1283 = vrot.lane.b32.xlu0 %v1188, 92
        %v1284 = vpop.permute.xlu0 %1283
        %1285 = vrot.lane.b32.xlu0 %v1190, 92
        %v1286 = vpop.permute.xlu0 %1285
        %1287 = vrot.lane.b32.xlu0 %v1192, 92
        %v1288 = vpop.permute.xlu0 %1287
        %1289 = vrot.lane.b32.xlu0 %v1194, 92
        %v1290 = vpop.permute.xlu0 %1289
        %1291 = vrot.lane.b32.xlu0 %v1196, 92
        %v1292 = vpop.permute.xlu0 %1291
        %1293 = vrot.lane.b32.xlu0 %v1198, 92
        %v1294 = vpop.permute.xlu0 %1293
        %1295 = vrot.lane.b32.xlu0 %v1200, 92
        %v1296 = vpop.permute.xlu0 %1295
        %1297 = vrot.lane.b32.xlu0 %v1202, 92
        %v1298 = vpop.permute.xlu0 %1297
        %1299 = vrot.lane.b32.xlu0 %v1204, 92
        %v1300 = vpop.permute.xlu0 %1299
        %1301 = vrot.lane.b32.xlu0 %v1206, 92
        %v1302 = vpop.permute.xlu0 %1301
        %1303 = vrot.lane.b32.xlu0 %v1208, 92
        %v1304 = vpop.permute.xlu0 %1303
        %1305 = vrot.lane.b32.xlu0 %v1210, 92
        %v1306 = vpop.permute.xlu0 %1305
        %1307 = vrot.lane.b32.xlu0 %v1212, 92
        %v1308 = vpop.permute.xlu0 %1307
        %1309 = vrot.lane.b32.xlu0 %v1214, 92
        %v1310 = vpop.permute.xlu0 %1309
        %1311 = vrot.lane.b32.xlu0 %v1216, 92
        %v1312 = vpop.permute.xlu0 %1311
        %1313 = vrot.lane.b32.xlu0 %v1218, 92
        %v1314 = vpop.permute.xlu0 %1313
        %1315 = vrot.lane.b32.xlu0 %v1220, 92
        %v1316 = vpop.permute.xlu0 %1315
        %1317 = vrot.lane.b32.xlu0 %v1222, 92
        %v1318 = vpop.permute.xlu0 %1317
        %1319 = vrot.lane.b32.xlu0 %v1224, 92
        %v1320 = vpop.permute.xlu0 %1319
        %1321 = vrot.lane.b32.xlu0 %v1226, 92
        %v1322 = vpop.permute.xlu0 %1321
        %1323 = vrot.lane.b32.xlu0 %v1228, 92
        %v1324 = vpop.permute.xlu0 %1323
        %1325 = vrot.lane.b32.xlu0 %v1230, 92
        %v1326 = vpop.permute.xlu0 %1325
        %1327 = vrot.lane.b32.xlu0 %v1232, 92
        %v1328 = vpop.permute.xlu0 %1327
        %1329 = vrot.lane.b32.xlu0 %v1234, 92
        %v1330 = vpop.permute.xlu0 %1329
        %1331 = vrot.lane.b32.xlu0 %v1236, 92
        %v1332 = vpop.permute.xlu0 %1331
        %1333 = vrot.lane.b32.xlu0 %v1238, 92
        %v1334 = vpop.permute.xlu0 %1333
        %1335 = vrot.lane.b32.xlu0 %v1240, 92
        %v1336 = vpop.permute.xlu0 %1335
        %1337 = vrot.lane.b32.xlu0 %v1242, 92
        %v1338 = vpop.permute.xlu0 %1337
        %1339 = vrot.lane.b32.xlu0 %v1244, 92
        %v1340 = vpop.permute.xlu0 %1339
        %v1373 = vsel %vm638, %v1278, 0.0
        %1374 = vadd.xlane.f32.xlu0 %v1373
        %v1375 = vpop.xlane.xlu0 %1374
        %v1376 = vsel %vm638, %v1280, 0.0
        %1377 = vadd.xlane.f32.xlu0 %v1376
        %v1378 = vpop.xlane.xlu0 %1377
        %v1379 = vsel %vm638, %v1282, 0.0
        %1380 = vadd.xlane.f32.xlu0 %v1379
        %v1381 = vpop.xlane.xlu0 %1380
        %v1382 = vsel %vm638, %v1284, 0.0
        %1383 = vadd.xlane.f32.xlu0 %v1382
        %v1384 = vpop.xlane.xlu0 %1383
        %v1385 = vsel %vm638, %v1286, 0.0
        %1386 = vadd.xlane.f32.xlu0 %v1385
        %v1387 = vpop.xlane.xlu0 %1386
        %v1388 = vsel %vm638, %v1288, 0.0
        %1389 = vadd.xlane.f32.xlu0 %v1388
        %v1390 = vpop.xlane.xlu0 %1389
        %v1391 = vsel %vm638, %v1290, 0.0
        %1392 = vadd.xlane.f32.xlu0 %v1391
        %v1393 = vpop.xlane.xlu0 %1392
        %v1394 = vsel %vm638, %v1292, 0.0
        %1395 = vadd.xlane.f32.xlu0 %v1394
        %v1396 = vpop.xlane.xlu0 %1395
        %v1397 = vsel %vm638, %v1294, 0.0
        %1398 = vadd.xlane.f32.xlu0 %v1397
        %v1399 = vpop.xlane.xlu0 %1398
        %v1400 = vsel %vm638, %v1296, 0.0
        %1401 = vadd.xlane.f32.xlu0 %v1400
        %v1402 = vpop.xlane.xlu0 %1401
        %v1403 = vsel %vm638, %v1298, 0.0
        %1404 = vadd.xlane.f32.xlu0 %v1403
        %v1405 = vpop.xlane.xlu0 %1404
        %v1406 = vsel %vm638, %v1300, 0.0
        %1407 = vadd.xlane.f32.xlu0 %v1406
        %v1408 = vpop.xlane.xlu0 %1407
        %v1409 = vsel %vm638, %v1302, 0.0
        %1410 = vadd.xlane.f32.xlu0 %v1409
        %v1411 = vpop.xlane.xlu0 %1410
        %v1412 = vsel %vm638, %v1304, 0.0
        %1413 = vadd.xlane.f32.xlu0 %v1412
        %v1414 = vpop.xlane.xlu0 %1413
        %v1415 = vsel %vm638, %v1306, 0.0
        %1416 = vadd.xlane.f32.xlu0 %v1415
        %v1417 = vpop.xlane.xlu0 %1416
        %v1418 = vsel %vm638, %v1308, 0.0
        %1419 = vadd.xlane.f32.xlu0 %v1418
        %v1420 = vpop.xlane.xlu0 %1419
        %v1421 = vsel %vm638, %v1310, 0.0
        %1422 = vadd.xlane.f32.xlu0 %v1421
        %v1423 = vpop.xlane.xlu0 %1422
        %v1424 = vsel %vm638, %v1312, 0.0
        %1425 = vadd.xlane.f32.xlu0 %v1424
        %v1426 = vpop.xlane.xlu0 %1425
        %v1427 = vsel %vm638, %v1314, 0.0
        %1428 = vadd.xlane.f32.xlu0 %v1427
        %v1429 = vpop.xlane.xlu0 %1428
        %v1430 = vsel %vm638, %v1316, 0.0
        %1431 = vadd.xlane.f32.xlu0 %v1430
        %v1432 = vpop.xlane.xlu0 %1431
        %v1433 = vsel %vm638, %v1318, 0.0
        %1434 = vadd.xlane.f32.xlu0 %v1433
        %v1435 = vpop.xlane.xlu0 %1434
        %v1436 = vsel %vm638, %v1320, 0.0
        %1437 = vadd.xlane.f32.xlu0 %v1436
        %v1438 = vpop.xlane.xlu0 %1437
        %v1439 = vsel %vm638, %v1322, 0.0
        %1440 = vadd.xlane.f32.xlu0 %v1439
        %v1441 = vpop.xlane.xlu0 %1440
        %v1442 = vsel %vm638, %v1324, 0.0
        %1443 = vadd.xlane.f32.xlu0 %v1442
        %v1444 = vpop.xlane.xlu0 %1443
        %v1445 = vsel %vm638, %v1326, 0.0
        %1446 = vadd.xlane.f32.xlu0 %v1445
        %v1447 = vpop.xlane.xlu0 %1446
        %v1448 = vsel %vm638, %v1328, 0.0
        %1449 = vadd.xlane.f32.xlu0 %v1448
        %v1450 = vpop.xlane.xlu0 %1449
        %v1451 = vsel %vm638, %v1330, 0.0
        %1452 = vadd.xlane.f32.xlu0 %v1451
        %v1453 = vpop.xlane.xlu0 %1452
        %v1454 = vsel %vm638, %v1332, 0.0
        %1455 = vadd.xlane.f32.xlu0 %v1454
        %v1456 = vpop.xlane.xlu0 %1455
        %v1457 = vsel %vm638, %v1334, 0.0
        %1458 = vadd.xlane.f32.xlu0 %v1457
        %v1459 = vpop.xlane.xlu0 %1458
        %v1460 = vsel %vm638, %v1336, 0.0
        %1461 = vadd.xlane.f32.xlu0 %v1460
        %v1462 = vpop.xlane.xlu0 %1461
        %v1463 = vsel %vm638, %v1338, 0.0
        %1464 = vadd.xlane.f32.xlu0 %v1463
        %v1465 = vpop.xlane.xlu0 %1464
        %v1466 = vsel %vm638, %v1340, 0.0
        %1467 = vadd.xlane.f32.xlu0 %v1466
        %v1468 = vpop.xlane.xlu0 %1467
        %v1469 = vrcp.pop %v1375
        %v1470 = vrcp.pop %v1378
        %v1471 = vrcp.pop %v1381
        %v1472 = vrcp.pop %v1384
        %v1473 = vrcp.pop %v1387
        %v1474 = vrcp.pop %v1390
        %v1475 = vrcp.pop %v1393
        %v1476 = vrcp.pop %v1396
        %v1477 = vrcp.pop %v1399
        %v1478 = vrcp.pop %v1402
        %v1479 = vrcp.pop %v1405
        %v1480 = vrcp.pop %v1408
        %v1481 = vrcp.pop %v1411
        %v1482 = vrcp.pop %v1414
        %v1483 = vrcp.pop %v1417
        %v1484 = vrcp.pop %v1420
        %v1485 = vrcp.pop %v1423
        %v1486 = vrcp.pop %v1426
        %v1487 = vrcp.pop %v1429
        %v1488 = vrcp.pop %v1432
        %v1489 = vrcp.pop %v1435
        %v1490 = vrcp.pop %v1438
        %v1491 = vrcp.pop %v1441
        %v1492 = vrcp.pop %v1444
        %v1493 = vrcp.pop %v1447
        %v1494 = vrcp.pop %v1450
        %v1495 = vrcp.pop %v1453
        %v1496 = vrcp.pop %v1456
        %v1497 = vrcp.pop %v1459
        %v1498 = vrcp.pop %v1462
        %v1499 = vrcp.pop %v1465
        %v1500 = vrcp.pop %v1468
        %v1501 = vmul.f32 %v1182, %v1469
        %v1502 = vmul.f32 %v1184, %v1470
        %v1503 = vmul.f32 %v1186, %v1471
        %v1504 = vmul.f32 %v1188, %v1472
        %v1505 = vmul.f32 %v1190, %v1473
        %v1506 = vmul.f32 %v1192, %v1474
        %v1507 = vmul.f32 %v1194, %v1475
        %v1508 = vmul.f32 %v1196, %v1476
        %v1509 = vmul.f32 %v1198, %v1477
        %v1510 = vmul.f32 %v1200, %v1478
        %v1511 = vmul.f32 %v1202, %v1479
        %v1512 = vmul.f32 %v1204, %v1480
        %v1513 = vmul.f32 %v1206, %v1481
        %v1514 = vmul.f32 %v1208, %v1482
        %v1515 = vmul.f32 %v1210, %v1483
        %v1516 = vmul.f32 %v1212, %v1484
        %v1517 = vmul.f32 %v1214, %v1485
        %v1518 = vmul.f32 %v1216, %v1486
        %v1519 = vmul.f32 %v1218, %v1487
        %v1520 = vmul.f32 %v1220, %v1488
        %v1521 = vmul.f32 %v1222, %v1489
        %v1522 = vmul.f32 %v1224, %v1490
        %v1523 = vmul.f32 %v1226, %v1491
        %v1524 = vmul.f32 %v1228, %v1492
        %v1525 = vmul.f32 %v1230, %v1493
        %v1526 = vmul.f32 %v1232, %v1494
        %v1527 = vmul.f32 %v1234, %v1495
        %v1528 = vmul.f32 %v1236, %v1496
        %v1529 = vmul.f32 %v1238, %v1497
        %v1530 = vmul.f32 %v1240, %v1498
        %v1531 = vmul.f32 %v1242, %v1499
        %v1532 = vmul.f32 %v1244, %v1500
        %v1533 = vsel %vm1052, %v1501, 0.0
        %v1534 = vsel %vm1052, %v1509, 0.0
        %v1535 = vadd.f32 %v1533, %v1534
        %v1536 = vsel %vm1052, %v1517, 0.0
        %v1537 = vadd.f32 %v1535, %v1536
        %v1538 = vsel %vm1052, %v1525, 0.0
        %v1539 = vadd.f32 %v1537, %v1538
        %v1540 = vsel %vm1052, %v1502, 0.0
        %v1541 = vsel %vm1052, %v1510, 0.0
        %v1542 = vadd.f32 %v1540, %v1541
        %v1543 = vsel %vm1052, %v1518, 0.0
        %v1544 = vadd.f32 %v1542, %v1543
        %v1545 = vsel %vm1052, %v1526, 0.0
        %v1546 = vadd.f32 %v1544, %v1545
        %v1547 = vsel %vm1052, %v1503, 0.0
        %v1548 = vsel %vm1052, %v1511, 0.0
        %v1549 = vadd.f32 %v1547, %v1548
        %v1550 = vsel %vm1052, %v1519, 0.0
        %v1551 = vadd.f32 %v1549, %v1550
        %v1552 = vsel %vm1052, %v1527, 0.0
        %v1553 = vadd.f32 %v1551, %v1552
        %v1554 = vsel %vm1052, %v1504, 0.0
        %v1555 = vsel %vm1052, %v1512, 0.0
        %v1556 = vadd.f32 %v1554, %v1555
        %v1557 = vsel %vm1052, %v1520, 0.0
        %v1558 = vadd.f32 %v1556, %v1557
        %v1559 = vsel %vm1052, %v1528, 0.0
        %v1560 = vadd.f32 %v1558, %v1559
        %v1561 = vsel %vm1052, %v1505, 0.0
        %v1562 = vsel %vm1052, %v1513, 0.0
        %v1563 = vadd.f32 %v1561, %v1562
        %v1564 = vsel %vm1052, %v1521, 0.0
        %v1565 = vadd.f32 %v1563, %v1564
        %v1566 = vsel %vm1052, %v1529, 0.0
        %v1567 = vadd.f32 %v1565, %v1566
        %v1568 = vsel %vm1052, %v1506, 0.0
        %v1569 = vsel %vm1052, %v1514, 0.0
        %v1570 = vadd.f32 %v1568, %v1569
        %v1571 = vsel %vm1052, %v1522, 0.0
        %v1572 = vadd.f32 %v1570, %v1571
        %v1573 = vsel %vm1052, %v1530, 0.0
        %v1574 = vadd.f32 %v1572, %v1573
        %v1575 = vsel %vm1052, %v1507, 0.0
        %v1576 = vsel %vm1052, %v1515, 0.0
        %v1577 = vadd.f32 %v1575, %v1576
        %v1578 = vsel %vm1052, %v1523, 0.0
        %v1579 = vadd.f32 %v1577, %v1578
        %v1580 = vsel %vm1052, %v1531, 0.0
        %v1581 = vadd.f32 %v1579, %v1580
        %v1582 = vsel %vm1052, %v1508, 0.0
        %v1583 = vsel %vm1052, %v1516, 0.0
        %v1584 = vadd.f32 %v1582, %v1583
        %v1585 = vsel %vm1052, %v1524, 0.0
        %v1586 = vadd.f32 %v1584, %v1585
        %v1587 = vsel %vm1052, %v1532, 0.0
        %v1588 = vadd.f32 %v1586, %v1587
        %s1589 = scalar_lea.vmem %s208, 40
        %v1590 = vld [vmem:[%s1589] sm:$0xff]
        %v1591 = vld [vmem:[%s1589 + $0x8] sm:$0xff]
        %v1592 = vld [vmem:[%s1589 + $0x10] sm:$0xff]
        %v1593 = vld [vmem:[%s1589 + $0x18] sm:$0xff]
        %v1594 = vld [vmem:[%s1589 + $0x20] sm:$0xf]
        %1603 = vrot.lane.b32.xlu0 %v1539, 92
        %v1604 = vpop.permute.xlu0 %1603
        %1605 = vrot.lane.b32.xlu0 %v1546, 92
        %v1606 = vpop.permute.xlu0 %1605
        %1607 = vrot.lane.b32.xlu0 %v1553, 92
        %v1608 = vpop.permute.xlu0 %1607
        %1609 = vrot.lane.b32.xlu0 %v1560, 92
        %v1610 = vpop.permute.xlu0 %1609
        %1611 = vrot.lane.b32.xlu0 %v1567, 92
        %v1612 = vpop.permute.xlu0 %1611
        %1613 = vrot.lane.b32.xlu0 %v1574, 92
        %v1614 = vpop.permute.xlu0 %1613
        %1615 = vrot.lane.b32.xlu0 %v1581, 92
        %v1616 = vpop.permute.xlu0 %1615
        %1617 = vrot.lane.b32.xlu0 %v1588, 92
        %v1618 = vpop.permute.xlu0 %1617
        %v1619 = vsel %vm638, %v1604, 0
        %v1621 = vsel %vm638, %v1606, 0
        %v1623 = vsel %vm638, %v1608, 0
        %v1625 = vsel %vm638, %v1610, 0
        %v1627 = vsel %vm638, %v1612, 0
        %v1629 = vsel %vm638, %v1614, 0
        %v1631 = vsel %vm638, %v1616, 0
        %v1633 = vsel %vm638, %v1618, 0
        %v1636 = vsel %vm343, %v1594, 0
        %1638 = vmatpush.msra.mxu0 0.0
        %1639 = vmatpush.msra.mxu0 0.0
        %1640 = vmatpush.msra.mxu0 0.0
        %1641 = vmatpush.msra.mxu0 0.0
        %1642 = vmatpush.msra.mxu0 0.0
        %1643 = vmatpush.msra.mxu0 0.0
        %1644 = vmatpush.msra.mxu0 0.0
        %1645 = vmatpush.msra.mxu0 0.0
        %1646 = vmatpush.msra.mxu0 0.0
        %1647 = vmatpush.msra.mxu0 0.0
        %1648 = vmatpush.msra.mxu0 0.0
        %1649 = vmatpush.msra.mxu0 %v1636
        %1650 = vmatpush.msra.mxu0 %v1593
        %1651 = vmatpush.msra.mxu0 %v1592
        %1652 = vmatpush.msra.mxu0 %v1591
        %1653 = vmatpush.msra.mxu0 %v1590
        %1654 = vmatmul.f32.gmra.mxu0 %v1619
        %v1655 = vpop.f32.mrf.mxu0
        %v1656 = vadd.f32 0.0, %v1655
        %1657 = vmatmul.f32.gmra.mxu0 %v1621
        %v1658 = vpop.f32.mrf.mxu0
        %v1659 = vadd.f32 0.0, %v1658
        %1660 = vmatmul.f32.gmra.mxu0 %v1623
        %v1661 = vpop.f32.mrf.mxu0
        %v1662 = vadd.f32 0.0, %v1661
        %1663 = vmatmul.f32.gmra.mxu0 %v1625
        %v1664 = vpop.f32.mrf.mxu0
        %v1665 = vadd.f32 0.0, %v1664
        %1666 = vmatmul.f32.gmra.mxu0 %v1627
        %v1667 = vpop.f32.mrf.mxu0
        %v1668 = vadd.f32 0.0, %v1667
        %1669 = vmatmul.f32.gmra.mxu0 %v1629
        %v1670 = vpop.f32.mrf.mxu0
        %v1671 = vadd.f32 0.0, %v1670
        %1672 = vmatmul.f32.gmra.mxu0 %v1631
        %v1673 = vpop.f32.mrf.mxu0
        %v1674 = vadd.f32 0.0, %v1673
        %1675 = vmatmul.f32.gmra.mxu0 %v1633
        %v1676 = vpop.f32.mrf.mxu0
        %v1677 = vadd.f32 0.0, %v1676
        %1678 = vdwg.mxu0
        %v1680 = vsel %vm638, %v997, 0
        %v1683 = vsel %vm638, %v1004, 0
        %v1686 = vsel %vm638, %v1011, 0
        %v1689 = vsel %vm638, %v1018, 0
        %v1692 = vsel %vm638, %v1025, 0
        %v1695 = vsel %vm638, %v1032, 0
        %v1698 = vsel %vm638, %v1039, 0
        %v1701 = vsel %vm638, %v1046, 0
        %v1704 = vsel %vm343, %v1051, 0
        %1706 = vmatpush.msra.mxu0 0.0
        %1707 = vmatpush.msra.mxu0 0.0
        %1708 = vmatpush.msra.mxu0 0.0
        %1709 = vmatpush.msra.mxu0 0.0
        %1710 = vmatpush.msra.mxu0 0.0
        %1711 = vmatpush.msra.mxu0 0.0
        %1712 = vmatpush.msra.mxu0 0.0
        %1713 = vmatpush.msra.mxu0 0.0
        %1714 = vmatpush.msra.mxu0 0.0
        %1715 = vmatpush.msra.mxu0 0.0
        %1716 = vmatpush.msra.mxu0 0.0
        %1717 = vmatpush.msra.mxu0 %v1704
        %1718 = vmatpush.msra.mxu0 %v1050
        %1719 = vmatpush.msra.mxu0 %v1049
        %1720 = vmatpush.msra.mxu0 %v1048
        %1721 = vmatpush.msra.mxu0 %v1047
        %1722 = vmatmul.f32.gmra.mxu0 %v1680
        %v1723 = vpop.f32.mrf.mxu0
        %v1724 = vadd.f32 %v1656, %v1723
        %1725 = vmatmul.f32.gmra.mxu0 %v1683
        %v1726 = vpop.f32.mrf.mxu0
        %v1727 = vadd.f32 %v1659, %v1726
        %1728 = vmatmul.f32.gmra.mxu0 %v1686
        %v1729 = vpop.f32.mrf.mxu0
        %v1730 = vadd.f32 %v1662, %v1729
        %1731 = vmatmul.f32.gmra.mxu0 %v1689
        %v1732 = vpop.f32.mrf.mxu0
        %v1733 = vadd.f32 %v1665, %v1732
        %1734 = vmatmul.f32.gmra.mxu0 %v1692
        %v1735 = vpop.f32.mrf.mxu0
        %v1736 = vadd.f32 %v1668, %v1735
        %1737 = vmatmul.f32.gmra.mxu0 %v1695
        %v1738 = vpop.f32.mrf.mxu0
        %v1739 = vadd.f32 %v1671, %v1738
        %1740 = vmatmul.f32.gmra.mxu0 %v1698
        %v1741 = vpop.f32.mrf.mxu0
        %v1742 = vadd.f32 %v1674, %v1741
        %1743 = vmatmul.f32.gmra.mxu0 %v1701
        %v1744 = vpop.f32.mrf.mxu0
        %v1745 = vadd.f32 %v1677, %v1744
        %1746 = vdwg.mxu0
        %vm1747 = vcmask 884288
        %v1748 = vsel %vm1747, %v574, -inf
        %1749 = vmax.xlane.f32.xlu0 %v1748
        %v1750 = vpop.xlane.xlu0 %1749
        %v1751 = vsel %vm1747, %v576, -inf
        %1752 = vmax.xlane.f32.xlu0 %v1751
        %v1753 = vpop.xlane.xlu0 %1752
        %v1754 = vsel %vm1747, %v578, -inf
        %1755 = vmax.xlane.f32.xlu0 %v1754
        %v1756 = vpop.xlane.xlu0 %1755
        %v1757 = vsel %vm1747, %v580, -inf
        %1758 = vmax.xlane.f32.xlu0 %v1757
        %v1759 = vpop.xlane.xlu0 %1758
        %v1760 = vsel %vm1747, %v582, -inf
        %1761 = vmax.xlane.f32.xlu0 %v1760
        %v1762 = vpop.xlane.xlu0 %1761
        %v1763 = vsel %vm1747, %v584, -inf
        %1764 = vmax.xlane.f32.xlu0 %v1763
        %v1765 = vpop.xlane.xlu0 %1764
        %v1766 = vsel %vm1747, %v586, -inf
        %1767 = vmax.xlane.f32.xlu0 %v1766
        %v1768 = vpop.xlane.xlu0 %1767
        %v1769 = vsel %vm1747, %v588, -inf
        %1770 = vmax.xlane.f32.xlu0 %v1769
        %v1771 = vpop.xlane.xlu0 %1770
        %v1772 = vsel %vm1747, %v590, -inf
        %1773 = vmax.xlane.f32.xlu0 %v1772
        %v1774 = vpop.xlane.xlu0 %1773
        %v1775 = vsel %vm1747, %v592, -inf
        %1776 = vmax.xlane.f32.xlu0 %v1775
        %v1777 = vpop.xlane.xlu0 %1776
        %v1778 = vsel %vm1747, %v594, -inf
        %1779 = vmax.xlane.f32.xlu0 %v1778
        %v1780 = vpop.xlane.xlu0 %1779
        %v1781 = vsel %vm1747, %v596, -inf
        %1782 = vmax.xlane.f32.xlu0 %v1781
        %v1783 = vpop.xlane.xlu0 %1782
        %v1784 = vsel %vm1747, %v598, -inf
        %1785 = vmax.xlane.f32.xlu0 %v1784
        %v1786 = vpop.xlane.xlu0 %1785
        %v1787 = vsel %vm1747, %v600, -inf
        %1788 = vmax.xlane.f32.xlu0 %v1787
        %v1789 = vpop.xlane.xlu0 %1788
        %v1790 = vsel %vm1747, %v602, -inf
        %1791 = vmax.xlane.f32.xlu0 %v1790
        %v1792 = vpop.xlane.xlu0 %1791
        %v1793 = vsel %vm1747, %v604, -inf
        %1794 = vmax.xlane.f32.xlu0 %v1793
        %v1795 = vpop.xlane.xlu0 %1794
        %v1796 = vsel %vm1747, %v606, -inf
        %1797 = vmax.xlane.f32.xlu0 %v1796
        %v1798 = vpop.xlane.xlu0 %1797
        %v1799 = vsel %vm1747, %v608, -inf
        %1800 = vmax.xlane.f32.xlu0 %v1799
        %v1801 = vpop.xlane.xlu0 %1800
        %v1802 = vsel %vm1747, %v610, -inf
        %1803 = vmax.xlane.f32.xlu0 %v1802
        %v1804 = vpop.xlane.xlu0 %1803
        %v1805 = vsel %vm1747, %v612, -inf
        %1806 = vmax.xlane.f32.xlu0 %v1805
        %v1807 = vpop.xlane.xlu0 %1806
        %v1808 = vsel %vm1747, %v614, -inf
        %1809 = vmax.xlane.f32.xlu0 %v1808
        %v1810 = vpop.xlane.xlu0 %1809
        %v1811 = vsel %vm1747, %v616, -inf
        %1812 = vmax.xlane.f32.xlu0 %v1811
        %v1813 = vpop.xlane.xlu0 %1812
        %v1814 = vsel %vm1747, %v618, -inf
        %1815 = vmax.xlane.f32.xlu0 %v1814
        %v1816 = vpop.xlane.xlu0 %1815
        %v1817 = vsel %vm1747, %v620, -inf
        %1818 = vmax.xlane.f32.xlu0 %v1817
        %v1819 = vpop.xlane.xlu0 %1818
        %v1820 = vsel %vm1747, %v622, -inf
        %1821 = vmax.xlane.f32.xlu0 %v1820
        %v1822 = vpop.xlane.xlu0 %1821
        %v1823 = vsel %vm1747, %v624, -inf
        %1824 = vmax.xlane.f32.xlu0 %v1823
        %v1825 = vpop.xlane.xlu0 %1824
        %v1826 = vsel %vm1747, %v626, -inf
        %1827 = vmax.xlane.f32.xlu0 %v1826
        %v1828 = vpop.xlane.xlu0 %1827
        %v1829 = vsel %vm1747, %v628, -inf
        %1830 = vmax.xlane.f32.xlu0 %v1829
        %v1831 = vpop.xlane.xlu0 %1830
        %v1832 = vsel %vm1747, %v630, -inf
        %1833 = vmax.xlane.f32.xlu0 %v1832
        %v1834 = vpop.xlane.xlu0 %1833
        %v1835 = vsel %vm1747, %v632, -inf
        %1836 = vmax.xlane.f32.xlu0 %v1835
        %v1837 = vpop.xlane.xlu0 %1836
        %v1838 = vsel %vm1747, %v634, -inf
        %1839 = vmax.xlane.f32.xlu0 %v1838
        %v1840 = vpop.xlane.xlu0 %1839
        %v1841 = vsel %vm1747, %v636, -inf
        %1842 = vmax.xlane.f32.xlu0 %v1841
        %v1843 = vpop.xlane.xlu0 %1842
        %v1844 = vsub.f32 %v574, %v1750
        %v1845 = vsub.f32 %v576, %v1753
        %v1846 = vsub.f32 %v578, %v1756
        %v1847 = vsub.f32 %v580, %v1759
        %v1848 = vsub.f32 %v582, %v1762
        %v1849 = vsub.f32 %v584, %v1765
        %v1850 = vsub.f32 %v586, %v1768
        %v1851 = vsub.f32 %v588, %v1771
        %v1852 = vsub.f32 %v590, %v1774
        %v1853 = vsub.f32 %v592, %v1777
        %v1854 = vsub.f32 %v594, %v1780
        %v1855 = vsub.f32 %v596, %v1783
        %v1856 = vsub.f32 %v598, %v1786
        %v1857 = vsub.f32 %v600, %v1789
        %v1858 = vsub.f32 %v602, %v1792
        %v1859 = vsub.f32 %v604, %v1795
        %v1860 = vsub.f32 %v606, %v1798
        %v1861 = vsub.f32 %v608, %v1801
        %v1862 = vsub.f32 %v610, %v1804
        %v1863 = vsub.f32 %v612, %v1807
        %v1864 = vsub.f32 %v614, %v1810
        %v1865 = vsub.f32 %v616, %v1813
        %v1866 = vsub.f32 %v618, %v1816
        %v1867 = vsub.f32 %v620, %v1819
        %v1868 = vsub.f32 %v622, %v1822
        %v1869 = vsub.f32 %v624, %v1825
        %v1870 = vsub.f32 %v626, %v1828
        %v1871 = vsub.f32 %v628, %v1831
        %v1872 = vsub.f32 %v630, %v1834
        %v1873 = vsub.f32 %v632, %v1837
        %v1874 = vsub.f32 %v634, %v1840
        %v1875 = vsub.f32 %v636, %v1843
        %v1876 = vmul.f32 %v1844, 1.442695
        %v1877 = vpow.pop %v1876
        %v1878 = vmul.f32 %v1845, 1.442695
        %v1879 = vpow.pop %v1878
        %v1880 = vmul.f32 %v1846, 1.442695
        %v1881 = vpow.pop %v1880
        %v1882 = vmul.f32 %v1847, 1.442695
        %v1883 = vpow.pop %v1882
        %v1884 = vmul.f32 %v1848, 1.442695
        %v1885 = vpow.pop %v1884
        %v1886 = vmul.f32 %v1849, 1.442695
        %v1887 = vpow.pop %v1886
        %v1888 = vmul.f32 %v1850, 1.442695
        %v1889 = vpow.pop %v1888
        %v1890 = vmul.f32 %v1851, 1.442695
        %v1891 = vpow.pop %v1890
        %v1892 = vmul.f32 %v1852, 1.442695
        %v1893 = vpow.pop %v1892
        %v1894 = vmul.f32 %v1853, 1.442695
        %v1895 = vpow.pop %v1894
        %v1896 = vmul.f32 %v1854, 1.442695
        %v1897 = vpow.pop %v1896
        %v1898 = vmul.f32 %v1855, 1.442695
        %v1899 = vpow.pop %v1898
        %v1900 = vmul.f32 %v1856, 1.442695
        %v1901 = vpow.pop %v1900
        %v1902 = vmul.f32 %v1857, 1.442695
        %v1903 = vpow.pop %v1902
        %v1904 = vmul.f32 %v1858, 1.442695
        %v1905 = vpow.pop %v1904
        %v1906 = vmul.f32 %v1859, 1.442695
        %v1907 = vpow.pop %v1906
        %v1908 = vmul.f32 %v1860, 1.442695
        %v1909 = vpow.pop %v1908
        %v1910 = vmul.f32 %v1861, 1.442695
        %v1911 = vpow.pop %v1910
        %v1912 = vmul.f32 %v1862, 1.442695
        %v1913 = vpow.pop %v1912
        %v1914 = vmul.f32 %v1863, 1.442695
        %v1915 = vpow.pop %v1914
        %v1916 = vmul.f32 %v1864, 1.442695
        %v1917 = vpow.pop %v1916
        %v1918 = vmul.f32 %v1865, 1.442695
        %v1919 = vpow.pop %v1918
        %v1920 = vmul.f32 %v1866, 1.442695
        %v1921 = vpow.pop %v1920
        %v1922 = vmul.f32 %v1867, 1.442695
        %v1923 = vpow.pop %v1922
        %v1924 = vmul.f32 %v1868, 1.442695
        %v1925 = vpow.pop %v1924
        %v1926 = vmul.f32 %v1869, 1.442695
        %v1927 = vpow.pop %v1926
        %v1928 = vmul.f32 %v1870, 1.442695
        %v1929 = vpow.pop %v1928
        %v1930 = vmul.f32 %v1871, 1.442695
        %v1931 = vpow.pop %v1930
        %v1932 = vmul.f32 %v1872, 1.442695
        %v1933 = vpow.pop %v1932
        %v1934 = vmul.f32 %v1873, 1.442695
        %v1935 = vpow.pop %v1934
        %v1936 = vmul.f32 %v1874, 1.442695
        %v1937 = vpow.pop %v1936
        %v1938 = vmul.f32 %v1875, 1.442695
        %v1939 = vpow.pop %v1938
        %1972 = vrot.lane.b32.xlu0 %v1877, 56
        %v1973 = vpop.permute.xlu0 %1972
        %1974 = vrot.lane.b32.xlu0 %v1879, 56
        %v1975 = vpop.permute.xlu0 %1974
        %1976 = vrot.lane.b32.xlu0 %v1881, 56
        %v1977 = vpop.permute.xlu0 %1976
        %1978 = vrot.lane.b32.xlu0 %v1883, 56
        %v1979 = vpop.permute.xlu0 %1978
        %1980 = vrot.lane.b32.xlu0 %v1885, 56
        %v1981 = vpop.permute.xlu0 %1980
        %1982 = vrot.lane.b32.xlu0 %v1887, 56
        %v1983 = vpop.permute.xlu0 %1982
        %1984 = vrot.lane.b32.xlu0 %v1889, 56
        %v1985 = vpop.permute.xlu0 %1984
        %1986 = vrot.lane.b32.xlu0 %v1891, 56
        %v1987 = vpop.permute.xlu0 %1986
        %1988 = vrot.lane.b32.xlu0 %v1893, 56
        %v1989 = vpop.permute.xlu0 %1988
        %1990 = vrot.lane.b32.xlu0 %v1895, 56
        %v1991 = vpop.permute.xlu0 %1990
        %1992 = vrot.lane.b32.xlu0 %v1897, 56
        %v1993 = vpop.permute.xlu0 %1992
        %1994 = vrot.lane.b32.xlu0 %v1899, 56
        %v1995 = vpop.permute.xlu0 %1994
        %1996 = vrot.lane.b32.xlu0 %v1901, 56
        %v1997 = vpop.permute.xlu0 %1996
        %1998 = vrot.lane.b32.xlu0 %v1903, 56
        %v1999 = vpop.permute.xlu0 %1998
        %2000 = vrot.lane.b32.xlu0 %v1905, 56
        %v2001 = vpop.permute.xlu0 %2000
        %2002 = vrot.lane.b32.xlu0 %v1907, 56
        %v2003 = vpop.permute.xlu0 %2002
        %2004 = vrot.lane.b32.xlu0 %v1909, 56
        %v2005 = vpop.permute.xlu0 %2004
        %2006 = vrot.lane.b32.xlu0 %v1911, 56
        %v2007 = vpop.permute.xlu0 %2006
        %2008 = vrot.lane.b32.xlu0 %v1913, 56
        %v2009 = vpop.permute.xlu0 %2008
        %2010 = vrot.lane.b32.xlu0 %v1915, 56
        %v2011 = vpop.permute.xlu0 %2010
        %2012 = vrot.lane.b32.xlu0 %v1917, 56
        %v2013 = vpop.permute.xlu0 %2012
        %2014 = vrot.lane.b32.xlu0 %v1919, 56
        %v2015 = vpop.permute.xlu0 %2014
        %2016 = vrot.lane.b32.xlu0 %v1921, 56
        %v2017 = vpop.permute.xlu0 %2016
        %2018 = vrot.lane.b32.xlu0 %v1923, 56
        %v2019 = vpop.permute.xlu0 %2018
        %2020 = vrot.lane.b32.xlu0 %v1925, 56
        %v2021 = vpop.permute.xlu0 %2020
        %2022 = vrot.lane.b32.xlu0 %v1927, 56
        %v2023 = vpop.permute.xlu0 %2022
        %2024 = vrot.lane.b32.xlu0 %v1929, 56
        %v2025 = vpop.permute.xlu0 %2024
        %2026 = vrot.lane.b32.xlu0 %v1931, 56
        %v2027 = vpop.permute.xlu0 %2026
        %2028 = vrot.lane.b32.xlu0 %v1933, 56
        %v2029 = vpop.permute.xlu0 %2028
        %2030 = vrot.lane.b32.xlu0 %v1935, 56
        %v2031 = vpop.permute.xlu0 %2030
        %2032 = vrot.lane.b32.xlu0 %v1937, 56
        %v2033 = vpop.permute.xlu0 %2032
        %2034 = vrot.lane.b32.xlu0 %v1939, 56
        %v2035 = vpop.permute.xlu0 %2034
        %v2068 = vsel %vm638, %v1973, 0.0
        %2069 = vadd.xlane.f32.xlu0 %v2068
        %v2070 = vpop.xlane.xlu0 %2069
        %v2071 = vsel %vm638, %v1975, 0.0
        %2072 = vadd.xlane.f32.xlu0 %v2071
        %v2073 = vpop.xlane.xlu0 %2072
        %v2074 = vsel %vm638, %v1977, 0.0
        %2075 = vadd.xlane.f32.xlu0 %v2074
        %v2076 = vpop.xlane.xlu0 %2075
        %v2077 = vsel %vm638, %v1979, 0.0
        %2078 = vadd.xlane.f32.xlu0 %v2077
        %v2079 = vpop.xlane.xlu0 %2078
        %v2080 = vsel %vm638, %v1981, 0.0
        %2081 = vadd.xlane.f32.xlu0 %v2080
        %v2082 = vpop.xlane.xlu0 %2081
        %v2083 = vsel %vm638, %v1983, 0.0
        %2084 = vadd.xlane.f32.xlu0 %v2083
        %v2085 = vpop.xlane.xlu0 %2084
        %v2086 = vsel %vm638, %v1985, 0.0
        %2087 = vadd.xlane.f32.xlu0 %v2086
        %v2088 = vpop.xlane.xlu0 %2087
        %v2089 = vsel %vm638, %v1987, 0.0
        %2090 = vadd.xlane.f32.xlu0 %v2089
        %v2091 = vpop.xlane.xlu0 %2090
        %v2092 = vsel %vm638, %v1989, 0.0
        %2093 = vadd.xlane.f32.xlu0 %v2092
        %v2094 = vpop.xlane.xlu0 %2093
        %v2095 = vsel %vm638, %v1991, 0.0
        %2096 = vadd.xlane.f32.xlu0 %v2095
        %v2097 = vpop.xlane.xlu0 %2096
        %v2098 = vsel %vm638, %v1993, 0.0
        %2099 = vadd.xlane.f32.xlu0 %v2098
        %v2100 = vpop.xlane.xlu0 %2099
        %v2101 = vsel %vm638, %v1995, 0.0
        %2102 = vadd.xlane.f32.xlu0 %v2101
        %v2103 = vpop.xlane.xlu0 %2102
        %v2104 = vsel %vm638, %v1997, 0.0
        %2105 = vadd.xlane.f32.xlu0 %v2104
        %v2106 = vpop.xlane.xlu0 %2105
        %v2107 = vsel %vm638, %v1999, 0.0
        %2108 = vadd.xlane.f32.xlu0 %v2107
        %v2109 = vpop.xlane.xlu0 %2108
        %v2110 = vsel %vm638, %v2001, 0.0
        %2111 = vadd.xlane.f32.xlu0 %v2110
        %v2112 = vpop.xlane.xlu0 %2111
        %v2113 = vsel %vm638, %v2003, 0.0
        %2114 = vadd.xlane.f32.xlu0 %v2113
        %v2115 = vpop.xlane.xlu0 %2114
        %v2116 = vsel %vm638, %v2005, 0.0
        %2117 = vadd.xlane.f32.xlu0 %v2116
        %v2118 = vpop.xlane.xlu0 %2117
        %v2119 = vsel %vm638, %v2007, 0.0
        %2120 = vadd.xlane.f32.xlu0 %v2119
        %v2121 = vpop.xlane.xlu0 %2120
        %v2122 = vsel %vm638, %v2009, 0.0
        %2123 = vadd.xlane.f32.xlu0 %v2122
        %v2124 = vpop.xlane.xlu0 %2123
        %v2125 = vsel %vm638, %v2011, 0.0
        %2126 = vadd.xlane.f32.xlu0 %v2125
        %v2127 = vpop.xlane.xlu0 %2126
        %v2128 = vsel %vm638, %v2013, 0.0
        %2129 = vadd.xlane.f32.xlu0 %v2128
        %v2130 = vpop.xlane.xlu0 %2129
        %v2131 = vsel %vm638, %v2015, 0.0
        %2132 = vadd.xlane.f32.xlu0 %v2131
        %v2133 = vpop.xlane.xlu0 %2132
        %v2134 = vsel %vm638, %v2017, 0.0
        %2135 = vadd.xlane.f32.xlu0 %v2134
        %v2136 = vpop.xlane.xlu0 %2135
        %v2137 = vsel %vm638, %v2019, 0.0
        %2138 = vadd.xlane.f32.xlu0 %v2137
        %v2139 = vpop.xlane.xlu0 %2138
        %v2140 = vsel %vm638, %v2021, 0.0
        %2141 = vadd.xlane.f32.xlu0 %v2140
        %v2142 = vpop.xlane.xlu0 %2141
        %v2143 = vsel %vm638, %v2023, 0.0
        %2144 = vadd.xlane.f32.xlu0 %v2143
        %v2145 = vpop.xlane.xlu0 %2144
        %v2146 = vsel %vm638, %v2025, 0.0
        %2147 = vadd.xlane.f32.xlu0 %v2146
        %v2148 = vpop.xlane.xlu0 %2147
        %v2149 = vsel %vm638, %v2027, 0.0
        %2150 = vadd.xlane.f32.xlu0 %v2149
        %v2151 = vpop.xlane.xlu0 %2150
        %v2152 = vsel %vm638, %v2029, 0.0
        %2153 = vadd.xlane.f32.xlu0 %v2152
        %v2154 = vpop.xlane.xlu0 %2153
        %v2155 = vsel %vm638, %v2031, 0.0
        %2156 = vadd.xlane.f32.xlu0 %v2155
        %v2157 = vpop.xlane.xlu0 %2156
        %v2158 = vsel %vm638, %v2033, 0.0
        %2159 = vadd.xlane.f32.xlu0 %v2158
        %v2160 = vpop.xlane.xlu0 %2159
        %v2161 = vsel %vm638, %v2035, 0.0
        %2162 = vadd.xlane.f32.xlu0 %v2161
        %v2163 = vpop.xlane.xlu0 %2162
        %v2164 = vrcp.pop %v2070
        %v2165 = vrcp.pop %v2073
        %v2166 = vrcp.pop %v2076
        %v2167 = vrcp.pop %v2079
        %v2168 = vrcp.pop %v2082
        %v2169 = vrcp.pop %v2085
        %v2170 = vrcp.pop %v2088
        %v2171 = vrcp.pop %v2091
        %v2172 = vrcp.pop %v2094
        %v2173 = vrcp.pop %v2097
        %v2174 = vrcp.pop %v2100
        %v2175 = vrcp.pop %v2103
        %v2176 = vrcp.pop %v2106
        %v2177 = vrcp.pop %v2109
        %v2178 = vrcp.pop %v2112
        %v2179 = vrcp.pop %v2115
        %v2180 = vrcp.pop %v2118
        %v2181 = vrcp.pop %v2121
        %v2182 = vrcp.pop %v2124
        %v2183 = vrcp.pop %v2127
        %v2184 = vrcp.pop %v2130
        %v2185 = vrcp.pop %v2133
        %v2186 = vrcp.pop %v2136
        %v2187 = vrcp.pop %v2139
        %v2188 = vrcp.pop %v2142
        %v2189 = vrcp.pop %v2145
        %v2190 = vrcp.pop %v2148
        %v2191 = vrcp.pop %v2151
        %v2192 = vrcp.pop %v2154
        %v2193 = vrcp.pop %v2157
        %v2194 = vrcp.pop %v2160
        %v2195 = vrcp.pop %v2163
        %v2196 = vmul.f32 %v1877, %v2164
        %v2197 = vmul.f32 %v1879, %v2165
        %v2198 = vmul.f32 %v1881, %v2166
        %v2199 = vmul.f32 %v1883, %v2167
        %v2200 = vmul.f32 %v1885, %v2168
        %v2201 = vmul.f32 %v1887, %v2169
        %v2202 = vmul.f32 %v1889, %v2170
        %v2203 = vmul.f32 %v1891, %v2171
        %v2204 = vmul.f32 %v1893, %v2172
        %v2205 = vmul.f32 %v1895, %v2173
        %v2206 = vmul.f32 %v1897, %v2174
        %v2207 = vmul.f32 %v1899, %v2175
        %v2208 = vmul.f32 %v1901, %v2176
        %v2209 = vmul.f32 %v1903, %v2177
        %v2210 = vmul.f32 %v1905, %v2178
        %v2211 = vmul.f32 %v1907, %v2179
        %v2212 = vmul.f32 %v1909, %v2180
        %v2213 = vmul.f32 %v1911, %v2181
        %v2214 = vmul.f32 %v1913, %v2182
        %v2215 = vmul.f32 %v1915, %v2183
        %v2216 = vmul.f32 %v1917, %v2184
        %v2217 = vmul.f32 %v1919, %v2185
        %v2218 = vmul.f32 %v1921, %v2186
        %v2219 = vmul.f32 %v1923, %v2187
        %v2220 = vmul.f32 %v1925, %v2188
        %v2221 = vmul.f32 %v1927, %v2189
        %v2222 = vmul.f32 %v1929, %v2190
        %v2223 = vmul.f32 %v1931, %v2191
        %v2224 = vmul.f32 %v1933, %v2192
        %v2225 = vmul.f32 %v1935, %v2193
        %v2226 = vmul.f32 %v1937, %v2194
        %v2227 = vmul.f32 %v1939, %v2195
        %v2228 = vsel %vm1747, %v2196, 0.0
        %v2229 = vsel %vm1747, %v2204, 0.0
        %v2230 = vadd.f32 %v2228, %v2229
        %v2231 = vsel %vm1747, %v2212, 0.0
        %v2232 = vadd.f32 %v2230, %v2231
        %v2233 = vsel %vm1747, %v2220, 0.0
        %v2234 = vadd.f32 %v2232, %v2233
        %v2235 = vsel %vm1747, %v2197, 0.0
        %v2236 = vsel %vm1747, %v2205, 0.0
        %v2237 = vadd.f32 %v2235, %v2236
        %v2238 = vsel %vm1747, %v2213, 0.0
        %v2239 = vadd.f32 %v2237, %v2238
        %v2240 = vsel %vm1747, %v2221, 0.0
        %v2241 = vadd.f32 %v2239, %v2240
        %v2242 = vsel %vm1747, %v2198, 0.0
        %v2243 = vsel %vm1747, %v2206, 0.0
        %v2244 = vadd.f32 %v2242, %v2243
        %v2245 = vsel %vm1747, %v2214, 0.0
        %v2246 = vadd.f32 %v2244, %v2245
        %v2247 = vsel %vm1747, %v2222, 0.0
        %v2248 = vadd.f32 %v2246, %v2247
        %v2249 = vsel %vm1747, %v2199, 0.0
        %v2250 = vsel %vm1747, %v2207, 0.0
        %v2251 = vadd.f32 %v2249, %v2250
        %v2252 = vsel %vm1747, %v2215, 0.0
        %v2253 = vadd.f32 %v2251, %v2252
        %v2254 = vsel %vm1747, %v2223, 0.0
        %v2255 = vadd.f32 %v2253, %v2254
        %v2256 = vsel %vm1747, %v2200, 0.0
        %v2257 = vsel %vm1747, %v2208, 0.0
        %v2258 = vadd.f32 %v2256, %v2257
        %v2259 = vsel %vm1747, %v2216, 0.0
        %v2260 = vadd.f32 %v2258, %v2259
        %v2261 = vsel %vm1747, %v2224, 0.0
        %v2262 = vadd.f32 %v2260, %v2261
        %v2263 = vsel %vm1747, %v2201, 0.0
        %v2264 = vsel %vm1747, %v2209, 0.0
        %v2265 = vadd.f32 %v2263, %v2264
        %v2266 = vsel %vm1747, %v2217, 0.0
        %v2267 = vadd.f32 %v2265, %v2266
        %v2268 = vsel %vm1747, %v2225, 0.0
        %v2269 = vadd.f32 %v2267, %v2268
        %v2270 = vsel %vm1747, %v2202, 0.0
        %v2271 = vsel %vm1747, %v2210, 0.0
        %v2272 = vadd.f32 %v2270, %v2271
        %v2273 = vsel %vm1747, %v2218, 0.0
        %v2274 = vadd.f32 %v2272, %v2273
        %v2275 = vsel %vm1747, %v2226, 0.0
        %v2276 = vadd.f32 %v2274, %v2275
        %v2277 = vsel %vm1747, %v2203, 0.0
        %v2278 = vsel %vm1747, %v2211, 0.0
        %v2279 = vadd.f32 %v2277, %v2278
        %v2280 = vsel %vm1747, %v2219, 0.0
        %v2281 = vadd.f32 %v2279, %v2280
        %v2282 = vsel %vm1747, %v2227, 0.0
        %v2283 = vadd.f32 %v2281, %v2282
        %s2284 = scalar_lea.vmem %s208, 80
        %v2285 = vld [vmem:[%s2284] sm:$0xff]
        %v2286 = vld [vmem:[%s2284 + $0x8] sm:$0xff]
        %v2287 = vld [vmem:[%s2284 + $0x10] sm:$0xff]
        %v2288 = vld [vmem:[%s2284 + $0x18] sm:$0xff]
        %v2289 = vld [vmem:[%s2284 + $0x20] sm:$0xf]
        %2298 = vrot.lane.b32.xlu0 %v2234, 56
        %v2299 = vpop.permute.xlu0 %2298
        %2300 = vrot.lane.b32.xlu0 %v2241, 56
        %v2301 = vpop.permute.xlu0 %2300
        %2302 = vrot.lane.b32.xlu0 %v2248, 56
        %v2303 = vpop.permute.xlu0 %2302
        %2304 = vrot.lane.b32.xlu0 %v2255, 56
        %v2305 = vpop.permute.xlu0 %2304
        %2306 = vrot.lane.b32.xlu0 %v2262, 56
        %v2307 = vpop.permute.xlu0 %2306
        %2308 = vrot.lane.b32.xlu0 %v2269, 56
        %v2309 = vpop.permute.xlu0 %2308
        %2310 = vrot.lane.b32.xlu0 %v2276, 56
        %v2311 = vpop.permute.xlu0 %2310
        %2312 = vrot.lane.b32.xlu0 %v2283, 56
        %v2313 = vpop.permute.xlu0 %2312
        %v2314 = vsel %vm638, %v2299, 0
        %v2316 = vsel %vm638, %v2301, 0
        %v2318 = vsel %vm638, %v2303, 0
        %v2320 = vsel %vm638, %v2305, 0
        %v2322 = vsel %vm638, %v2307, 0
        %v2324 = vsel %vm638, %v2309, 0
        %v2326 = vsel %vm638, %v2311, 0
        %v2328 = vsel %vm638, %v2313, 0
        %v2331 = vsel %vm343, %v2289, 0
        %2333 = vmatpush.msra.mxu0 0.0
        %2334 = vmatpush.msra.mxu0 0.0
        %2335 = vmatpush.msra.mxu0 0.0
        %2336 = vmatpush.msra.mxu0 0.0
        %2337 = vmatpush.msra.mxu0 0.0
        %2338 = vmatpush.msra.mxu0 0.0
        %2339 = vmatpush.msra.mxu0 0.0
        %2340 = vmatpush.msra.mxu0 0.0
        %2341 = vmatpush.msra.mxu0 0.0
        %2342 = vmatpush.msra.mxu0 0.0
        %2343 = vmatpush.msra.mxu0 0.0
        %2344 = vmatpush.msra.mxu0 %v2331
        %2345 = vmatpush.msra.mxu0 %v2288
        %2346 = vmatpush.msra.mxu0 %v2287
        %2347 = vmatpush.msra.mxu0 %v2286
        %2348 = vmatpush.msra.mxu0 %v2285
        %2349 = vmatmul.f32.gmra.mxu0 %v2314
        %v2350 = vpop.f32.mrf.mxu0
        %v2351 = vadd.f32 0.0, %v2350
        %2352 = vmatmul.f32.gmra.mxu0 %v2316
        %v2353 = vpop.f32.mrf.mxu0
        %v2354 = vadd.f32 0.0, %v2353
        %2355 = vmatmul.f32.gmra.mxu0 %v2318
        %v2356 = vpop.f32.mrf.mxu0
        %v2357 = vadd.f32 0.0, %v2356
        %2358 = vmatmul.f32.gmra.mxu0 %v2320
        %v2359 = vpop.f32.mrf.mxu0
        %v2360 = vadd.f32 0.0, %v2359
        %2361 = vmatmul.f32.gmra.mxu0 %v2322
        %v2362 = vpop.f32.mrf.mxu0
        %v2363 = vadd.f32 0.0, %v2362
        %2364 = vmatmul.f32.gmra.mxu0 %v2324
        %v2365 = vpop.f32.mrf.mxu0
        %v2366 = vadd.f32 0.0, %v2365
        %2367 = vmatmul.f32.gmra.mxu0 %v2326
        %v2368 = vpop.f32.mrf.mxu0
        %v2369 = vadd.f32 0.0, %v2368
        %2370 = vmatmul.f32.gmra.mxu0 %v2328
        %v2371 = vpop.f32.mrf.mxu0
        %v2372 = vadd.f32 0.0, %v2371
        %2373 = vdwg.mxu0
        %v2374 = vadd.f32 %v1724, %v2351
        %v2375 = vadd.f32 %v1727, %v2354
        %v2376 = vadd.f32 %v1730, %v2357
        %v2377 = vadd.f32 %v1733, %v2360
        %v2378 = vadd.f32 %v1736, %v2363
        %v2379 = vadd.f32 %v1739, %v2366
        %v2380 = vadd.f32 %v1742, %v2369
        %v2381 = vadd.f32 %v1745, %v2372
        %vm2382 = vcmask 1048416
        %v2383 = vsel %vm2382, %v574, -inf
        %vm2384 = vcmask 130048
        %v2385 = vsel %vm2384, %v575, -inf
        %v2386 = vmax.f32 %v2383, %v2385
        %2387 = vmax.xlane.f32.xlu0 %v2386
        %v2388 = vpop.xlane.xlu0 %2387
        %v2389 = vsel %vm2382, %v576, -inf
        %v2390 = vsel %vm2384, %v577, -inf
        %v2391 = vmax.f32 %v2389, %v2390
        %2392 = vmax.xlane.f32.xlu0 %v2391
        %v2393 = vpop.xlane.xlu0 %2392
        %v2394 = vsel %vm2382, %v578, -inf
        %v2395 = vsel %vm2384, %v579, -inf
        %v2396 = vmax.f32 %v2394, %v2395
        %2397 = vmax.xlane.f32.xlu0 %v2396
        %v2398 = vpop.xlane.xlu0 %2397
        %v2399 = vsel %vm2382, %v580, -inf
        %v2400 = vsel %vm2384, %v581, -inf
        %v2401 = vmax.f32 %v2399, %v2400
        %2402 = vmax.xlane.f32.xlu0 %v2401
        %v2403 = vpop.xlane.xlu0 %2402
        %v2404 = vsel %vm2382, %v582, -inf
        %v2405 = vsel %vm2384, %v583, -inf
        %v2406 = vmax.f32 %v2404, %v2405
        %2407 = vmax.xlane.f32.xlu0 %v2406
        %v2408 = vpop.xlane.xlu0 %2407
        %v2409 = vsel %vm2382, %v584, -inf
        %v2410 = vsel %vm2384, %v585, -inf
        %v2411 = vmax.f32 %v2409, %v2410
        %2412 = vmax.xlane.f32.xlu0 %v2411
        %v2413 = vpop.xlane.xlu0 %2412
        %v2414 = vsel %vm2382, %v586, -inf
        %v2415 = vsel %vm2384, %v587, -inf
        %v2416 = vmax.f32 %v2414, %v2415
        %2417 = vmax.xlane.f32.xlu0 %v2416
        %v2418 = vpop.xlane.xlu0 %2417
        %v2419 = vsel %vm2382, %v588, -inf
        %v2420 = vsel %vm2384, %v589, -inf
        %v2421 = vmax.f32 %v2419, %v2420
        %2422 = vmax.xlane.f32.xlu0 %v2421
        %v2423 = vpop.xlane.xlu0 %2422
        %v2424 = vsel %vm2382, %v590, -inf
        %v2425 = vsel %vm2384, %v591, -inf
        %v2426 = vmax.f32 %v2424, %v2425
        %2427 = vmax.xlane.f32.xlu0 %v2426
        %v2428 = vpop.xlane.xlu0 %2427
        %v2429 = vsel %vm2382, %v592, -inf
        %v2430 = vsel %vm2384, %v593, -inf
        %v2431 = vmax.f32 %v2429, %v2430
        %2432 = vmax.xlane.f32.xlu0 %v2431
        %v2433 = vpop.xlane.xlu0 %2432
        %v2434 = vsel %vm2382, %v594, -inf
        %v2435 = vsel %vm2384, %v595, -inf
        %v2436 = vmax.f32 %v2434, %v2435
        %2437 = vmax.xlane.f32.xlu0 %v2436
        %v2438 = vpop.xlane.xlu0 %2437
        %v2439 = vsel %vm2382, %v596, -inf
        %v2440 = vsel %vm2384, %v597, -inf
        %v2441 = vmax.f32 %v2439, %v2440
        %2442 = vmax.xlane.f32.xlu0 %v2441
        %v2443 = vpop.xlane.xlu0 %2442
        %v2444 = vsel %vm2382, %v598, -inf
        %v2445 = vsel %vm2384, %v599, -inf
        %v2446 = vmax.f32 %v2444, %v2445
        %2447 = vmax.xlane.f32.xlu0 %v2446
        %v2448 = vpop.xlane.xlu0 %2447
        %v2449 = vsel %vm2382, %v600, -inf
        %v2450 = vsel %vm2384, %v601, -inf
        %v2451 = vmax.f32 %v2449, %v2450
        %2452 = vmax.xlane.f32.xlu0 %v2451
        %v2453 = vpop.xlane.xlu0 %2452
        %v2454 = vsel %vm2382, %v602, -inf
        %v2455 = vsel %vm2384, %v603, -inf
        %v2456 = vmax.f32 %v2454, %v2455
        %2457 = vmax.xlane.f32.xlu0 %v2456
        %v2458 = vpop.xlane.xlu0 %2457
        %v2459 = vsel %vm2382, %v604, -inf
        %v2460 = vsel %vm2384, %v605, -inf
        %v2461 = vmax.f32 %v2459, %v2460
        %2462 = vmax.xlane.f32.xlu0 %v2461
        %v2463 = vpop.xlane.xlu0 %2462
        %v2464 = vsel %vm2382, %v606, -inf
        %v2465 = vsel %vm2384, %v607, -inf
        %v2466 = vmax.f32 %v2464, %v2465
        %2467 = vmax.xlane.f32.xlu0 %v2466
        %v2468 = vpop.xlane.xlu0 %2467
        %v2469 = vsel %vm2382, %v608, -inf
        %v2470 = vsel %vm2384, %v609, -inf
        %v2471 = vmax.f32 %v2469, %v2470
        %2472 = vmax.xlane.f32.xlu0 %v2471
        %v2473 = vpop.xlane.xlu0 %2472
        %v2474 = vsel %vm2382, %v610, -inf
        %v2475 = vsel %vm2384, %v611, -inf
        %v2476 = vmax.f32 %v2474, %v2475
        %2477 = vmax.xlane.f32.xlu0 %v2476
        %v2478 = vpop.xlane.xlu0 %2477
        %v2479 = vsel %vm2382, %v612, -inf
        %v2480 = vsel %vm2384, %v613, -inf
        %v2481 = vmax.f32 %v2479, %v2480
        %2482 = vmax.xlane.f32.xlu0 %v2481
        %v2483 = vpop.xlane.xlu0 %2482
        %v2484 = vsel %vm2382, %v614, -inf
        %v2485 = vsel %vm2384, %v615, -inf
        %v2486 = vmax.f32 %v2484, %v2485
        %2487 = vmax.xlane.f32.xlu0 %v2486
        %v2488 = vpop.xlane.xlu0 %2487
        %v2489 = vsel %vm2382, %v616, -inf
        %v2490 = vsel %vm2384, %v617, -inf
        %v2491 = vmax.f32 %v2489, %v2490
        %2492 = vmax.xlane.f32.xlu0 %v2491
        %v2493 = vpop.xlane.xlu0 %2492
        %v2494 = vsel %vm2382, %v618, -inf
        %v2495 = vsel %vm2384, %v619, -inf
        %v2496 = vmax.f32 %v2494, %v2495
        %2497 = vmax.xlane.f32.xlu0 %v2496
        %v2498 = vpop.xlane.xlu0 %2497
        %v2499 = vsel %vm2382, %v620, -inf
        %v2500 = vsel %vm2384, %v621, -inf
        %v2501 = vmax.f32 %v2499, %v2500
        %2502 = vmax.xlane.f32.xlu0 %v2501
        %v2503 = vpop.xlane.xlu0 %2502
        %v2504 = vsel %vm2382, %v622, -inf
        %v2505 = vsel %vm2384, %v623, -inf
        %v2506 = vmax.f32 %v2504, %v2505
        %2507 = vmax.xlane.f32.xlu0 %v2506
        %v2508 = vpop.xlane.xlu0 %2507
        %v2509 = vsel %vm2382, %v624, -inf
        %v2510 = vsel %vm2384, %v625, -inf
        %v2511 = vmax.f32 %v2509, %v2510
        %2512 = vmax.xlane.f32.xlu0 %v2511
        %v2513 = vpop.xlane.xlu0 %2512
        %v2514 = vsel %vm2382, %v626, -inf
        %v2515 = vsel %vm2384, %v627, -inf
        %v2516 = vmax.f32 %v2514, %v2515
        %2517 = vmax.xlane.f32.xlu0 %v2516
        %v2518 = vpop.xlane.xlu0 %2517
        %v2519 = vsel %vm2382, %v628, -inf
        %v2520 = vsel %vm2384, %v629, -inf
        %v2521 = vmax.f32 %v2519, %v2520
        %2522 = vmax.xlane.f32.xlu0 %v2521
        %v2523 = vpop.xlane.xlu0 %2522
        %v2524 = vsel %vm2382, %v630, -inf
        %v2525 = vsel %vm2384, %v631, -inf
        %v2526 = vmax.f32 %v2524, %v2525
        %2527 = vmax.xlane.f32.xlu0 %v2526
        %v2528 = vpop.xlane.xlu0 %2527
        %v2529 = vsel %vm2382, %v632, -inf
        %v2530 = vsel %vm2384, %v633, -inf
        %v2531 = vmax.f32 %v2529, %v2530
        %2532 = vmax.xlane.f32.xlu0 %v2531
        %v2533 = vpop.xlane.xlu0 %2532
        %v2534 = vsel %vm2382, %v634, -inf
        %v2535 = vsel %vm2384, %v635, -inf
        %v2536 = vmax.f32 %v2534, %v2535
        %2537 = vmax.xlane.f32.xlu0 %v2536
        %v2538 = vpop.xlane.xlu0 %2537
        %v2539 = vsel %vm2382, %v636, -inf
        %v2540 = vsel %vm2384, %v637, -inf
        %v2541 = vmax.f32 %v2539, %v2540
        %2542 = vmax.xlane.f32.xlu0 %v2541
        %v2543 = vpop.xlane.xlu0 %2542
        %v2544 = vsub.f32 %v574, %v2388
        %v2545 = vsub.f32 %v575, %v2388
        %v2546 = vsub.f32 %v576, %v2393
        %v2547 = vsub.f32 %v577, %v2393
        %v2548 = vsub.f32 %v578, %v2398
        %v2549 = vsub.f32 %v579, %v2398
        %v2550 = vsub.f32 %v580, %v2403
        %v2551 = vsub.f32 %v581, %v2403
        %v2552 = vsub.f32 %v582, %v2408
        %v2553 = vsub.f32 %v583, %v2408
        %v2554 = vsub.f32 %v584, %v2413
        %v2555 = vsub.f32 %v585, %v2413
        %v2556 = vsub.f32 %v586, %v2418
        %v2557 = vsub.f32 %v587, %v2418
        %v2558 = vsub.f32 %v588, %v2423
        %v2559 = vsub.f32 %v589, %v2423
        %v2560 = vsub.f32 %v590, %v2428
        %v2561 = vsub.f32 %v591, %v2428
        %v2562 = vsub.f32 %v592, %v2433
        %v2563 = vsub.f32 %v593, %v2433
        %v2564 = vsub.f32 %v594, %v2438
        %v2565 = vsub.f32 %v595, %v2438
        %v2566 = vsub.f32 %v596, %v2443
        %v2567 = vsub.f32 %v597, %v2443
        %v2568 = vsub.f32 %v598, %v2448
        %v2569 = vsub.f32 %v599, %v2448
        %v2570 = vsub.f32 %v600, %v2453
        %v2571 = vsub.f32 %v601, %v2453
        %v2572 = vsub.f32 %v602, %v2458
        %v2573 = vsub.f32 %v603, %v2458
        %v2574 = vsub.f32 %v604, %v2463
        %v2575 = vsub.f32 %v605, %v2463
        %v2576 = vsub.f32 %v606, %v2468
        %v2577 = vsub.f32 %v607, %v2468
        %v2578 = vsub.f32 %v608, %v2473
        %v2579 = vsub.f32 %v609, %v2473
        %v2580 = vsub.f32 %v610, %v2478
        %v2581 = vsub.f32 %v611, %v2478
        %v2582 = vsub.f32 %v612, %v2483
        %v2583 = vsub.f32 %v613, %v2483
        %v2584 = vsub.f32 %v614, %v2488
        %v2585 = vsub.f32 %v615, %v2488
        %v2586 = vsub.f32 %v616, %v2493
        %v2587 = vsub.f32 %v617, %v2493
        %v2588 = vsub.f32 %v618, %v2498
        %v2589 = vsub.f32 %v619, %v2498
        %v2590 = vsub.f32 %v620, %v2503
        %v2591 = vsub.f32 %v621, %v2503
        %v2592 = vsub.f32 %v622, %v2508
        %v2593 = vsub.f32 %v623, %v2508
        %v2594 = vsub.f32 %v624, %v2513
        %v2595 = vsub.f32 %v625, %v2513
        %v2596 = vsub.f32 %v626, %v2518
        %v2597 = vsub.f32 %v627, %v2518
        %v2598 = vsub.f32 %v628, %v2523
        %v2599 = vsub.f32 %v629, %v2523
        %v2600 = vsub.f32 %v630, %v2528
        %v2601 = vsub.f32 %v631, %v2528
        %v2602 = vsub.f32 %v632, %v2533
        %v2603 = vsub.f32 %v633, %v2533
        %v2604 = vsub.f32 %v634, %v2538
        %v2605 = vsub.f32 %v635, %v2538
        %v2606 = vsub.f32 %v636, %v2543
        %v2607 = vsub.f32 %v637, %v2543
        %v2608 = vmul.f32 %v2544, 1.442695
        %v2609 = vpow.pop %v2608
        %v2610 = vmul.f32 %v2545, 1.442695
        %v2611 = vpow.pop %v2610
        %v2612 = vmul.f32 %v2546, 1.442695
        %v2613 = vpow.pop %v2612
        %v2614 = vmul.f32 %v2547, 1.442695
        %v2615 = vpow.pop %v2614
        %v2616 = vmul.f32 %v2548, 1.442695
        %v2617 = vpow.pop %v2616
        %v2618 = vmul.f32 %v2549, 1.442695
        %v2619 = vpow.pop %v2618
        %v2620 = vmul.f32 %v2550, 1.442695
        %v2621 = vpow.pop %v2620
        %v2622 = vmul.f32 %v2551, 1.442695
        %v2623 = vpow.pop %v2622
        %v2624 = vmul.f32 %v2552, 1.442695
        %v2625 = vpow.pop %v2624
        %v2626 = vmul.f32 %v2553, 1.442695
        %v2627 = vpow.pop %v2626
        %v2628 = vmul.f32 %v2554, 1.442695
        %v2629 = vpow.pop %v2628
        %v2630 = vmul.f32 %v2555, 1.442695
        %v2631 = vpow.pop %v2630
        %v2632 = vmul.f32 %v2556, 1.442695
        %v2633 = vpow.pop %v2632
        %v2634 = vmul.f32 %v2557, 1.442695
        %v2635 = vpow.pop %v2634
        %v2636 = vmul.f32 %v2558, 1.442695
        %v2637 = vpow.pop %v2636
        %v2638 = vmul.f32 %v2559, 1.442695
        %v2639 = vpow.pop %v2638
        %v2640 = vmul.f32 %v2560, 1.442695
        %v2641 = vpow.pop %v2640
        %v2642 = vmul.f32 %v2561, 1.442695
        %v2643 = vpow.pop %v2642
        %v2644 = vmul.f32 %v2562, 1.442695
        %v2645 = vpow.pop %v2644
        %v2646 = vmul.f32 %v2563, 1.442695
        %v2647 = vpow.pop %v2646
        %v2648 = vmul.f32 %v2564, 1.442695
        %v2649 = vpow.pop %v2648
        %v2650 = vmul.f32 %v2565, 1.442695
        %v2651 = vpow.pop %v2650
        %v2652 = vmul.f32 %v2566, 1.442695
        %v2653 = vpow.pop %v2652
        %v2654 = vmul.f32 %v2567, 1.442695
        %v2655 = vpow.pop %v2654
        %v2656 = vmul.f32 %v2568, 1.442695
        %v2657 = vpow.pop %v2656
        %v2658 = vmul.f32 %v2569, 1.442695
        %v2659 = vpow.pop %v2658
        %v2660 = vmul.f32 %v2570, 1.442695
        %v2661 = vpow.pop %v2660
        %v2662 = vmul.f32 %v2571, 1.442695
        %v2663 = vpow.pop %v2662
        %v2664 = vmul.f32 %v2572, 1.442695
        %v2665 = vpow.pop %v2664
        %v2666 = vmul.f32 %v2573, 1.442695
        %v2667 = vpow.pop %v2666
        %v2668 = vmul.f32 %v2574, 1.442695
        %v2669 = vpow.pop %v2668
        %v2670 = vmul.f32 %v2575, 1.442695
        %v2671 = vpow.pop %v2670
        %v2672 = vmul.f32 %v2576, 1.442695
        %v2673 = vpow.pop %v2672
        %v2674 = vmul.f32 %v2577, 1.442695
        %v2675 = vpow.pop %v2674
        %v2676 = vmul.f32 %v2578, 1.442695
        %v2677 = vpow.pop %v2676
        %v2678 = vmul.f32 %v2579, 1.442695
        %v2679 = vpow.pop %v2678
        %v2680 = vmul.f32 %v2580, 1.442695
        %v2681 = vpow.pop %v2680
        %v2682 = vmul.f32 %v2581, 1.442695
        %v2683 = vpow.pop %v2682
        %v2684 = vmul.f32 %v2582, 1.442695
        %v2685 = vpow.pop %v2684
        %v2686 = vmul.f32 %v2583, 1.442695
        %v2687 = vpow.pop %v2686
        %v2688 = vmul.f32 %v2584, 1.442695
        %v2689 = vpow.pop %v2688
        %v2690 = vmul.f32 %v2585, 1.442695
        %v2691 = vpow.pop %v2690
        %v2692 = vmul.f32 %v2586, 1.442695
        %v2693 = vpow.pop %v2692
        %v2694 = vmul.f32 %v2587, 1.442695
        %v2695 = vpow.pop %v2694
        %v2696 = vmul.f32 %v2588, 1.442695
        %v2697 = vpow.pop %v2696
        %v2698 = vmul.f32 %v2589, 1.442695
        %v2699 = vpow.pop %v2698
        %v2700 = vmul.f32 %v2590, 1.442695
        %v2701 = vpow.pop %v2700
        %v2702 = vmul.f32 %v2591, 1.442695
        %v2703 = vpow.pop %v2702
        %v2704 = vmul.f32 %v2592, 1.442695
        %v2705 = vpow.pop %v2704
        %v2706 = vmul.f32 %v2593, 1.442695
        %v2707 = vpow.pop %v2706
        %v2708 = vmul.f32 %v2594, 1.442695
        %v2709 = vpow.pop %v2708
        %v2710 = vmul.f32 %v2595, 1.442695
        %v2711 = vpow.pop %v2710
        %v2712 = vmul.f32 %v2596, 1.442695
        %v2713 = vpow.pop %v2712
        %v2714 = vmul.f32 %v2597, 1.442695
        %v2715 = vpow.pop %v2714
        %v2716 = vmul.f32 %v2598, 1.442695
        %v2717 = vpow.pop %v2716
        %v2718 = vmul.f32 %v2599, 1.442695
        %v2719 = vpow.pop %v2718
        %v2720 = vmul.f32 %v2600, 1.442695
        %v2721 = vpow.pop %v2720
        %v2722 = vmul.f32 %v2601, 1.442695
        %v2723 = vpow.pop %v2722
        %v2724 = vmul.f32 %v2602, 1.442695
        %v2725 = vpow.pop %v2724
        %v2726 = vmul.f32 %v2603, 1.442695
        %v2727 = vpow.pop %v2726
        %v2728 = vmul.f32 %v2604, 1.442695
        %v2729 = vpow.pop %v2728
        %v2730 = vmul.f32 %v2605, 1.442695
        %v2731 = vpow.pop %v2730
        %v2732 = vmul.f32 %v2606, 1.442695
        %v2733 = vpow.pop %v2732
        %v2734 = vmul.f32 %v2607, 1.442695
        %v2735 = vpow.pop %v2734
        %2800 = vrot.lane.b32.xlu0 %v2609, 20
        %v2801 = vpop.permute.xlu0 %2800
        %2802 = vrot.lane.b32.xlu0 %v2611, 20
        %v2803 = vpop.permute.xlu0 %2802
        %2804 = vrot.lane.b32.xlu0 %v2613, 20
        %v2805 = vpop.permute.xlu0 %2804
        %2806 = vrot.lane.b32.xlu0 %v2615, 20
        %v2807 = vpop.permute.xlu0 %2806
        %2808 = vrot.lane.b32.xlu0 %v2617, 20
        %v2809 = vpop.permute.xlu0 %2808
        %2810 = vrot.lane.b32.xlu0 %v2619, 20
        %v2811 = vpop.permute.xlu0 %2810
        %2812 = vrot.lane.b32.xlu0 %v2621, 20
        %v2813 = vpop.permute.xlu0 %2812
        %2814 = vrot.lane.b32.xlu0 %v2623, 20
        %v2815 = vpop.permute.xlu0 %2814
        %2816 = vrot.lane.b32.xlu0 %v2625, 20
        %v2817 = vpop.permute.xlu0 %2816
        %2818 = vrot.lane.b32.xlu0 %v2627, 20
        %v2819 = vpop.permute.xlu0 %2818
        %2820 = vrot.lane.b32.xlu0 %v2629, 20
        %v2821 = vpop.permute.xlu0 %2820
        %2822 = vrot.lane.b32.xlu0 %v2631, 20
        %v2823 = vpop.permute.xlu0 %2822
        %2824 = vrot.lane.b32.xlu0 %v2633, 20
        %v2825 = vpop.permute.xlu0 %2824
        %2826 = vrot.lane.b32.xlu0 %v2635, 20
        %v2827 = vpop.permute.xlu0 %2826
        %2828 = vrot.lane.b32.xlu0 %v2637, 20
        %v2829 = vpop.permute.xlu0 %2828
        %2830 = vrot.lane.b32.xlu0 %v2639, 20
        %v2831 = vpop.permute.xlu0 %2830
        %2832 = vrot.lane.b32.xlu0 %v2641, 20
        %v2833 = vpop.permute.xlu0 %2832
        %2834 = vrot.lane.b32.xlu0 %v2643, 20
        %v2835 = vpop.permute.xlu0 %2834
        %2836 = vrot.lane.b32.xlu0 %v2645, 20
        %v2837 = vpop.permute.xlu0 %2836
        %2838 = vrot.lane.b32.xlu0 %v2647, 20
        %v2839 = vpop.permute.xlu0 %2838
        %2840 = vrot.lane.b32.xlu0 %v2649, 20
        %v2841 = vpop.permute.xlu0 %2840
        %2842 = vrot.lane.b32.xlu0 %v2651, 20
        %v2843 = vpop.permute.xlu0 %2842
        %2844 = vrot.lane.b32.xlu0 %v2653, 20
        %v2845 = vpop.permute.xlu0 %2844
        %2846 = vrot.lane.b32.xlu0 %v2655, 20
        %v2847 = vpop.permute.xlu0 %2846
        %2848 = vrot.lane.b32.xlu0 %v2657, 20
        %v2849 = vpop.permute.xlu0 %2848
        %2850 = vrot.lane.b32.xlu0 %v2659, 20
        %v2851 = vpop.permute.xlu0 %2850
        %2852 = vrot.lane.b32.xlu0 %v2661, 20
        %v2853 = vpop.permute.xlu0 %2852
        %2854 = vrot.lane.b32.xlu0 %v2663, 20
        %v2855 = vpop.permute.xlu0 %2854
        %2856 = vrot.lane.b32.xlu0 %v2665, 20
        %v2857 = vpop.permute.xlu0 %2856
        %2858 = vrot.lane.b32.xlu0 %v2667, 20
        %v2859 = vpop.permute.xlu0 %2858
        %2860 = vrot.lane.b32.xlu0 %v2669, 20
        %v2861 = vpop.permute.xlu0 %2860
        %2862 = vrot.lane.b32.xlu0 %v2671, 20
        %v2863 = vpop.permute.xlu0 %2862
        %2864 = vrot.lane.b32.xlu0 %v2673, 20
        %v2865 = vpop.permute.xlu0 %2864
        %2866 = vrot.lane.b32.xlu0 %v2675, 20
        %v2867 = vpop.permute.xlu0 %2866
        %2868 = vrot.lane.b32.xlu0 %v2677, 20
        %v2869 = vpop.permute.xlu0 %2868
        %2870 = vrot.lane.b32.xlu0 %v2679, 20
        %v2871 = vpop.permute.xlu0 %2870
        %2872 = vrot.lane.b32.xlu0 %v2681, 20
        %v2873 = vpop.permute.xlu0 %2872
        %2874 = vrot.lane.b32.xlu0 %v2683, 20
        %v2875 = vpop.permute.xlu0 %2874
        %2876 = vrot.lane.b32.xlu0 %v2685, 20
        %v2877 = vpop.permute.xlu0 %2876
        %2878 = vrot.lane.b32.xlu0 %v2687, 20
        %v2879 = vpop.permute.xlu0 %2878
        %2880 = vrot.lane.b32.xlu0 %v2689, 20
        %v2881 = vpop.permute.xlu0 %2880
        %2882 = vrot.lane.b32.xlu0 %v2691, 20
        %v2883 = vpop.permute.xlu0 %2882
        %2884 = vrot.lane.b32.xlu0 %v2693, 20
        %v2885 = vpop.permute.xlu0 %2884
        %2886 = vrot.lane.b32.xlu0 %v2695, 20
        %v2887 = vpop.permute.xlu0 %2886
        %2888 = vrot.lane.b32.xlu0 %v2697, 20
        %v2889 = vpop.permute.xlu0 %2888
        %2890 = vrot.lane.b32.xlu0 %v2699, 20
        %v2891 = vpop.permute.xlu0 %2890
        %2892 = vrot.lane.b32.xlu0 %v2701, 20
        %v2893 = vpop.permute.xlu0 %2892
        %2894 = vrot.lane.b32.xlu0 %v2703, 20
        %v2895 = vpop.permute.xlu0 %2894
        %2896 = vrot.lane.b32.xlu0 %v2705, 20
        %v2897 = vpop.permute.xlu0 %2896
        %2898 = vrot.lane.b32.xlu0 %v2707, 20
        %v2899 = vpop.permute.xlu0 %2898
        %2900 = vrot.lane.b32.xlu0 %v2709, 20
        %v2901 = vpop.permute.xlu0 %2900
        %2902 = vrot.lane.b32.xlu0 %v2711, 20
        %v2903 = vpop.permute.xlu0 %2902
        %2904 = vrot.lane.b32.xlu0 %v2713, 20
        %v2905 = vpop.permute.xlu0 %2904
        %2906 = vrot.lane.b32.xlu0 %v2715, 20
        %v2907 = vpop.permute.xlu0 %2906
        %2908 = vrot.lane.b32.xlu0 %v2717, 20
        %v2909 = vpop.permute.xlu0 %2908
        %2910 = vrot.lane.b32.xlu0 %v2719, 20
        %v2911 = vpop.permute.xlu0 %2910
        %2912 = vrot.lane.b32.xlu0 %v2721, 20
        %v2913 = vpop.permute.xlu0 %2912
        %2914 = vrot.lane.b32.xlu0 %v2723, 20
        %v2915 = vpop.permute.xlu0 %2914
        %2916 = vrot.lane.b32.xlu0 %v2725, 20
        %v2917 = vpop.permute.xlu0 %2916
        %2918 = vrot.lane.b32.xlu0 %v2727, 20
        %v2919 = vpop.permute.xlu0 %2918
        %2920 = vrot.lane.b32.xlu0 %v2729, 20
        %v2921 = vpop.permute.xlu0 %2920
        %2922 = vrot.lane.b32.xlu0 %v2731, 20
        %v2923 = vpop.permute.xlu0 %2922
        %2924 = vrot.lane.b32.xlu0 %v2733, 20
        %v2925 = vpop.permute.xlu0 %2924
        %2926 = vrot.lane.b32.xlu0 %v2735, 20
        %v2927 = vpop.permute.xlu0 %2926
        %vm2928 = vcmask 162816
        %v2929 = vsel %vm2928, %v2801, %v2803
        %v2930 = vsel %vm2928, %v2805, %v2807
        %v2931 = vsel %vm2928, %v2809, %v2811
        %v2932 = vsel %vm2928, %v2813, %v2815
        %v2933 = vsel %vm2928, %v2817, %v2819
        %v2934 = vsel %vm2928, %v2821, %v2823
        %v2935 = vsel %vm2928, %v2825, %v2827
        %v2936 = vsel %vm2928, %v2829, %v2831
        %v2937 = vsel %vm2928, %v2833, %v2835
        %v2938 = vsel %vm2928, %v2837, %v2839
        %v2939 = vsel %vm2928, %v2841, %v2843
        %v2940 = vsel %vm2928, %v2845, %v2847
        %v2941 = vsel %vm2928, %v2849, %v2851
        %v2942 = vsel %vm2928, %v2853, %v2855
        %v2943 = vsel %vm2928, %v2857, %v2859
        %v2944 = vsel %vm2928, %v2861, %v2863
        %v2945 = vsel %vm2928, %v2865, %v2867
        %v2946 = vsel %vm2928, %v2869, %v2871
        %v2947 = vsel %vm2928, %v2873, %v2875
        %v2948 = vsel %vm2928, %v2877, %v2879
        %v2949 = vsel %vm2928, %v2881, %v2883
        %v2950 = vsel %vm2928, %v2885, %v2887
        %v2951 = vsel %vm2928, %v2889, %v2891
        %v2952 = vsel %vm2928, %v2893, %v2895
        %v2953 = vsel %vm2928, %v2897, %v2899
        %v2954 = vsel %vm2928, %v2901, %v2903
        %v2955 = vsel %vm2928, %v2905, %v2907
        %v2956 = vsel %vm2928, %v2909, %v2911
        %v2957 = vsel %vm2928, %v2913, %v2915
        %v2958 = vsel %vm2928, %v2917, %v2919
        %v2959 = vsel %vm2928, %v2921, %v2923
        %v2960 = vsel %vm2928, %v2925, %v2927
        %v2993 = vsel %vm638, %v2929, 0.0
        %2994 = vadd.xlane.f32.xlu0 %v2993
        %v2995 = vpop.xlane.xlu0 %2994
        %v2996 = vsel %vm638, %v2930, 0.0
        %2997 = vadd.xlane.f32.xlu0 %v2996
        %v2998 = vpop.xlane.xlu0 %2997
        %v2999 = vsel %vm638, %v2931, 0.0
        %3000 = vadd.xlane.f32.xlu0 %v2999
        %v3001 = vpop.xlane.xlu0 %3000
        %v3002 = vsel %vm638, %v2932, 0.0
        %3003 = vadd.xlane.f32.xlu0 %v3002
        %v3004 = vpop.xlane.xlu0 %3003
        %v3005 = vsel %vm638, %v2933, 0.0
        %3006 = vadd.xlane.f32.xlu0 %v3005
        %v3007 = vpop.xlane.xlu0 %3006
        %v3008 = vsel %vm638, %v2934, 0.0
        %3009 = vadd.xlane.f32.xlu0 %v3008
        %v3010 = vpop.xlane.xlu0 %3009
        %v3011 = vsel %vm638, %v2935, 0.0
        %3012 = vadd.xlane.f32.xlu0 %v3011
        %v3013 = vpop.xlane.xlu0 %3012
        %v3014 = vsel %vm638, %v2936, 0.0
        %3015 = vadd.xlane.f32.xlu0 %v3014
        %v3016 = vpop.xlane.xlu0 %3015
        %v3017 = vsel %vm638, %v2937, 0.0
        %3018 = vadd.xlane.f32.xlu0 %v3017
        %v3019 = vpop.xlane.xlu0 %3018
        %v3020 = vsel %vm638, %v2938, 0.0
        %3021 = vadd.xlane.f32.xlu0 %v3020
        %v3022 = vpop.xlane.xlu0 %3021
        %v3023 = vsel %vm638, %v2939, 0.0
        %3024 = vadd.xlane.f32.xlu0 %v3023
        %v3025 = vpop.xlane.xlu0 %3024
        %v3026 = vsel %vm638, %v2940, 0.0
        %3027 = vadd.xlane.f32.xlu0 %v3026
        %v3028 = vpop.xlane.xlu0 %3027
        %v3029 = vsel %vm638, %v2941, 0.0
        %3030 = vadd.xlane.f32.xlu0 %v3029
        %v3031 = vpop.xlane.xlu0 %3030
        %v3032 = vsel %vm638, %v2942, 0.0
        %3033 = vadd.xlane.f32.xlu0 %v3032
        %v3034 = vpop.xlane.xlu0 %3033
        %v3035 = vsel %vm638, %v2943, 0.0
        %3036 = vadd.xlane.f32.xlu0 %v3035
        %v3037 = vpop.xlane.xlu0 %3036
        %v3038 = vsel %vm638, %v2944, 0.0
        %3039 = vadd.xlane.f32.xlu0 %v3038
        %v3040 = vpop.xlane.xlu0 %3039
        %v3041 = vsel %vm638, %v2945, 0.0
        %3042 = vadd.xlane.f32.xlu0 %v3041
        %v3043 = vpop.xlane.xlu0 %3042
        %v3044 = vsel %vm638, %v2946, 0.0
        %3045 = vadd.xlane.f32.xlu0 %v3044
        %v3046 = vpop.xlane.xlu0 %3045
        %v3047 = vsel %vm638, %v2947, 0.0
        %3048 = vadd.xlane.f32.xlu0 %v3047
        %v3049 = vpop.xlane.xlu0 %3048
        %v3050 = vsel %vm638, %v2948, 0.0
        %3051 = vadd.xlane.f32.xlu0 %v3050
        %v3052 = vpop.xlane.xlu0 %3051
        %v3053 = vsel %vm638, %v2949, 0.0
        %3054 = vadd.xlane.f32.xlu0 %v3053
        %v3055 = vpop.xlane.xlu0 %3054
        %v3056 = vsel %vm638, %v2950, 0.0
        %3057 = vadd.xlane.f32.xlu0 %v3056
        %v3058 = vpop.xlane.xlu0 %3057
        %v3059 = vsel %vm638, %v2951, 0.0
        %3060 = vadd.xlane.f32.xlu0 %v3059
        %v3061 = vpop.xlane.xlu0 %3060
        %v3062 = vsel %vm638, %v2952, 0.0
        %3063 = vadd.xlane.f32.xlu0 %v3062
        %v3064 = vpop.xlane.xlu0 %3063
        %v3065 = vsel %vm638, %v2953, 0.0
        %3066 = vadd.xlane.f32.xlu0 %v3065
        %v3067 = vpop.xlane.xlu0 %3066
        %v3068 = vsel %vm638, %v2954, 0.0
        %3069 = vadd.xlane.f32.xlu0 %v3068
        %v3070 = vpop.xlane.xlu0 %3069
        %v3071 = vsel %vm638, %v2955, 0.0
        %3072 = vadd.xlane.f32.xlu0 %v3071
        %v3073 = vpop.xlane.xlu0 %3072
        %v3074 = vsel %vm638, %v2956, 0.0
        %3075 = vadd.xlane.f32.xlu0 %v3074
        %v3076 = vpop.xlane.xlu0 %3075
        %v3077 = vsel %vm638, %v2957, 0.0
        %3078 = vadd.xlane.f32.xlu0 %v3077
        %v3079 = vpop.xlane.xlu0 %3078
        %v3080 = vsel %vm638, %v2958, 0.0
        %3081 = vadd.xlane.f32.xlu0 %v3080
        %v3082 = vpop.xlane.xlu0 %3081
        %v3083 = vsel %vm638, %v2959, 0.0
        %3084 = vadd.xlane.f32.xlu0 %v3083
        %v3085 = vpop.xlane.xlu0 %3084
        %v3086 = vsel %vm638, %v2960, 0.0
        %3087 = vadd.xlane.f32.xlu0 %v3086
        %v3088 = vpop.xlane.xlu0 %3087
        %v3089 = vrcp.pop %v2995
        %v3090 = vrcp.pop %v2998
        %v3091 = vrcp.pop %v3001
        %v3092 = vrcp.pop %v3004
        %v3093 = vrcp.pop %v3007
        %v3094 = vrcp.pop %v3010
        %v3095 = vrcp.pop %v3013
        %v3096 = vrcp.pop %v3016
        %v3097 = vrcp.pop %v3019
        %v3098 = vrcp.pop %v3022
        %v3099 = vrcp.pop %v3025
        %v3100 = vrcp.pop %v3028
        %v3101 = vrcp.pop %v3031
        %v3102 = vrcp.pop %v3034
        %v3103 = vrcp.pop %v3037
        %v3104 = vrcp.pop %v3040
        %v3105 = vrcp.pop %v3043
        %v3106 = vrcp.pop %v3046
        %v3107 = vrcp.pop %v3049
        %v3108 = vrcp.pop %v3052
        %v3109 = vrcp.pop %v3055
        %v3110 = vrcp.pop %v3058
        %v3111 = vrcp.pop %v3061
        %v3112 = vrcp.pop %v3064
        %v3113 = vrcp.pop %v3067
        %v3114 = vrcp.pop %v3070
        %v3115 = vrcp.pop %v3073
        %v3116 = vrcp.pop %v3076
        %v3117 = vrcp.pop %v3079
        %v3118 = vrcp.pop %v3082
        %v3119 = vrcp.pop %v3085
        %v3120 = vrcp.pop %v3088
        %v3121 = vmul.f32 %v2609, %v3089
        %v3122 = vmul.f32 %v2611, %v3089
        %v3123 = vmul.f32 %v2613, %v3090
        %v3124 = vmul.f32 %v2615, %v3090
        %v3125 = vmul.f32 %v2617, %v3091
        %v3126 = vmul.f32 %v2619, %v3091
        %v3127 = vmul.f32 %v2621, %v3092
        %v3128 = vmul.f32 %v2623, %v3092
        %v3129 = vmul.f32 %v2625, %v3093
        %v3130 = vmul.f32 %v2627, %v3093
        %v3131 = vmul.f32 %v2629, %v3094
        %v3132 = vmul.f32 %v2631, %v3094
        %v3133 = vmul.f32 %v2633, %v3095
        %v3134 = vmul.f32 %v2635, %v3095
        %v3135 = vmul.f32 %v2637, %v3096
        %v3136 = vmul.f32 %v2639, %v3096
        %v3137 = vmul.f32 %v2641, %v3097
        %v3138 = vmul.f32 %v2643, %v3097
        %v3139 = vmul.f32 %v2645, %v3098
        %v3140 = vmul.f32 %v2647, %v3098
        %v3141 = vmul.f32 %v2649, %v3099
        %v3142 = vmul.f32 %v2651, %v3099
        %v3143 = vmul.f32 %v2653, %v3100
        %v3144 = vmul.f32 %v2655, %v3100
        %v3145 = vmul.f32 %v2657, %v3101
        %v3146 = vmul.f32 %v2659, %v3101
        %v3147 = vmul.f32 %v2661, %v3102
        %v3148 = vmul.f32 %v2663, %v3102
        %v3149 = vmul.f32 %v2665, %v3103
        %v3150 = vmul.f32 %v2667, %v3103
        %v3151 = vmul.f32 %v2669, %v3104
        %v3152 = vmul.f32 %v2671, %v3104
        %v3153 = vmul.f32 %v2673, %v3105
        %v3154 = vmul.f32 %v2675, %v3105
        %v3155 = vmul.f32 %v2677, %v3106
        %v3156 = vmul.f32 %v2679, %v3106
        %v3157 = vmul.f32 %v2681, %v3107
        %v3158 = vmul.f32 %v2683, %v3107
        %v3159 = vmul.f32 %v2685, %v3108
        %v3160 = vmul.f32 %v2687, %v3108
        %v3161 = vmul.f32 %v2689, %v3109
        %v3162 = vmul.f32 %v2691, %v3109
        %v3163 = vmul.f32 %v2693, %v3110
        %v3164 = vmul.f32 %v2695, %v3110
        %v3165 = vmul.f32 %v2697, %v3111
        %v3166 = vmul.f32 %v2699, %v3111
        %v3167 = vmul.f32 %v2701, %v3112
        %v3168 = vmul.f32 %v2703, %v3112
        %v3169 = vmul.f32 %v2705, %v3113
        %v3170 = vmul.f32 %v2707, %v3113
        %v3171 = vmul.f32 %v2709, %v3114
        %v3172 = vmul.f32 %v2711, %v3114
        %v3173 = vmul.f32 %v2713, %v3115
        %v3174 = vmul.f32 %v2715, %v3115
        %v3175 = vmul.f32 %v2717, %v3116
        %v3176 = vmul.f32 %v2719, %v3116
        %v3177 = vmul.f32 %v2721, %v3117
        %v3178 = vmul.f32 %v2723, %v3117
        %v3179 = vmul.f32 %v2725, %v3118
        %v3180 = vmul.f32 %v2727, %v3118
        %v3181 = vmul.f32 %v2729, %v3119
        %v3182 = vmul.f32 %v2731, %v3119
        %v3183 = vmul.f32 %v2733, %v3120
        %v3184 = vmul.f32 %v2735, %v3120
        %v3185 = vsel %vm2382, %v3121, 0.0
        %v3186 = vsel %vm2382, %v3137, 0.0
        %v3187 = vadd.f32 %v3185, %v3186
        %v3188 = vsel %vm2382, %v3153, 0.0
        %v3189 = vadd.f32 %v3187, %v3188
        %v3190 = vsel %vm2382, %v3169, 0.0
        %v3191 = vadd.f32 %v3189, %v3190
        %v3192 = vsel %vm2384, %v3122, 0.0
        %v3193 = vsel %vm2384, %v3138, 0.0
        %v3194 = vadd.f32 %v3192, %v3193
        %v3195 = vsel %vm2384, %v3154, 0.0
        %v3196 = vadd.f32 %v3194, %v3195
        %v3197 = vsel %vm2384, %v3170, 0.0
        %v3198 = vadd.f32 %v3196, %v3197
        %v3199 = vsel %vm2382, %v3123, 0.0
        %v3200 = vsel %vm2382, %v3139, 0.0
        %v3201 = vadd.f32 %v3199, %v3200
        %v3202 = vsel %vm2382, %v3155, 0.0
        %v3203 = vadd.f32 %v3201, %v3202
        %v3204 = vsel %vm2382, %v3171, 0.0
        %v3205 = vadd.f32 %v3203, %v3204
        %v3206 = vsel %vm2384, %v3124, 0.0
        %v3207 = vsel %vm2384, %v3140, 0.0
        %v3208 = vadd.f32 %v3206, %v3207
        %v3209 = vsel %vm2384, %v3156, 0.0
        %v3210 = vadd.f32 %v3208, %v3209
        %v3211 = vsel %vm2384, %v3172, 0.0
        %v3212 = vadd.f32 %v3210, %v3211
        %v3213 = vsel %vm2382, %v3125, 0.0
        %v3214 = vsel %vm2382, %v3141, 0.0
        %v3215 = vadd.f32 %v3213, %v3214
        %v3216 = vsel %vm2382, %v3157, 0.0
        %v3217 = vadd.f32 %v3215, %v3216
        %v3218 = vsel %vm2382, %v3173, 0.0
        %v3219 = vadd.f32 %v3217, %v3218
        %v3220 = vsel %vm2384, %v3126, 0.0
        %v3221 = vsel %vm2384, %v3142, 0.0
        %v3222 = vadd.f32 %v3220, %v3221
        %v3223 = vsel %vm2384, %v3158, 0.0
        %v3224 = vadd.f32 %v3222, %v3223
        %v3225 = vsel %vm2384, %v3174, 0.0
        %v3226 = vadd.f32 %v3224, %v3225
        %v3227 = vsel %vm2382, %v3127, 0.0
        %v3228 = vsel %vm2382, %v3143, 0.0
        %v3229 = vadd.f32 %v3227, %v3228
        %v3230 = vsel %vm2382, %v3159, 0.0
        %v3231 = vadd.f32 %v3229, %v3230
        %v3232 = vsel %vm2382, %v3175, 0.0
        %v3233 = vadd.f32 %v3231, %v3232
        %v3234 = vsel %vm2384, %v3128, 0.0
        %v3235 = vsel %vm2384, %v3144, 0.0
        %v3236 = vadd.f32 %v3234, %v3235
        %v3237 = vsel %vm2384, %v3160, 0.0
        %v3238 = vadd.f32 %v3236, %v3237
        %v3239 = vsel %vm2384, %v3176, 0.0
        %v3240 = vadd.f32 %v3238, %v3239
        %v3241 = vsel %vm2382, %v3129, 0.0
        %v3242 = vsel %vm2382, %v3145, 0.0
        %v3243 = vadd.f32 %v3241, %v3242
        %v3244 = vsel %vm2382, %v3161, 0.0
        %v3245 = vadd.f32 %v3243, %v3244
        %v3246 = vsel %vm2382, %v3177, 0.0
        %v3247 = vadd.f32 %v3245, %v3246
        %v3248 = vsel %vm2384, %v3130, 0.0
        %v3249 = vsel %vm2384, %v3146, 0.0
        %v3250 = vadd.f32 %v3248, %v3249
        %v3251 = vsel %vm2384, %v3162, 0.0
        %v3252 = vadd.f32 %v3250, %v3251
        %v3253 = vsel %vm2384, %v3178, 0.0
        %v3254 = vadd.f32 %v3252, %v3253
        %v3255 = vsel %vm2382, %v3131, 0.0
        %v3256 = vsel %vm2382, %v3147, 0.0
        %v3257 = vadd.f32 %v3255, %v3256
        %v3258 = vsel %vm2382, %v3163, 0.0
        %v3259 = vadd.f32 %v3257, %v3258
        %v3260 = vsel %vm2382, %v3179, 0.0
        %v3261 = vadd.f32 %v3259, %v3260
        %v3262 = vsel %vm2384, %v3132, 0.0
        %v3263 = vsel %vm2384, %v3148, 0.0
        %v3264 = vadd.f32 %v3262, %v3263
        %v3265 = vsel %vm2384, %v3164, 0.0
        %v3266 = vadd.f32 %v3264, %v3265
        %v3267 = vsel %vm2384, %v3180, 0.0
        %v3268 = vadd.f32 %v3266, %v3267
        %v3269 = vsel %vm2382, %v3133, 0.0
        %v3270 = vsel %vm2382, %v3149, 0.0
        %v3271 = vadd.f32 %v3269, %v3270
        %v3272 = vsel %vm2382, %v3165, 0.0
        %v3273 = vadd.f32 %v3271, %v3272
        %v3274 = vsel %vm2382, %v3181, 0.0
        %v3275 = vadd.f32 %v3273, %v3274
        %v3276 = vsel %vm2384, %v3134, 0.0
        %v3277 = vsel %vm2384, %v3150, 0.0
        %v3278 = vadd.f32 %v3276, %v3277
        %v3279 = vsel %vm2384, %v3166, 0.0
        %v3280 = vadd.f32 %v3278, %v3279
        %v3281 = vsel %vm2384, %v3182, 0.0
        %v3282 = vadd.f32 %v3280, %v3281
        %v3283 = vsel %vm2382, %v3135, 0.0
        %v3284 = vsel %vm2382, %v3151, 0.0
        %v3285 = vadd.f32 %v3283, %v3284
        %v3286 = vsel %vm2382, %v3167, 0.0
        %v3287 = vadd.f32 %v3285, %v3286
        %v3288 = vsel %vm2382, %v3183, 0.0
        %v3289 = vadd.f32 %v3287, %v3288
        %v3290 = vsel %vm2384, %v3136, 0.0
        %v3291 = vsel %vm2384, %v3152, 0.0
        %v3292 = vadd.f32 %v3290, %v3291
        %v3293 = vsel %vm2384, %v3168, 0.0
        %v3294 = vadd.f32 %v3292, %v3293
        %v3295 = vsel %vm2384, %v3184, 0.0
        %v3296 = vadd.f32 %v3294, %v3295
        %s3297 = scalar_lea.vmem %s208, 120
        %v3298 = vld [vmem:[%s3297] sm:$0xff]
        %v3299 = vld [vmem:[%s3297 + $0x8] sm:$0xff]
        %v3300 = vld [vmem:[%s3297 + $0x10] sm:$0xff]
        %v3301 = vld [vmem:[%s3297 + $0x18] sm:$0xff]
        %v3302 = vld [vmem:[%s3297 + $0x20] sm:$0xf]
        %3319 = vrot.lane.b32.xlu0 %v3191, 20
        %v3320 = vpop.permute.xlu0 %3319
        %3321 = vrot.lane.b32.xlu0 %v3198, 20
        %v3322 = vpop.permute.xlu0 %3321
        %3323 = vrot.lane.b32.xlu0 %v3205, 20
        %v3324 = vpop.permute.xlu0 %3323
        %3325 = vrot.lane.b32.xlu0 %v3212, 20
        %v3326 = vpop.permute.xlu0 %3325
        %3327 = vrot.lane.b32.xlu0 %v3219, 20
        %v3328 = vpop.permute.xlu0 %3327
        %3329 = vrot.lane.b32.xlu0 %v3226, 20
        %v3330 = vpop.permute.xlu0 %3329
        %3331 = vrot.lane.b32.xlu0 %v3233, 20
        %v3332 = vpop.permute.xlu0 %3331
        %3333 = vrot.lane.b32.xlu0 %v3240, 20
        %v3334 = vpop.permute.xlu0 %3333
        %3335 = vrot.lane.b32.xlu0 %v3247, 20
        %v3336 = vpop.permute.xlu0 %3335
        %3337 = vrot.lane.b32.xlu0 %v3254, 20
        %v3338 = vpop.permute.xlu0 %3337
        %3339 = vrot.lane.b32.xlu0 %v3261, 20
        %v3340 = vpop.permute.xlu0 %3339
        %3341 = vrot.lane.b32.xlu0 %v3268, 20
        %v3342 = vpop.permute.xlu0 %3341
        %3343 = vrot.lane.b32.xlu0 %v3275, 20
        %v3344 = vpop.permute.xlu0 %3343
        %3345 = vrot.lane.b32.xlu0 %v3282, 20
        %v3346 = vpop.permute.xlu0 %3345
        %3347 = vrot.lane.b32.xlu0 %v3289, 20
        %v3348 = vpop.permute.xlu0 %3347
        %3349 = vrot.lane.b32.xlu0 %v3296, 20
        %v3350 = vpop.permute.xlu0 %3349
        %v3351 = vsel %vm2928, %v3320, %v3322
        %v3352 = vsel %vm2928, %v3324, %v3326
        %v3353 = vsel %vm2928, %v3328, %v3330
        %v3354 = vsel %vm2928, %v3332, %v3334
        %v3355 = vsel %vm2928, %v3336, %v3338
        %v3356 = vsel %vm2928, %v3340, %v3342
        %v3357 = vsel %vm2928, %v3344, %v3346
        %v3358 = vsel %vm2928, %v3348, %v3350
        %v3359 = vsel %vm638, %v3351, 0
        %v3361 = vsel %vm638, %v3352, 0
        %v3363 = vsel %vm638, %v3353, 0
        %v3365 = vsel %vm638, %v3354, 0
        %v3367 = vsel %vm638, %v3355, 0
        %v3369 = vsel %vm638, %v3356, 0
        %v3371 = vsel %vm638, %v3357, 0
        %v3373 = vsel %vm638, %v3358, 0
        %v3376 = vsel %vm343, %v3302, 0
        %3378 = vmatpush.msra.mxu0 0.0
        %3379 = vmatpush.msra.mxu0 0.0
        %3380 = vmatpush.msra.mxu0 0.0
        %3381 = vmatpush.msra.mxu0 0.0
        %3382 = vmatpush.msra.mxu0 0.0
        %3383 = vmatpush.msra.mxu0 0.0
        %3384 = vmatpush.msra.mxu0 0.0
        %3385 = vmatpush.msra.mxu0 0.0
        %3386 = vmatpush.msra.mxu0 0.0
        %3387 = vmatpush.msra.mxu0 0.0
        %3388 = vmatpush.msra.mxu0 0.0
        %3389 = vmatpush.msra.mxu0 %v3376
        %3390 = vmatpush.msra.mxu0 %v3301
        %3391 = vmatpush.msra.mxu0 %v3300
        %3392 = vmatpush.msra.mxu0 %v3299
        %3393 = vmatpush.msra.mxu0 %v3298
        %3394 = vmatmul.f32.gmra.mxu0 %v3359
        %v3395 = vpop.f32.mrf.mxu0
        %v3396 = vadd.f32 0.0, %v3395
        %3397 = vmatmul.f32.gmra.mxu0 %v3361
        %v3398 = vpop.f32.mrf.mxu0
        %v3399 = vadd.f32 0.0, %v3398
        %3400 = vmatmul.f32.gmra.mxu0 %v3363
        %v3401 = vpop.f32.mrf.mxu0
        %v3402 = vadd.f32 0.0, %v3401
        %3403 = vmatmul.f32.gmra.mxu0 %v3365
        %v3404 = vpop.f32.mrf.mxu0
        %v3405 = vadd.f32 0.0, %v3404
        %3406 = vmatmul.f32.gmra.mxu0 %v3367
        %v3407 = vpop.f32.mrf.mxu0
        %v3408 = vadd.f32 0.0, %v3407
        %3409 = vmatmul.f32.gmra.mxu0 %v3369
        %v3410 = vpop.f32.mrf.mxu0
        %v3411 = vadd.f32 0.0, %v3410
        %3412 = vmatmul.f32.gmra.mxu0 %v3371
        %v3413 = vpop.f32.mrf.mxu0
        %v3414 = vadd.f32 0.0, %v3413
        %3415 = vmatmul.f32.gmra.mxu0 %v3373
        %v3416 = vpop.f32.mrf.mxu0
        %v3417 = vadd.f32 0.0, %v3416
        %3418 = vdwg.mxu0
        %v3419 = vadd.f32 %v2374, %v3396
        %v3420 = vadd.f32 %v2375, %v3399
        %v3421 = vadd.f32 %v2376, %v3402
        %v3422 = vadd.f32 %v2377, %v3405
        %v3423 = vadd.f32 %v2378, %v3408
        %v3424 = vadd.f32 %v2379, %v3411
        %v3425 = vadd.f32 %v2380, %v3414
        %v3426 = vadd.f32 %v2381, %v3417
        %3427 = vxpose.xlu0.b32.start [1/16] %v3419, 128
        %3428 = vxpose.xlu0.b32.cont [2/16] %v3420, 128
        %3429 = vxpose.xlu0.b32.cont [3/16] %v3421, 128
        %3430 = vxpose.xlu0.b32.cont [4/16] %v3422, 128
        %3431 = vxpose.xlu0.b32.cont [5/16] %v3423, 128
        %3432 = vxpose.xlu0.b32.cont [6/16] %v3424, 128
        %3433 = vxpose.xlu0.b32.cont [7/16] %v3425, 128
        %3434 = vxpose.xlu0.b32.cont [8/16] %v3426, 128
        %3435 = vxpose.xlu0.b32.cont [9/16] 0.0, 128
        %3436 = vxpose.xlu0.b32.cont [10/16] 0.0, 128
        %3437 = vxpose.xlu0.b32.cont [11/16] 0.0, 128
        %3438 = vxpose.xlu0.b32.cont [12/16] 0.0, 128
        %3439 = vxpose.xlu0.b32.cont [13/16] 0.0, 128
        %3440 = vxpose.xlu0.b32.cont [14/16] 0.0, 128
        %3441 = vxpose.xlu0.b32.cont [15/16] 0.0, 128
        %3442 = vxpose.xlu0.b32.end [16/16] 0.0, 128
        %v3443 = vpop.trf.xlu0
        %v3444 = vpop.trf.xlu0
        %v3445 = vpop.trf.xlu0
        %v3446 = vpop.trf.xlu0
        %v3447 = vpop.trf.xlu0
        %v3448 = vpop.trf.xlu0
        %v3449 = vpop.trf.xlu0
        %v3450 = vpop.trf.xlu0
        %v3451 = vpop.trf.xlu0
        %v3452 = vpop.trf.xlu0
        %v3453 = vpop.trf.xlu0
        %v3454 = vpop.trf.xlu0
        %v3455 = vpop.trf.xlu0
        %v3456 = vpop.trf.xlu0
        %v3457 = vpop.trf.xlu0
        %v3458 = vpop.trf.xlu0
        %s3459 = scalar_lea.vmem %s198, 256
        %v3460 = vld [vmem:[%s3459] sm:$0xff]
        %v3461 = vld [vmem:[%s3459 + $0x8] sm:$0xff]
        %v3462 = vld [vmem:[%s3459 + $0x10] sm:$0xff]
        %v3463 = vld [vmem:[%s3459 + $0x18] sm:$0xff]
        %v3464 = vld [vmem:[%s3459 + $0x20] sm:$0xff]
        %v3465 = vld [vmem:[%s3459 + $0x28] sm:$0xff]
        %v3466 = vld [vmem:[%s3459 + $0x30] sm:$0xff]
        %v3467 = vld [vmem:[%s3459 + $0x38] sm:$0xff]
        %v3468 = vld [vmem:[%s3459 + $0x40] sm:$0xff]
        %v3469 = vld [vmem:[%s3459 + $0x48] sm:$0xff]
        %v3470 = vld [vmem:[%s3459 + $0x50] sm:$0xff]
        %v3471 = vld [vmem:[%s3459 + $0x58] sm:$0xff]
        %v3472 = vld [vmem:[%s3459 + $0x60] sm:$0xff]
        %v3473 = vld [vmem:[%s3459 + $0x68] sm:$0xff]
        %v3474 = vld [vmem:[%s3459 + $0x70] sm:$0xff]
        %v3475 = vld [vmem:[%s3459 + $0x78] sm:$0xff]
        %v3476 = vld [vmem:[%s3459 + $0x80] sm:$0xff]
        %v3477 = vld [vmem:[%s3459 + $0x88] sm:$0xff]
        %v3478 = vld [vmem:[%s3459 + $0x90] sm:$0xff]
        %v3479 = vld [vmem:[%s3459 + $0x98] sm:$0xff]
        %v3480 = vld [vmem:[%s3459 + $0xa0] sm:$0xff]
        %v3481 = vld [vmem:[%s3459 + $0xa8] sm:$0xff]
        %v3482 = vld [vmem:[%s3459 + $0xb0] sm:$0xff]
        %v3483 = vld [vmem:[%s3459 + $0xb8] sm:$0xff]
        %v3484 = vld [vmem:[%s3459 + $0xc0] sm:$0xff]
        %v3485 = vld [vmem:[%s3459 + $0xc8] sm:$0xff]
        %v3486 = vld [vmem:[%s3459 + $0xd0] sm:$0xff]
        %v3487 = vld [vmem:[%s3459 + $0xd8] sm:$0xff]
        %v3488 = vld [vmem:[%s3459 + $0xe0] sm:$0xff]
        %v3489 = vld [vmem:[%s3459 + $0xe8] sm:$0xff]
        %v3490 = vld [vmem:[%s3459 + $0xf0] sm:$0xff]
        %v3491 = vld [vmem:[%s3459 + $0xf8] sm:$0xff]
        %s3492 = scalar_lea.vmem %s203, 8
        %v3493 = vld [vmem:[%s3492] sm:$0xff]
        %3495 = vst [vmem:[#allocation1] ss:$2 sm:$0xff] %v3493
        %v3496 = vld.sshfl [vmem:[#allocation1] sm:$0xff pattern:$0x75316420]
        %v3497 = vld.sshfl [vmem:[#allocation1 + $0x8] sm:$0xff pattern:$0x75316420]
        %v3499 = vsel %vm246, %v3460, 0
        %v3502 = vsel %vm246, %v3461, 0
        %v3505 = vsel %vm246, %v3462, 0
        %v3508 = vsel %vm246, %v3463, 0
        %v3511 = vsel %vm246, %v3464, 0
        %v3514 = vsel %vm246, %v3465, 0
        %v3517 = vsel %vm246, %v3466, 0
        %v3520 = vsel %vm246, %v3467, 0
        %v3523 = vsel %vm246, %v3468, 0
        %v3526 = vsel %vm246, %v3469, 0
        %v3529 = vsel %vm246, %v3470, 0
        %v3532 = vsel %vm246, %v3471, 0
        %v3535 = vsel %vm246, %v3472, 0
        %v3538 = vsel %vm246, %v3473, 0
        %v3541 = vsel %vm246, %v3474, 0
        %v3544 = vsel %vm246, %v3475, 0
        %v3547 = vsel %vm246, %v3476, 0
        %v3550 = vsel %vm246, %v3477, 0
        %v3553 = vsel %vm246, %v3478, 0
        %v3556 = vsel %vm246, %v3479, 0
        %v3559 = vsel %vm246, %v3480, 0
        %v3562 = vsel %vm246, %v3481, 0
        %v3565 = vsel %vm246, %v3482, 0
        %v3568 = vsel %vm246, %v3483, 0
        %v3571 = vsel %vm246, %v3484, 0
        %v3574 = vsel %vm246, %v3485, 0
        %v3577 = vsel %vm246, %v3486, 0
        %v3580 = vsel %vm246, %v3487, 0
        %v3583 = vsel %vm246, %v3488, 0
        %v3586 = vsel %vm246, %v3489, 0
        %v3589 = vsel %vm246, %v3490, 0
        %v3592 = vsel %vm246, %v3491, 0
        %v3594 = vsel %vm343, %v3496, 0
        %v3596 = vsel %vm343, %v3497, 0
        %3598 = vmatpush.msra.mxu0 0.0
        %3599 = vmatpush.msra.mxu0 0.0
        %3600 = vmatpush.msra.mxu0 0.0
        %3601 = vmatpush.msra.mxu0 0.0
        %3602 = vmatpush.msra.mxu0 0.0
        %3603 = vmatpush.msra.mxu0 0.0
        %3604 = vmatpush.msra.mxu0 0.0
        %3605 = vmatpush.msra.mxu0 0.0
        %3606 = vmatpush.msra.mxu0 0.0
        %3607 = vmatpush.msra.mxu0 0.0
        %3608 = vmatpush.msra.mxu0 0.0
        %3609 = vmatpush.msra.mxu0 0.0
        %3610 = vmatpush.msra.mxu0 0.0
        %3611 = vmatpush.msra.mxu0 0.0
        %3612 = vmatpush.msra.mxu0 0.0
        %3613 = vmatpush.msra.mxu0 %v3594
        %3614 = vmatmul.f32.gmra.mxu0 %v3499
        %v3615 = vpop.f32.mrf.mxu0
        %v3616 = vadd.f32 0.0, %v3615
        %3617 = vmatmul.f32.gmra.mxu0 %v3502
        %v3618 = vpop.f32.mrf.mxu0
        %v3619 = vadd.f32 0.0, %v3618
        %3620 = vmatmul.f32.gmra.mxu0 %v3505
        %v3621 = vpop.f32.mrf.mxu0
        %v3622 = vadd.f32 0.0, %v3621
        %3623 = vmatmul.f32.gmra.mxu0 %v3508
        %v3624 = vpop.f32.mrf.mxu0
        %v3625 = vadd.f32 0.0, %v3624
        %3626 = vmatmul.f32.gmra.mxu0 %v3511
        %v3627 = vpop.f32.mrf.mxu0
        %v3628 = vadd.f32 0.0, %v3627
        %3629 = vmatmul.f32.gmra.mxu0 %v3514
        %v3630 = vpop.f32.mrf.mxu0
        %v3631 = vadd.f32 0.0, %v3630
        %3632 = vmatmul.f32.gmra.mxu0 %v3517
        %v3633 = vpop.f32.mrf.mxu0
        %v3634 = vadd.f32 0.0, %v3633
        %3635 = vmatmul.f32.gmra.mxu0 %v3520
        %v3636 = vpop.f32.mrf.mxu0
        %v3637 = vadd.f32 0.0, %v3636
        %3638 = vmatmul.f32.gmra.mxu0 %v3523
        %v3639 = vpop.f32.mrf.mxu0
        %v3640 = vadd.f32 0.0, %v3639
        %3641 = vmatmul.f32.gmra.mxu0 %v3526
        %v3642 = vpop.f32.mrf.mxu0
        %v3643 = vadd.f32 0.0, %v3642
        %3644 = vmatmul.f32.gmra.mxu0 %v3529
        %v3645 = vpop.f32.mrf.mxu0
        %v3646 = vadd.f32 0.0, %v3645
        %3647 = vmatmul.f32.gmra.mxu0 %v3532
        %v3648 = vpop.f32.mrf.mxu0
        %v3649 = vadd.f32 0.0, %v3648
        %3650 = vmatmul.f32.gmra.mxu0 %v3535
        %v3651 = vpop.f32.mrf.mxu0
        %v3652 = vadd.f32 0.0, %v3651
        %3653 = vmatmul.f32.gmra.mxu0 %v3538
        %v3654 = vpop.f32.mrf.mxu0
        %v3655 = vadd.f32 0.0, %v3654
        %3656 = vmatmul.f32.gmra.mxu0 %v3541
        %v3657 = vpop.f32.mrf.mxu0
        %v3658 = vadd.f32 0.0, %v3657
        %3659 = vmatmul.f32.gmra.mxu0 %v3544
        %v3660 = vpop.f32.mrf.mxu0
        %v3661 = vadd.f32 0.0, %v3660
        %3662 = vmatmul.f32.gmra.mxu0 %v3547
        %v3663 = vpop.f32.mrf.mxu0
        %v3664 = vadd.f32 0.0, %v3663
        %3665 = vmatmul.f32.gmra.mxu0 %v3550
        %v3666 = vpop.f32.mrf.mxu0
        %v3667 = vadd.f32 0.0, %v3666
        %3668 = vmatmul.f32.gmra.mxu0 %v3553
        %v3669 = vpop.f32.mrf.mxu0
        %v3670 = vadd.f32 0.0, %v3669
        %3671 = vmatmul.f32.gmra.mxu0 %v3556
        %v3672 = vpop.f32.mrf.mxu0
        %v3673 = vadd.f32 0.0, %v3672
        %3674 = vmatmul.f32.gmra.mxu0 %v3559
        %v3675 = vpop.f32.mrf.mxu0
        %v3676 = vadd.f32 0.0, %v3675
        %3677 = vmatmul.f32.gmra.mxu0 %v3562
        %v3678 = vpop.f32.mrf.mxu0
        %v3679 = vadd.f32 0.0, %v3678
        %3680 = vmatmul.f32.gmra.mxu0 %v3565
        %v3681 = vpop.f32.mrf.mxu0
        %v3682 = vadd.f32 0.0, %v3681
        %3683 = vmatmul.f32.gmra.mxu0 %v3568
        %v3684 = vpop.f32.mrf.mxu0
        %v3685 = vadd.f32 0.0, %v3684
        %3686 = vmatmul.f32.gmra.mxu0 %v3571
        %v3687 = vpop.f32.mrf.mxu0
        %v3688 = vadd.f32 0.0, %v3687
        %3689 = vmatmul.f32.gmra.mxu0 %v3574
        %v3690 = vpop.f32.mrf.mxu0
        %v3691 = vadd.f32 0.0, %v3690
        %3692 = vmatmul.f32.gmra.mxu0 %v3577
        %v3693 = vpop.f32.mrf.mxu0
        %v3694 = vadd.f32 0.0, %v3693
        %3695 = vmatmul.f32.gmra.mxu0 %v3580
        %v3696 = vpop.f32.mrf.mxu0
        %v3697 = vadd.f32 0.0, %v3696
        %3698 = vmatmul.f32.gmra.mxu0 %v3583
        %v3699 = vpop.f32.mrf.mxu0
        %v3700 = vadd.f32 0.0, %v3699
        %3701 = vmatmul.f32.gmra.mxu0 %v3586
        %v3702 = vpop.f32.mrf.mxu0
        %v3703 = vadd.f32 0.0, %v3702
        %3704 = vmatmul.f32.gmra.mxu0 %v3589
        %v3705 = vpop.f32.mrf.mxu0
        %v3706 = vadd.f32 0.0, %v3705
        %3707 = vmatmul.f32.gmra.mxu0 %v3592
        %v3708 = vpop.f32.mrf.mxu0
        %v3709 = vadd.f32 0.0, %v3708
        %3710 = vdwg.mxu0
        %3711 = vmatpush.msra.mxu0 0.0
        %3712 = vmatpush.msra.mxu0 0.0
        %3713 = vmatpush.msra.mxu0 0.0
        %3714 = vmatpush.msra.mxu0 0.0
        %3715 = vmatpush.msra.mxu0 0.0
        %3716 = vmatpush.msra.mxu0 0.0
        %3717 = vmatpush.msra.mxu0 0.0
        %3718 = vmatpush.msra.mxu0 0.0
        %3719 = vmatpush.msra.mxu0 0.0
        %3720 = vmatpush.msra.mxu0 0.0
        %3721 = vmatpush.msra.mxu0 0.0
        %3722 = vmatpush.msra.mxu0 0.0
        %3723 = vmatpush.msra.mxu0 0.0
        %3724 = vmatpush.msra.mxu0 0.0
        %3725 = vmatpush.msra.mxu0 0.0
        %3726 = vmatpush.msra.mxu0 %v3596
        %3727 = vmatmul.f32.gmra.mxu0 %v3499
        %v3728 = vpop.f32.mrf.mxu0
        %v3729 = vadd.f32 0.0, %v3728
        %3730 = vmatmul.f32.gmra.mxu0 %v3502
        %v3731 = vpop.f32.mrf.mxu0
        %v3732 = vadd.f32 0.0, %v3731
        %3733 = vmatmul.f32.gmra.mxu0 %v3505
        %v3734 = vpop.f32.mrf.mxu0
        %v3735 = vadd.f32 0.0, %v3734
        %3736 = vmatmul.f32.gmra.mxu0 %v3508
        %v3737 = vpop.f32.mrf.mxu0
        %v3738 = vadd.f32 0.0, %v3737
        %3739 = vmatmul.f32.gmra.mxu0 %v3511
        %v3740 = vpop.f32.mrf.mxu0
        %v3741 = vadd.f32 0.0, %v3740
        %3742 = vmatmul.f32.gmra.mxu0 %v3514
        %v3743 = vpop.f32.mrf.mxu0
        %v3744 = vadd.f32 0.0, %v3743
        %3745 = vmatmul.f32.gmra.mxu0 %v3517
        %v3746 = vpop.f32.mrf.mxu0
        %v3747 = vadd.f32 0.0, %v3746
        %3748 = vmatmul.f32.gmra.mxu0 %v3520
        %v3749 = vpop.f32.mrf.mxu0
        %v3750 = vadd.f32 0.0, %v3749
        %3751 = vmatmul.f32.gmra.mxu0 %v3523
        %v3752 = vpop.f32.mrf.mxu0
        %v3753 = vadd.f32 0.0, %v3752
        %3754 = vmatmul.f32.gmra.mxu0 %v3526
        %v3755 = vpop.f32.mrf.mxu0
        %v3756 = vadd.f32 0.0, %v3755
        %3757 = vmatmul.f32.gmra.mxu0 %v3529
        %v3758 = vpop.f32.mrf.mxu0
        %v3759 = vadd.f32 0.0, %v3758
        %3760 = vmatmul.f32.gmra.mxu0 %v3532
        %v3761 = vpop.f32.mrf.mxu0
        %v3762 = vadd.f32 0.0, %v3761
        %3763 = vmatmul.f32.gmra.mxu0 %v3535
        %v3764 = vpop.f32.mrf.mxu0
        %v3765 = vadd.f32 0.0, %v3764
        %3766 = vmatmul.f32.gmra.mxu0 %v3538
        %v3767 = vpop.f32.mrf.mxu0
        %v3768 = vadd.f32 0.0, %v3767
        %3769 = vmatmul.f32.gmra.mxu0 %v3541
        %v3770 = vpop.f32.mrf.mxu0
        %v3771 = vadd.f32 0.0, %v3770
        %3772 = vmatmul.f32.gmra.mxu0 %v3544
        %v3773 = vpop.f32.mrf.mxu0
        %v3774 = vadd.f32 0.0, %v3773
        %3775 = vmatmul.f32.gmra.mxu0 %v3547
        %v3776 = vpop.f32.mrf.mxu0
        %v3777 = vadd.f32 0.0, %v3776
        %3778 = vmatmul.f32.gmra.mxu0 %v3550
        %v3779 = vpop.f32.mrf.mxu0
        %v3780 = vadd.f32 0.0, %v3779
        %3781 = vmatmul.f32.gmra.mxu0 %v3553
        %v3782 = vpop.f32.mrf.mxu0
        %v3783 = vadd.f32 0.0, %v3782
        %3784 = vmatmul.f32.gmra.mxu0 %v3556
        %v3785 = vpop.f32.mrf.mxu0
        %v3786 = vadd.f32 0.0, %v3785
        %3787 = vmatmul.f32.gmra.mxu0 %v3559
        %v3788 = vpop.f32.mrf.mxu0
        %v3789 = vadd.f32 0.0, %v3788
        %3790 = vmatmul.f32.gmra.mxu0 %v3562
        %v3791 = vpop.f32.mrf.mxu0
        %v3792 = vadd.f32 0.0, %v3791
        %3793 = vmatmul.f32.gmra.mxu0 %v3565
        %v3794 = vpop.f32.mrf.mxu0
        %v3795 = vadd.f32 0.0, %v3794
        %3796 = vmatmul.f32.gmra.mxu0 %v3568
        %v3797 = vpop.f32.mrf.mxu0
        %v3798 = vadd.f32 0.0, %v3797
        %3799 = vmatmul.f32.gmra.mxu0 %v3571
        %v3800 = vpop.f32.mrf.mxu0
        %v3801 = vadd.f32 0.0, %v3800
        %3802 = vmatmul.f32.gmra.mxu0 %v3574
        %v3803 = vpop.f32.mrf.mxu0
        %v3804 = vadd.f32 0.0, %v3803
        %3805 = vmatmul.f32.gmra.mxu0 %v3577
        %v3806 = vpop.f32.mrf.mxu0
        %v3807 = vadd.f32 0.0, %v3806
        %3808 = vmatmul.f32.gmra.mxu0 %v3580
        %v3809 = vpop.f32.mrf.mxu0
        %v3810 = vadd.f32 0.0, %v3809
        %3811 = vmatmul.f32.gmra.mxu0 %v3583
        %v3812 = vpop.f32.mrf.mxu0
        %v3813 = vadd.f32 0.0, %v3812
        %3814 = vmatmul.f32.gmra.mxu0 %v3586
        %v3815 = vpop.f32.mrf.mxu0
        %v3816 = vadd.f32 0.0, %v3815
        %3817 = vmatmul.f32.gmra.mxu0 %v3589
        %v3818 = vpop.f32.mrf.mxu0
        %v3819 = vadd.f32 0.0, %v3818
        %3820 = vmatmul.f32.gmra.mxu0 %v3592
        %v3821 = vpop.f32.mrf.mxu0
        %v3822 = vadd.f32 0.0, %v3821
        %3823 = vdwg.mxu0
        %v3824 = vmul.f32 %v3616, 0.35355338
        %v3825 = vmul.f32 %v3729, 0.35355338
        %v3826 = vmul.f32 %v3619, 0.35355338
        %v3827 = vmul.f32 %v3732, 0.35355338
        %v3828 = vmul.f32 %v3622, 0.35355338
        %v3829 = vmul.f32 %v3735, 0.35355338
        %v3830 = vmul.f32 %v3625, 0.35355338
        %v3831 = vmul.f32 %v3738, 0.35355338
        %v3832 = vmul.f32 %v3628, 0.35355338
        %v3833 = vmul.f32 %v3741, 0.35355338
        %v3834 = vmul.f32 %v3631, 0.35355338
        %v3835 = vmul.f32 %v3744, 0.35355338
        %v3836 = vmul.f32 %v3634, 0.35355338
        %v3837 = vmul.f32 %v3747, 0.35355338
        %v3838 = vmul.f32 %v3637, 0.35355338
        %v3839 = vmul.f32 %v3750, 0.35355338
        %v3840 = vmul.f32 %v3640, 0.35355338
        %v3841 = vmul.f32 %v3753, 0.35355338
        %v3842 = vmul.f32 %v3643, 0.35355338
        %v3843 = vmul.f32 %v3756, 0.35355338
        %v3844 = vmul.f32 %v3646, 0.35355338
        %v3845 = vmul.f32 %v3759, 0.35355338
        %v3846 = vmul.f32 %v3649, 0.35355338
        %v3847 = vmul.f32 %v3762, 0.35355338
        %v3848 = vmul.f32 %v3652, 0.35355338
        %v3849 = vmul.f32 %v3765, 0.35355338
        %v3850 = vmul.f32 %v3655, 0.35355338
        %v3851 = vmul.f32 %v3768, 0.35355338
        %v3852 = vmul.f32 %v3658, 0.35355338
        %v3853 = vmul.f32 %v3771, 0.35355338
        %v3854 = vmul.f32 %v3661, 0.35355338
        %v3855 = vmul.f32 %v3774, 0.35355338
        %v3856 = vmul.f32 %v3664, 0.35355338
        %v3857 = vmul.f32 %v3777, 0.35355338
        %v3858 = vmul.f32 %v3667, 0.35355338
        %v3859 = vmul.f32 %v3780, 0.35355338
        %v3860 = vmul.f32 %v3670, 0.35355338
        %v3861 = vmul.f32 %v3783, 0.35355338
        %v3862 = vmul.f32 %v3673, 0.35355338
        %v3863 = vmul.f32 %v3786, 0.35355338
        %v3864 = vmul.f32 %v3676, 0.35355338
        %v3865 = vmul.f32 %v3789, 0.35355338
        %v3866 = vmul.f32 %v3679, 0.35355338
        %v3867 = vmul.f32 %v3792, 0.35355338
        %v3868 = vmul.f32 %v3682, 0.35355338
        %v3869 = vmul.f32 %v3795, 0.35355338
        %v3870 = vmul.f32 %v3685, 0.35355338
        %v3871 = vmul.f32 %v3798, 0.35355338
        %v3872 = vmul.f32 %v3688, 0.35355338
        %v3873 = vmul.f32 %v3801, 0.35355338
        %v3874 = vmul.f32 %v3691, 0.35355338
        %v3875 = vmul.f32 %v3804, 0.35355338
        %v3876 = vmul.f32 %v3694, 0.35355338
        %v3877 = vmul.f32 %v3807, 0.35355338
        %v3878 = vmul.f32 %v3697, 0.35355338
        %v3879 = vmul.f32 %v3810, 0.35355338
        %v3880 = vmul.f32 %v3700, 0.35355338
        %v3881 = vmul.f32 %v3813, 0.35355338
        %v3882 = vmul.f32 %v3703, 0.35355338
        %v3883 = vmul.f32 %v3816, 0.35355338
        %v3884 = vmul.f32 %v3706, 0.35355338
        %v3885 = vmul.f32 %v3819, 0.35355338
        %v3886 = vmul.f32 %v3709, 0.35355338
        %v3887 = vmul.f32 %v3822, 0.35355338
        %v3888 = vsel %vm638, %v3824, -inf
        %3889 = vmax.xlane.f32.xlu0 %v3888
        %v3890 = vpop.xlane.xlu0 %3889
        %v3891 = vsel %vm638, %v3826, -inf
        %3892 = vmax.xlane.f32.xlu0 %v3891
        %v3893 = vpop.xlane.xlu0 %3892
        %v3894 = vsel %vm638, %v3828, -inf
        %3895 = vmax.xlane.f32.xlu0 %v3894
        %v3896 = vpop.xlane.xlu0 %3895
        %v3897 = vsel %vm638, %v3830, -inf
        %3898 = vmax.xlane.f32.xlu0 %v3897
        %v3899 = vpop.xlane.xlu0 %3898
        %v3900 = vsel %vm638, %v3832, -inf
        %3901 = vmax.xlane.f32.xlu0 %v3900
        %v3902 = vpop.xlane.xlu0 %3901
        %v3903 = vsel %vm638, %v3834, -inf
        %3904 = vmax.xlane.f32.xlu0 %v3903
        %v3905 = vpop.xlane.xlu0 %3904
        %v3906 = vsel %vm638, %v3836, -inf
        %3907 = vmax.xlane.f32.xlu0 %v3906
        %v3908 = vpop.xlane.xlu0 %3907
        %v3909 = vsel %vm638, %v3838, -inf
        %3910 = vmax.xlane.f32.xlu0 %v3909
        %v3911 = vpop.xlane.xlu0 %3910
        %v3912 = vsel %vm638, %v3840, -inf
        %3913 = vmax.xlane.f32.xlu0 %v3912
        %v3914 = vpop.xlane.xlu0 %3913
        %v3915 = vsel %vm638, %v3842, -inf
        %3916 = vmax.xlane.f32.xlu0 %v3915
        %v3917 = vpop.xlane.xlu0 %3916
        %v3918 = vsel %vm638, %v3844, -inf
        %3919 = vmax.xlane.f32.xlu0 %v3918
        %v3920 = vpop.xlane.xlu0 %3919
        %v3921 = vsel %vm638, %v3846, -inf
        %3922 = vmax.xlane.f32.xlu0 %v3921
        %v3923 = vpop.xlane.xlu0 %3922
        %v3924 = vsel %vm638, %v3848, -inf
        %3925 = vmax.xlane.f32.xlu0 %v3924
        %v3926 = vpop.xlane.xlu0 %3925
        %v3927 = vsel %vm638, %v3850, -inf
        %3928 = vmax.xlane.f32.xlu0 %v3927
        %v3929 = vpop.xlane.xlu0 %3928
        %v3930 = vsel %vm638, %v3852, -inf
        %3931 = vmax.xlane.f32.xlu0 %v3930
        %v3932 = vpop.xlane.xlu0 %3931
        %v3933 = vsel %vm638, %v3854, -inf
        %3934 = vmax.xlane.f32.xlu0 %v3933
        %v3935 = vpop.xlane.xlu0 %3934
        %v3936 = vsel %vm638, %v3856, -inf
        %3937 = vmax.xlane.f32.xlu0 %v3936
        %v3938 = vpop.xlane.xlu0 %3937
        %v3939 = vsel %vm638, %v3858, -inf
        %3940 = vmax.xlane.f32.xlu0 %v3939
        %v3941 = vpop.xlane.xlu0 %3940
        %v3942 = vsel %vm638, %v3860, -inf
        %3943 = vmax.xlane.f32.xlu0 %v3942
        %v3944 = vpop.xlane.xlu0 %3943
        %v3945 = vsel %vm638, %v3862, -inf
        %3946 = vmax.xlane.f32.xlu0 %v3945
        %v3947 = vpop.xlane.xlu0 %3946
        %v3948 = vsel %vm638, %v3864, -inf
        %3949 = vmax.xlane.f32.xlu0 %v3948
        %v3950 = vpop.xlane.xlu0 %3949
        %v3951 = vsel %vm638, %v3866, -inf
        %3952 = vmax.xlane.f32.xlu0 %v3951
        %v3953 = vpop.xlane.xlu0 %3952
        %v3954 = vsel %vm638, %v3868, -inf
        %3955 = vmax.xlane.f32.xlu0 %v3954
        %v3956 = vpop.xlane.xlu0 %3955
        %v3957 = vsel %vm638, %v3870, -inf
        %3958 = vmax.xlane.f32.xlu0 %v3957
        %v3959 = vpop.xlane.xlu0 %3958
        %v3960 = vsel %vm638, %v3872, -inf
        %3961 = vmax.xlane.f32.xlu0 %v3960
        %v3962 = vpop.xlane.xlu0 %3961
        %v3963 = vsel %vm638, %v3874, -inf
        %3964 = vmax.xlane.f32.xlu0 %v3963
        %v3965 = vpop.xlane.xlu0 %3964
        %v3966 = vsel %vm638, %v3876, -inf
        %3967 = vmax.xlane.f32.xlu0 %v3966
        %v3968 = vpop.xlane.xlu0 %3967
        %v3969 = vsel %vm638, %v3878, -inf
        %3970 = vmax.xlane.f32.xlu0 %v3969
        %v3971 = vpop.xlane.xlu0 %3970
        %v3972 = vsel %vm638, %v3880, -inf
        %3973 = vmax.xlane.f32.xlu0 %v3972
        %v3974 = vpop.xlane.xlu0 %3973
        %v3975 = vsel %vm638, %v3882, -inf
        %3976 = vmax.xlane.f32.xlu0 %v3975
        %v3977 = vpop.xlane.xlu0 %3976
        %v3978 = vsel %vm638, %v3884, -inf
        %3979 = vmax.xlane.f32.xlu0 %v3978
        %v3980 = vpop.xlane.xlu0 %3979
        %v3981 = vsel %vm638, %v3886, -inf
        %3982 = vmax.xlane.f32.xlu0 %v3981
        %v3983 = vpop.xlane.xlu0 %3982
        %v3984 = vsub.f32 %v3824, %v3890
        %v3985 = vsub.f32 %v3826, %v3893
        %v3986 = vsub.f32 %v3828, %v3896
        %v3987 = vsub.f32 %v3830, %v3899
        %v3988 = vsub.f32 %v3832, %v3902
        %v3989 = vsub.f32 %v3834, %v3905
        %v3990 = vsub.f32 %v3836, %v3908
        %v3991 = vsub.f32 %v3838, %v3911
        %v3992 = vsub.f32 %v3840, %v3914
        %v3993 = vsub.f32 %v3842, %v3917
        %v3994 = vsub.f32 %v3844, %v3920
        %v3995 = vsub.f32 %v3846, %v3923
        %v3996 = vsub.f32 %v3848, %v3926
        %v3997 = vsub.f32 %v3850, %v3929
        %v3998 = vsub.f32 %v3852, %v3932
        %v3999 = vsub.f32 %v3854, %v3935
        %v4000 = vsub.f32 %v3856, %v3938
        %v4001 = vsub.f32 %v3858, %v3941
        %v4002 = vsub.f32 %v3860, %v3944
        %v4003 = vsub.f32 %v3862, %v3947
        %v4004 = vsub.f32 %v3864, %v3950
        %v4005 = vsub.f32 %v3866, %v3953
        %v4006 = vsub.f32 %v3868, %v3956
        %v4007 = vsub.f32 %v3870, %v3959
        %v4008 = vsub.f32 %v3872, %v3962
        %v4009 = vsub.f32 %v3874, %v3965
        %v4010 = vsub.f32 %v3876, %v3968
        %v4011 = vsub.f32 %v3878, %v3971
        %v4012 = vsub.f32 %v3880, %v3974
        %v4013 = vsub.f32 %v3882, %v3977
        %v4014 = vsub.f32 %v3884, %v3980
        %v4015 = vsub.f32 %v3886, %v3983
        %v4016 = vmul.f32 %v3984, 1.442695
        %v4017 = vpow.pop %v4016
        %v4018 = vmul.f32 %v3985, 1.442695
        %v4019 = vpow.pop %v4018
        %v4020 = vmul.f32 %v3986, 1.442695
        %v4021 = vpow.pop %v4020
        %v4022 = vmul.f32 %v3987, 1.442695
        %v4023 = vpow.pop %v4022
        %v4024 = vmul.f32 %v3988, 1.442695
        %v4025 = vpow.pop %v4024
        %v4026 = vmul.f32 %v3989, 1.442695
        %v4027 = vpow.pop %v4026
        %v4028 = vmul.f32 %v3990, 1.442695
        %v4029 = vpow.pop %v4028
        %v4030 = vmul.f32 %v3991, 1.442695
        %v4031 = vpow.pop %v4030
        %v4032 = vmul.f32 %v3992, 1.442695
        %v4033 = vpow.pop %v4032
        %v4034 = vmul.f32 %v3993, 1.442695
        %v4035 = vpow.pop %v4034
        %v4036 = vmul.f32 %v3994, 1.442695
        %v4037 = vpow.pop %v4036
        %v4038 = vmul.f32 %v3995, 1.442695
        %v4039 = vpow.pop %v4038
        %v4040 = vmul.f32 %v3996, 1.442695
        %v4041 = vpow.pop %v4040
        %v4042 = vmul.f32 %v3997, 1.442695
        %v4043 = vpow.pop %v4042
        %v4044 = vmul.f32 %v3998, 1.442695
        %v4045 = vpow.pop %v4044
        %v4046 = vmul.f32 %v3999, 1.442695
        %v4047 = vpow.pop %v4046
        %v4048 = vmul.f32 %v4000, 1.442695
        %v4049 = vpow.pop %v4048
        %v4050 = vmul.f32 %v4001, 1.442695
        %v4051 = vpow.pop %v4050
        %v4052 = vmul.f32 %v4002, 1.442695
        %v4053 = vpow.pop %v4052
        %v4054 = vmul.f32 %v4003, 1.442695
        %v4055 = vpow.pop %v4054
        %v4056 = vmul.f32 %v4004, 1.442695
        %v4057 = vpow.pop %v4056
        %v4058 = vmul.f32 %v4005, 1.442695
        %v4059 = vpow.pop %v4058
        %v4060 = vmul.f32 %v4006, 1.442695
        %v4061 = vpow.pop %v4060
        %v4062 = vmul.f32 %v4007, 1.442695
        %v4063 = vpow.pop %v4062
        %v4064 = vmul.f32 %v4008, 1.442695
        %v4065 = vpow.pop %v4064
        %v4066 = vmul.f32 %v4009, 1.442695
        %v4067 = vpow.pop %v4066
        %v4068 = vmul.f32 %v4010, 1.442695
        %v4069 = vpow.pop %v4068
        %v4070 = vmul.f32 %v4011, 1.442695
        %v4071 = vpow.pop %v4070
        %v4072 = vmul.f32 %v4012, 1.442695
        %v4073 = vpow.pop %v4072
        %v4074 = vmul.f32 %v4013, 1.442695
        %v4075 = vpow.pop %v4074
        %v4076 = vmul.f32 %v4014, 1.442695
        %v4077 = vpow.pop %v4076
        %v4078 = vmul.f32 %v4015, 1.442695
        %v4079 = vpow.pop %v4078
        %v4080 = vsel %vm638, %v4017, 0.0
        %4081 = vadd.xlane.f32.xlu0 %v4080
        %v4082 = vpop.xlane.xlu0 %4081
        %v4083 = vsel %vm638, %v4019, 0.0
        %4084 = vadd.xlane.f32.xlu0 %v4083
        %v4085 = vpop.xlane.xlu0 %4084
        %v4086 = vsel %vm638, %v4021, 0.0
        %4087 = vadd.xlane.f32.xlu0 %v4086
        %v4088 = vpop.xlane.xlu0 %4087
        %v4089 = vsel %vm638, %v4023, 0.0
        %4090 = vadd.xlane.f32.xlu0 %v4089
        %v4091 = vpop.xlane.xlu0 %4090
        %v4092 = vsel %vm638, %v4025, 0.0
        %4093 = vadd.xlane.f32.xlu0 %v4092
        %v4094 = vpop.xlane.xlu0 %4093
        %v4095 = vsel %vm638, %v4027, 0.0
        %4096 = vadd.xlane.f32.xlu0 %v4095
        %v4097 = vpop.xlane.xlu0 %4096
        %v4098 = vsel %vm638, %v4029, 0.0
        %4099 = vadd.xlane.f32.xlu0 %v4098
        %v4100 = vpop.xlane.xlu0 %4099
        %v4101 = vsel %vm638, %v4031, 0.0
        %4102 = vadd.xlane.f32.xlu0 %v4101
        %v4103 = vpop.xlane.xlu0 %4102
        %v4104 = vsel %vm638, %v4033, 0.0
        %4105 = vadd.xlane.f32.xlu0 %v4104
        %v4106 = vpop.xlane.xlu0 %4105
        %v4107 = vsel %vm638, %v4035, 0.0
        %4108 = vadd.xlane.f32.xlu0 %v4107
        %v4109 = vpop.xlane.xlu0 %4108
        %v4110 = vsel %vm638, %v4037, 0.0
        %4111 = vadd.xlane.f32.xlu0 %v4110
        %v4112 = vpop.xlane.xlu0 %4111
        %v4113 = vsel %vm638, %v4039, 0.0
        %4114 = vadd.xlane.f32.xlu0 %v4113
        %v4115 = vpop.xlane.xlu0 %4114
        %v4116 = vsel %vm638, %v4041, 0.0
        %4117 = vadd.xlane.f32.xlu0 %v4116
        %v4118 = vpop.xlane.xlu0 %4117
        %v4119 = vsel %vm638, %v4043, 0.0
        %4120 = vadd.xlane.f32.xlu0 %v4119
        %v4121 = vpop.xlane.xlu0 %4120
        %v4122 = vsel %vm638, %v4045, 0.0
        %4123 = vadd.xlane.f32.xlu0 %v4122
        %v4124 = vpop.xlane.xlu0 %4123
        %v4125 = vsel %vm638, %v4047, 0.0
        %4126 = vadd.xlane.f32.xlu0 %v4125
        %v4127 = vpop.xlane.xlu0 %4126
        %v4128 = vsel %vm638, %v4049, 0.0
        %4129 = vadd.xlane.f32.xlu0 %v4128
        %v4130 = vpop.xlane.xlu0 %4129
        %v4131 = vsel %vm638, %v4051, 0.0
        %4132 = vadd.xlane.f32.xlu0 %v4131
        %v4133 = vpop.xlane.xlu0 %4132
        %v4134 = vsel %vm638, %v4053, 0.0
        %4135 = vadd.xlane.f32.xlu0 %v4134
        %v4136 = vpop.xlane.xlu0 %4135
        %v4137 = vsel %vm638, %v4055, 0.0
        %4138 = vadd.xlane.f32.xlu0 %v4137
        %v4139 = vpop.xlane.xlu0 %4138
        %v4140 = vsel %vm638, %v4057, 0.0
        %4141 = vadd.xlane.f32.xlu0 %v4140
        %v4142 = vpop.xlane.xlu0 %4141
        %v4143 = vsel %vm638, %v4059, 0.0
        %4144 = vadd.xlane.f32.xlu0 %v4143
        %v4145 = vpop.xlane.xlu0 %4144
        %v4146 = vsel %vm638, %v4061, 0.0
        %4147 = vadd.xlane.f32.xlu0 %v4146
        %v4148 = vpop.xlane.xlu0 %4147
        %v4149 = vsel %vm638, %v4063, 0.0
        %4150 = vadd.xlane.f32.xlu0 %v4149
        %v4151 = vpop.xlane.xlu0 %4150
        %v4152 = vsel %vm638, %v4065, 0.0
        %4153 = vadd.xlane.f32.xlu0 %v4152
        %v4154 = vpop.xlane.xlu0 %4153
        %v4155 = vsel %vm638, %v4067, 0.0
        %4156 = vadd.xlane.f32.xlu0 %v4155
        %v4157 = vpop.xlane.xlu0 %4156
        %v4158 = vsel %vm638, %v4069, 0.0
        %4159 = vadd.xlane.f32.xlu0 %v4158
        %v4160 = vpop.xlane.xlu0 %4159
        %v4161 = vsel %vm638, %v4071, 0.0
        %4162 = vadd.xlane.f32.xlu0 %v4161
        %v4163 = vpop.xlane.xlu0 %4162
        %v4164 = vsel %vm638, %v4073, 0.0
        %4165 = vadd.xlane.f32.xlu0 %v4164
        %v4166 = vpop.xlane.xlu0 %4165
        %v4167 = vsel %vm638, %v4075, 0.0
        %4168 = vadd.xlane.f32.xlu0 %v4167
        %v4169 = vpop.xlane.xlu0 %4168
        %v4170 = vsel %vm638, %v4077, 0.0
        %4171 = vadd.xlane.f32.xlu0 %v4170
        %v4172 = vpop.xlane.xlu0 %4171
        %v4173 = vsel %vm638, %v4079, 0.0
        %4174 = vadd.xlane.f32.xlu0 %v4173
        %v4175 = vpop.xlane.xlu0 %4174
        %v4176 = vrcp.pop %v4082
        %v4177 = vrcp.pop %v4085
        %v4178 = vrcp.pop %v4088
        %v4179 = vrcp.pop %v4091
        %v4180 = vrcp.pop %v4094
        %v4181 = vrcp.pop %v4097
        %v4182 = vrcp.pop %v4100
        %v4183 = vrcp.pop %v4103
        %v4184 = vrcp.pop %v4106
        %v4185 = vrcp.pop %v4109
        %v4186 = vrcp.pop %v4112
        %v4187 = vrcp.pop %v4115
        %v4188 = vrcp.pop %v4118
        %v4189 = vrcp.pop %v4121
        %v4190 = vrcp.pop %v4124
        %v4191 = vrcp.pop %v4127
        %v4192 = vrcp.pop %v4130
        %v4193 = vrcp.pop %v4133
        %v4194 = vrcp.pop %v4136
        %v4195 = vrcp.pop %v4139
        %v4196 = vrcp.pop %v4142
        %v4197 = vrcp.pop %v4145
        %v4198 = vrcp.pop %v4148
        %v4199 = vrcp.pop %v4151
        %v4200 = vrcp.pop %v4154
        %v4201 = vrcp.pop %v4157
        %v4202 = vrcp.pop %v4160
        %v4203 = vrcp.pop %v4163
        %v4204 = vrcp.pop %v4166
        %v4205 = vrcp.pop %v4169
        %v4206 = vrcp.pop %v4172
        %v4207 = vrcp.pop %v4175
        %v4208 = vmul.f32 %v4017, %v4176
        %v4209 = vmul.f32 %v4019, %v4177
        %v4210 = vmul.f32 %v4021, %v4178
        %v4211 = vmul.f32 %v4023, %v4179
        %v4212 = vmul.f32 %v4025, %v4180
        %v4213 = vmul.f32 %v4027, %v4181
        %v4214 = vmul.f32 %v4029, %v4182
        %v4215 = vmul.f32 %v4031, %v4183
        %v4216 = vmul.f32 %v4033, %v4184
        %v4217 = vmul.f32 %v4035, %v4185
        %v4218 = vmul.f32 %v4037, %v4186
        %v4219 = vmul.f32 %v4039, %v4187
        %v4220 = vmul.f32 %v4041, %v4188
        %v4221 = vmul.f32 %v4043, %v4189
        %v4222 = vmul.f32 %v4045, %v4190
        %v4223 = vmul.f32 %v4047, %v4191
        %v4224 = vmul.f32 %v4049, %v4192
        %v4225 = vmul.f32 %v4051, %v4193
        %v4226 = vmul.f32 %v4053, %v4194
        %v4227 = vmul.f32 %v4055, %v4195
        %v4228 = vmul.f32 %v4057, %v4196
        %v4229 = vmul.f32 %v4059, %v4197
        %v4230 = vmul.f32 %v4061, %v4198
        %v4231 = vmul.f32 %v4063, %v4199
        %v4232 = vmul.f32 %v4065, %v4200
        %v4233 = vmul.f32 %v4067, %v4201
        %v4234 = vmul.f32 %v4069, %v4202
        %v4235 = vmul.f32 %v4071, %v4203
        %v4236 = vmul.f32 %v4073, %v4204
        %v4237 = vmul.f32 %v4075, %v4205
        %v4238 = vmul.f32 %v4077, %v4206
        %v4239 = vmul.f32 %v4079, %v4207
        %v4240 = vsel %vm638, %v4208, 0.0
        %v4241 = vsel %vm638, %v4216, 0.0
        %v4242 = vadd.f32 %v4240, %v4241
        %v4243 = vsel %vm638, %v4224, 0.0
        %v4244 = vadd.f32 %v4242, %v4243
        %v4245 = vsel %vm638, %v4232, 0.0
        %v4246 = vadd.f32 %v4244, %v4245
        %v4247 = vsel %vm638, %v4209, 0.0
        %v4248 = vsel %vm638, %v4217, 0.0
        %v4249 = vadd.f32 %v4247, %v4248
        %v4250 = vsel %vm638, %v4225, 0.0
        %v4251 = vadd.f32 %v4249, %v4250
        %v4252 = vsel %vm638, %v4233, 0.0
        %v4253 = vadd.f32 %v4251, %v4252
        %v4254 = vsel %vm638, %v4210, 0.0
        %v4255 = vsel %vm638, %v4218, 0.0
        %v4256 = vadd.f32 %v4254, %v4255
        %v4257 = vsel %vm638, %v4226, 0.0
        %v4258 = vadd.f32 %v4256, %v4257
        %v4259 = vsel %vm638, %v4234, 0.0
        %v4260 = vadd.f32 %v4258, %v4259
        %v4261 = vsel %vm638, %v4211, 0.0
        %v4262 = vsel %vm638, %v4219, 0.0
        %v4263 = vadd.f32 %v4261, %v4262
        %v4264 = vsel %vm638, %v4227, 0.0
        %v4265 = vadd.f32 %v4263, %v4264
        %v4266 = vsel %vm638, %v4235, 0.0
        %v4267 = vadd.f32 %v4265, %v4266
        %v4268 = vsel %vm638, %v4212, 0.0
        %v4269 = vsel %vm638, %v4220, 0.0
        %v4270 = vadd.f32 %v4268, %v4269
        %v4271 = vsel %vm638, %v4228, 0.0
        %v4272 = vadd.f32 %v4270, %v4271
        %v4273 = vsel %vm638, %v4236, 0.0
        %v4274 = vadd.f32 %v4272, %v4273
        %v4275 = vsel %vm638, %v4213, 0.0
        %v4276 = vsel %vm638, %v4221, 0.0
        %v4277 = vadd.f32 %v4275, %v4276
        %v4278 = vsel %vm638, %v4229, 0.0
        %v4279 = vadd.f32 %v4277, %v4278
        %v4280 = vsel %vm638, %v4237, 0.0
        %v4281 = vadd.f32 %v4279, %v4280
        %v4282 = vsel %vm638, %v4214, 0.0
        %v4283 = vsel %vm638, %v4222, 0.0
        %v4284 = vadd.f32 %v4282, %v4283
        %v4285 = vsel %vm638, %v4230, 0.0
        %v4286 = vadd.f32 %v4284, %v4285
        %v4287 = vsel %vm638, %v4238, 0.0
        %v4288 = vadd.f32 %v4286, %v4287
        %v4289 = vsel %vm638, %v4215, 0.0
        %v4290 = vsel %vm638, %v4223, 0.0
        %v4291 = vadd.f32 %v4289, %v4290
        %v4292 = vsel %vm638, %v4231, 0.0
        %v4293 = vadd.f32 %v4291, %v4292
        %v4294 = vsel %vm638, %v4239, 0.0
        %v4295 = vadd.f32 %v4293, %v4294
        %s4296 = scalar_lea.vmem %s208, 160
        %v4297 = vld [vmem:[%s4296] sm:$0xff]
        %v4298 = vld [vmem:[%s4296 + $0x8] sm:$0xff]
        %v4299 = vld [vmem:[%s4296 + $0x10] sm:$0xff]
        %v4300 = vld [vmem:[%s4296 + $0x18] sm:$0xff]
        %v4301 = vld [vmem:[%s4296 + $0x20] sm:$0xf]
        %v4302 = vsel %vm1052, %v3824, -inf
        %4303 = vmax.xlane.f32.xlu0 %v4302
        %v4304 = vpop.xlane.xlu0 %4303
        %v4305 = vsel %vm1052, %v3826, -inf
        %4306 = vmax.xlane.f32.xlu0 %v4305
        %v4307 = vpop.xlane.xlu0 %4306
        %v4308 = vsel %vm1052, %v3828, -inf
        %4309 = vmax.xlane.f32.xlu0 %v4308
        %v4310 = vpop.xlane.xlu0 %4309
        %v4311 = vsel %vm1052, %v3830, -inf
        %4312 = vmax.xlane.f32.xlu0 %v4311
        %v4313 = vpop.xlane.xlu0 %4312
        %v4314 = vsel %vm1052, %v3832, -inf
        %4315 = vmax.xlane.f32.xlu0 %v4314
        %v4316 = vpop.xlane.xlu0 %4315
        %v4317 = vsel %vm1052, %v3834, -inf
        %4318 = vmax.xlane.f32.xlu0 %v4317
        %v4319 = vpop.xlane.xlu0 %4318
        %v4320 = vsel %vm1052, %v3836, -inf
        %4321 = vmax.xlane.f32.xlu0 %v4320
        %v4322 = vpop.xlane.xlu0 %4321
        %v4323 = vsel %vm1052, %v3838, -inf
        %4324 = vmax.xlane.f32.xlu0 %v4323
        %v4325 = vpop.xlane.xlu0 %4324
        %v4326 = vsel %vm1052, %v3840, -inf
        %4327 = vmax.xlane.f32.xlu0 %v4326
        %v4328 = vpop.xlane.xlu0 %4327
        %v4329 = vsel %vm1052, %v3842, -inf
        %4330 = vmax.xlane.f32.xlu0 %v4329
        %v4331 = vpop.xlane.xlu0 %4330
        %v4332 = vsel %vm1052, %v3844, -inf
        %4333 = vmax.xlane.f32.xlu0 %v4332
        %v4334 = vpop.xlane.xlu0 %4333
        %v4335 = vsel %vm1052, %v3846, -inf
        %4336 = vmax.xlane.f32.xlu0 %v4335
        %v4337 = vpop.xlane.xlu0 %4336
        %v4338 = vsel %vm1052, %v3848, -inf
        %4339 = vmax.xlane.f32.xlu0 %v4338
        %v4340 = vpop.xlane.xlu0 %4339
        %v4341 = vsel %vm1052, %v3850, -inf
        %4342 = vmax.xlane.f32.xlu0 %v4341
        %v4343 = vpop.xlane.xlu0 %4342
        %v4344 = vsel %vm1052, %v3852, -inf
        %4345 = vmax.xlane.f32.xlu0 %v4344
        %v4346 = vpop.xlane.xlu0 %4345
        %v4347 = vsel %vm1052, %v3854, -inf
        %4348 = vmax.xlane.f32.xlu0 %v4347
        %v4349 = vpop.xlane.xlu0 %4348
        %v4350 = vsel %vm1052, %v3856, -inf
        %4351 = vmax.xlane.f32.xlu0 %v4350
        %v4352 = vpop.xlane.xlu0 %4351
        %v4353 = vsel %vm1052, %v3858, -inf
        %4354 = vmax.xlane.f32.xlu0 %v4353
        %v4355 = vpop.xlane.xlu0 %4354
        %v4356 = vsel %vm1052, %v3860, -inf
        %4357 = vmax.xlane.f32.xlu0 %v4356
        %v4358 = vpop.xlane.xlu0 %4357
        %v4359 = vsel %vm1052, %v3862, -inf
        %4360 = vmax.xlane.f32.xlu0 %v4359
        %v4361 = vpop.xlane.xlu0 %4360
        %v4362 = vsel %vm1052, %v3864, -inf
        %4363 = vmax.xlane.f32.xlu0 %v4362
        %v4364 = vpop.xlane.xlu0 %4363
        %v4365 = vsel %vm1052, %v3866, -inf
        %4366 = vmax.xlane.f32.xlu0 %v4365
        %v4367 = vpop.xlane.xlu0 %4366
        %v4368 = vsel %vm1052, %v3868, -inf
        %4369 = vmax.xlane.f32.xlu0 %v4368
        %v4370 = vpop.xlane.xlu0 %4369
        %v4371 = vsel %vm1052, %v3870, -inf
        %4372 = vmax.xlane.f32.xlu0 %v4371
        %v4373 = vpop.xlane.xlu0 %4372
        %v4374 = vsel %vm1052, %v3872, -inf
        %4375 = vmax.xlane.f32.xlu0 %v4374
        %v4376 = vpop.xlane.xlu0 %4375
        %v4377 = vsel %vm1052, %v3874, -inf
        %4378 = vmax.xlane.f32.xlu0 %v4377
        %v4379 = vpop.xlane.xlu0 %4378
        %v4380 = vsel %vm1052, %v3876, -inf
        %4381 = vmax.xlane.f32.xlu0 %v4380
        %v4382 = vpop.xlane.xlu0 %4381
        %v4383 = vsel %vm1052, %v3878, -inf
        %4384 = vmax.xlane.f32.xlu0 %v4383
        %v4385 = vpop.xlane.xlu0 %4384
        %v4386 = vsel %vm1052, %v3880, -inf
        %4387 = vmax.xlane.f32.xlu0 %v4386
        %v4388 = vpop.xlane.xlu0 %4387
        %v4389 = vsel %vm1052, %v3882, -inf
        %4390 = vmax.xlane.f32.xlu0 %v4389
        %v4391 = vpop.xlane.xlu0 %4390
        %v4392 = vsel %vm1052, %v3884, -inf
        %4393 = vmax.xlane.f32.xlu0 %v4392
        %v4394 = vpop.xlane.xlu0 %4393
        %v4395 = vsel %vm1052, %v3886, -inf
        %4396 = vmax.xlane.f32.xlu0 %v4395
        %v4397 = vpop.xlane.xlu0 %4396
        %v4398 = vsub.f32 %v3824, %v4304
        %v4399 = vsub.f32 %v3826, %v4307
        %v4400 = vsub.f32 %v3828, %v4310
        %v4401 = vsub.f32 %v3830, %v4313
        %v4402 = vsub.f32 %v3832, %v4316
        %v4403 = vsub.f32 %v3834, %v4319
        %v4404 = vsub.f32 %v3836, %v4322
        %v4405 = vsub.f32 %v3838, %v4325
        %v4406 = vsub.f32 %v3840, %v4328
        %v4407 = vsub.f32 %v3842, %v4331
        %v4408 = vsub.f32 %v3844, %v4334
        %v4409 = vsub.f32 %v3846, %v4337
        %v4410 = vsub.f32 %v3848, %v4340
        %v4411 = vsub.f32 %v3850, %v4343
        %v4412 = vsub.f32 %v3852, %v4346
        %v4413 = vsub.f32 %v3854, %v4349
        %v4414 = vsub.f32 %v3856, %v4352
        %v4415 = vsub.f32 %v3858, %v4355
        %v4416 = vsub.f32 %v3860, %v4358
        %v4417 = vsub.f32 %v3862, %v4361
        %v4418 = vsub.f32 %v3864, %v4364
        %v4419 = vsub.f32 %v3866, %v4367
        %v4420 = vsub.f32 %v3868, %v4370
        %v4421 = vsub.f32 %v3870, %v4373
        %v4422 = vsub.f32 %v3872, %v4376
        %v4423 = vsub.f32 %v3874, %v4379
        %v4424 = vsub.f32 %v3876, %v4382
        %v4425 = vsub.f32 %v3878, %v4385
        %v4426 = vsub.f32 %v3880, %v4388
        %v4427 = vsub.f32 %v3882, %v4391
        %v4428 = vsub.f32 %v3884, %v4394
        %v4429 = vsub.f32 %v3886, %v4397
        %v4430 = vmul.f32 %v4398, 1.442695
        %v4431 = vpow.pop %v4430
        %v4432 = vmul.f32 %v4399, 1.442695
        %v4433 = vpow.pop %v4432
        %v4434 = vmul.f32 %v4400, 1.442695
        %v4435 = vpow.pop %v4434
        %v4436 = vmul.f32 %v4401, 1.442695
        %v4437 = vpow.pop %v4436
        %v4438 = vmul.f32 %v4402, 1.442695
        %v4439 = vpow.pop %v4438
        %v4440 = vmul.f32 %v4403, 1.442695
        %v4441 = vpow.pop %v4440
        %v4442 = vmul.f32 %v4404, 1.442695
        %v4443 = vpow.pop %v4442
        %v4444 = vmul.f32 %v4405, 1.442695
        %v4445 = vpow.pop %v4444
        %v4446 = vmul.f32 %v4406, 1.442695
        %v4447 = vpow.pop %v4446
        %v4448 = vmul.f32 %v4407, 1.442695
        %v4449 = vpow.pop %v4448
        %v4450 = vmul.f32 %v4408, 1.442695
        %v4451 = vpow.pop %v4450
        %v4452 = vmul.f32 %v4409, 1.442695
        %v4453 = vpow.pop %v4452
        %v4454 = vmul.f32 %v4410, 1.442695
        %v4455 = vpow.pop %v4454
        %v4456 = vmul.f32 %v4411, 1.442695
        %v4457 = vpow.pop %v4456
        %v4458 = vmul.f32 %v4412, 1.442695
        %v4459 = vpow.pop %v4458
        %v4460 = vmul.f32 %v4413, 1.442695
        %v4461 = vpow.pop %v4460
        %v4462 = vmul.f32 %v4414, 1.442695
        %v4463 = vpow.pop %v4462
        %v4464 = vmul.f32 %v4415, 1.442695
        %v4465 = vpow.pop %v4464
        %v4466 = vmul.f32 %v4416, 1.442695
        %v4467 = vpow.pop %v4466
        %v4468 = vmul.f32 %v4417, 1.442695
        %v4469 = vpow.pop %v4468
        %v4470 = vmul.f32 %v4418, 1.442695
        %v4471 = vpow.pop %v4470
        %v4472 = vmul.f32 %v4419, 1.442695
        %v4473 = vpow.pop %v4472
        %v4474 = vmul.f32 %v4420, 1.442695
        %v4475 = vpow.pop %v4474
        %v4476 = vmul.f32 %v4421, 1.442695
        %v4477 = vpow.pop %v4476
        %v4478 = vmul.f32 %v4422, 1.442695
        %v4479 = vpow.pop %v4478
        %v4480 = vmul.f32 %v4423, 1.442695
        %v4481 = vpow.pop %v4480
        %v4482 = vmul.f32 %v4424, 1.442695
        %v4483 = vpow.pop %v4482
        %v4484 = vmul.f32 %v4425, 1.442695
        %v4485 = vpow.pop %v4484
        %v4486 = vmul.f32 %v4426, 1.442695
        %v4487 = vpow.pop %v4486
        %v4488 = vmul.f32 %v4427, 1.442695
        %v4489 = vpow.pop %v4488
        %v4490 = vmul.f32 %v4428, 1.442695
        %v4491 = vpow.pop %v4490
        %v4492 = vmul.f32 %v4429, 1.442695
        %v4493 = vpow.pop %v4492
        %4526 = vrot.lane.b32.xlu0 %v4431, 92
        %v4527 = vpop.permute.xlu0 %4526
        %4528 = vrot.lane.b32.xlu0 %v4433, 92
        %v4529 = vpop.permute.xlu0 %4528
        %4530 = vrot.lane.b32.xlu0 %v4435, 92
        %v4531 = vpop.permute.xlu0 %4530
        %4532 = vrot.lane.b32.xlu0 %v4437, 92
        %v4533 = vpop.permute.xlu0 %4532
        %4534 = vrot.lane.b32.xlu0 %v4439, 92
        %v4535 = vpop.permute.xlu0 %4534
        %4536 = vrot.lane.b32.xlu0 %v4441, 92
        %v4537 = vpop.permute.xlu0 %4536
        %4538 = vrot.lane.b32.xlu0 %v4443, 92
        %v4539 = vpop.permute.xlu0 %4538
        %4540 = vrot.lane.b32.xlu0 %v4445, 92
        %v4541 = vpop.permute.xlu0 %4540
        %4542 = vrot.lane.b32.xlu0 %v4447, 92
        %v4543 = vpop.permute.xlu0 %4542
        %4544 = vrot.lane.b32.xlu0 %v4449, 92
        %v4545 = vpop.permute.xlu0 %4544
        %4546 = vrot.lane.b32.xlu0 %v4451, 92
        %v4547 = vpop.permute.xlu0 %4546
        %4548 = vrot.lane.b32.xlu0 %v4453, 92
        %v4549 = vpop.permute.xlu0 %4548
        %4550 = vrot.lane.b32.xlu0 %v4455, 92
        %v4551 = vpop.permute.xlu0 %4550
        %4552 = vrot.lane.b32.xlu0 %v4457, 92
        %v4553 = vpop.permute.xlu0 %4552
        %4554 = vrot.lane.b32.xlu0 %v4459, 92
        %v4555 = vpop.permute.xlu0 %4554
        %4556 = vrot.lane.b32.xlu0 %v4461, 92
        %v4557 = vpop.permute.xlu0 %4556
        %4558 = vrot.lane.b32.xlu0 %v4463, 92
        %v4559 = vpop.permute.xlu0 %4558
        %4560 = vrot.lane.b32.xlu0 %v4465, 92
        %v4561 = vpop.permute.xlu0 %4560
        %4562 = vrot.lane.b32.xlu0 %v4467, 92
        %v4563 = vpop.permute.xlu0 %4562
        %4564 = vrot.lane.b32.xlu0 %v4469, 92
        %v4565 = vpop.permute.xlu0 %4564
        %4566 = vrot.lane.b32.xlu0 %v4471, 92
        %v4567 = vpop.permute.xlu0 %4566
        %4568 = vrot.lane.b32.xlu0 %v4473, 92
        %v4569 = vpop.permute.xlu0 %4568
        %4570 = vrot.lane.b32.xlu0 %v4475, 92
        %v4571 = vpop.permute.xlu0 %4570
        %4572 = vrot.lane.b32.xlu0 %v4477, 92
        %v4573 = vpop.permute.xlu0 %4572
        %4574 = vrot.lane.b32.xlu0 %v4479, 92
        %v4575 = vpop.permute.xlu0 %4574
        %4576 = vrot.lane.b32.xlu0 %v4481, 92
        %v4577 = vpop.permute.xlu0 %4576
        %4578 = vrot.lane.b32.xlu0 %v4483, 92
        %v4579 = vpop.permute.xlu0 %4578
        %4580 = vrot.lane.b32.xlu0 %v4485, 92
        %v4581 = vpop.permute.xlu0 %4580
        %4582 = vrot.lane.b32.xlu0 %v4487, 92
        %v4583 = vpop.permute.xlu0 %4582
        %4584 = vrot.lane.b32.xlu0 %v4489, 92
        %v4585 = vpop.permute.xlu0 %4584
        %4586 = vrot.lane.b32.xlu0 %v4491, 92
        %v4587 = vpop.permute.xlu0 %4586
        %4588 = vrot.lane.b32.xlu0 %v4493, 92
        %v4589 = vpop.permute.xlu0 %4588
        %v4622 = vsel %vm638, %v4527, 0.0
        %4623 = vadd.xlane.f32.xlu0 %v4622
        %v4624 = vpop.xlane.xlu0 %4623
        %v4625 = vsel %vm638, %v4529, 0.0
        %4626 = vadd.xlane.f32.xlu0 %v4625
        %v4627 = vpop.xlane.xlu0 %4626
        %v4628 = vsel %vm638, %v4531, 0.0
        %4629 = vadd.xlane.f32.xlu0 %v4628
        %v4630 = vpop.xlane.xlu0 %4629
        %v4631 = vsel %vm638, %v4533, 0.0
        %4632 = vadd.xlane.f32.xlu0 %v4631
        %v4633 = vpop.xlane.xlu0 %4632
        %v4634 = vsel %vm638, %v4535, 0.0
        %4635 = vadd.xlane.f32.xlu0 %v4634
        %v4636 = vpop.xlane.xlu0 %4635
        %v4637 = vsel %vm638, %v4537, 0.0
        %4638 = vadd.xlane.f32.xlu0 %v4637
        %v4639 = vpop.xlane.xlu0 %4638
        %v4640 = vsel %vm638, %v4539, 0.0
        %4641 = vadd.xlane.f32.xlu0 %v4640
        %v4642 = vpop.xlane.xlu0 %4641
        %v4643 = vsel %vm638, %v4541, 0.0
        %4644 = vadd.xlane.f32.xlu0 %v4643
        %v4645 = vpop.xlane.xlu0 %4644
        %v4646 = vsel %vm638, %v4543, 0.0
        %4647 = vadd.xlane.f32.xlu0 %v4646
        %v4648 = vpop.xlane.xlu0 %4647
        %v4649 = vsel %vm638, %v4545, 0.0
        %4650 = vadd.xlane.f32.xlu0 %v4649
        %v4651 = vpop.xlane.xlu0 %4650
        %v4652 = vsel %vm638, %v4547, 0.0
        %4653 = vadd.xlane.f32.xlu0 %v4652
        %v4654 = vpop.xlane.xlu0 %4653
        %v4655 = vsel %vm638, %v4549, 0.0
        %4656 = vadd.xlane.f32.xlu0 %v4655
        %v4657 = vpop.xlane.xlu0 %4656
        %v4658 = vsel %vm638, %v4551, 0.0
        %4659 = vadd.xlane.f32.xlu0 %v4658
        %v4660 = vpop.xlane.xlu0 %4659
        %v4661 = vsel %vm638, %v4553, 0.0
        %4662 = vadd.xlane.f32.xlu0 %v4661
        %v4663 = vpop.xlane.xlu0 %4662
        %v4664 = vsel %vm638, %v4555, 0.0
        %4665 = vadd.xlane.f32.xlu0 %v4664
        %v4666 = vpop.xlane.xlu0 %4665
        %v4667 = vsel %vm638, %v4557, 0.0
        %4668 = vadd.xlane.f32.xlu0 %v4667
        %v4669 = vpop.xlane.xlu0 %4668
        %v4670 = vsel %vm638, %v4559, 0.0
        %4671 = vadd.xlane.f32.xlu0 %v4670
        %v4672 = vpop.xlane.xlu0 %4671
        %v4673 = vsel %vm638, %v4561, 0.0
        %4674 = vadd.xlane.f32.xlu0 %v4673
        %v4675 = vpop.xlane.xlu0 %4674
        %v4676 = vsel %vm638, %v4563, 0.0
        %4677 = vadd.xlane.f32.xlu0 %v4676
        %v4678 = vpop.xlane.xlu0 %4677
        %v4679 = vsel %vm638, %v4565, 0.0
        %4680 = vadd.xlane.f32.xlu0 %v4679
        %v4681 = vpop.xlane.xlu0 %4680
        %v4682 = vsel %vm638, %v4567, 0.0
        %4683 = vadd.xlane.f32.xlu0 %v4682
        %v4684 = vpop.xlane.xlu0 %4683
        %v4685 = vsel %vm638, %v4569, 0.0
        %4686 = vadd.xlane.f32.xlu0 %v4685
        %v4687 = vpop.xlane.xlu0 %4686
        %v4688 = vsel %vm638, %v4571, 0.0
        %4689 = vadd.xlane.f32.xlu0 %v4688
        %v4690 = vpop.xlane.xlu0 %4689
        %v4691 = vsel %vm638, %v4573, 0.0
        %4692 = vadd.xlane.f32.xlu0 %v4691
        %v4693 = vpop.xlane.xlu0 %4692
        %v4694 = vsel %vm638, %v4575, 0.0
        %4695 = vadd.xlane.f32.xlu0 %v4694
        %v4696 = vpop.xlane.xlu0 %4695
        %v4697 = vsel %vm638, %v4577, 0.0
        %4698 = vadd.xlane.f32.xlu0 %v4697
        %v4699 = vpop.xlane.xlu0 %4698
        %v4700 = vsel %vm638, %v4579, 0.0
        %4701 = vadd.xlane.f32.xlu0 %v4700
        %v4702 = vpop.xlane.xlu0 %4701
        %v4703 = vsel %vm638, %v4581, 0.0
        %4704 = vadd.xlane.f32.xlu0 %v4703
        %v4705 = vpop.xlane.xlu0 %4704
        %v4706 = vsel %vm638, %v4583, 0.0
        %4707 = vadd.xlane.f32.xlu0 %v4706
        %v4708 = vpop.xlane.xlu0 %4707
        %v4709 = vsel %vm638, %v4585, 0.0
        %4710 = vadd.xlane.f32.xlu0 %v4709
        %v4711 = vpop.xlane.xlu0 %4710
        %v4712 = vsel %vm638, %v4587, 0.0
        %4713 = vadd.xlane.f32.xlu0 %v4712
        %v4714 = vpop.xlane.xlu0 %4713
        %v4715 = vsel %vm638, %v4589, 0.0
        %4716 = vadd.xlane.f32.xlu0 %v4715
        %v4717 = vpop.xlane.xlu0 %4716
        %v4718 = vrcp.pop %v4624
        %v4719 = vrcp.pop %v4627
        %v4720 = vrcp.pop %v4630
        %v4721 = vrcp.pop %v4633
        %v4722 = vrcp.pop %v4636
        %v4723 = vrcp.pop %v4639
        %v4724 = vrcp.pop %v4642
        %v4725 = vrcp.pop %v4645
        %v4726 = vrcp.pop %v4648
        %v4727 = vrcp.pop %v4651
        %v4728 = vrcp.pop %v4654
        %v4729 = vrcp.pop %v4657
        %v4730 = vrcp.pop %v4660
        %v4731 = vrcp.pop %v4663
        %v4732 = vrcp.pop %v4666
        %v4733 = vrcp.pop %v4669
        %v4734 = vrcp.pop %v4672
        %v4735 = vrcp.pop %v4675
        %v4736 = vrcp.pop %v4678
        %v4737 = vrcp.pop %v4681
        %v4738 = vrcp.pop %v4684
        %v4739 = vrcp.pop %v4687
        %v4740 = vrcp.pop %v4690
        %v4741 = vrcp.pop %v4693
        %v4742 = vrcp.pop %v4696
        %v4743 = vrcp.pop %v4699
        %v4744 = vrcp.pop %v4702
        %v4745 = vrcp.pop %v4705
        %v4746 = vrcp.pop %v4708
        %v4747 = vrcp.pop %v4711
        %v4748 = vrcp.pop %v4714
        %v4749 = vrcp.pop %v4717
        %v4750 = vmul.f32 %v4431, %v4718
        %v4751 = vmul.f32 %v4433, %v4719
        %v4752 = vmul.f32 %v4435, %v4720
        %v4753 = vmul.f32 %v4437, %v4721
        %v4754 = vmul.f32 %v4439, %v4722
        %v4755 = vmul.f32 %v4441, %v4723
        %v4756 = vmul.f32 %v4443, %v4724
        %v4757 = vmul.f32 %v4445, %v4725
        %v4758 = vmul.f32 %v4447, %v4726
        %v4759 = vmul.f32 %v4449, %v4727
        %v4760 = vmul.f32 %v4451, %v4728
        %v4761 = vmul.f32 %v4453, %v4729
        %v4762 = vmul.f32 %v4455, %v4730
        %v4763 = vmul.f32 %v4457, %v4731
        %v4764 = vmul.f32 %v4459, %v4732
        %v4765 = vmul.f32 %v4461, %v4733
        %v4766 = vmul.f32 %v4463, %v4734
        %v4767 = vmul.f32 %v4465, %v4735
        %v4768 = vmul.f32 %v4467, %v4736
        %v4769 = vmul.f32 %v4469, %v4737
        %v4770 = vmul.f32 %v4471, %v4738
        %v4771 = vmul.f32 %v4473, %v4739
        %v4772 = vmul.f32 %v4475, %v4740
        %v4773 = vmul.f32 %v4477, %v4741
        %v4774 = vmul.f32 %v4479, %v4742
        %v4775 = vmul.f32 %v4481, %v4743
        %v4776 = vmul.f32 %v4483, %v4744
        %v4777 = vmul.f32 %v4485, %v4745
        %v4778 = vmul.f32 %v4487, %v4746
        %v4779 = vmul.f32 %v4489, %v4747
        %v4780 = vmul.f32 %v4491, %v4748
        %v4781 = vmul.f32 %v4493, %v4749
        %v4782 = vsel %vm1052, %v4750, 0.0
        %v4783 = vsel %vm1052, %v4758, 0.0
        %v4784 = vadd.f32 %v4782, %v4783
        %v4785 = vsel %vm1052, %v4766, 0.0
        %v4786 = vadd.f32 %v4784, %v4785
        %v4787 = vsel %vm1052, %v4774, 0.0
        %v4788 = vadd.f32 %v4786, %v4787
        %v4789 = vsel %vm1052, %v4751, 0.0
        %v4790 = vsel %vm1052, %v4759, 0.0
        %v4791 = vadd.f32 %v4789, %v4790
        %v4792 = vsel %vm1052, %v4767, 0.0
        %v4793 = vadd.f32 %v4791, %v4792
        %v4794 = vsel %vm1052, %v4775, 0.0
        %v4795 = vadd.f32 %v4793, %v4794
        %v4796 = vsel %vm1052, %v4752, 0.0
        %v4797 = vsel %vm1052, %v4760, 0.0
        %v4798 = vadd.f32 %v4796, %v4797
        %v4799 = vsel %vm1052, %v4768, 0.0
        %v4800 = vadd.f32 %v4798, %v4799
        %v4801 = vsel %vm1052, %v4776, 0.0
        %v4802 = vadd.f32 %v4800, %v4801
        %v4803 = vsel %vm1052, %v4753, 0.0
        %v4804 = vsel %vm1052, %v4761, 0.0
        %v4805 = vadd.f32 %v4803, %v4804
        %v4806 = vsel %vm1052, %v4769, 0.0
        %v4807 = vadd.f32 %v4805, %v4806
        %v4808 = vsel %vm1052, %v4777, 0.0
        %v4809 = vadd.f32 %v4807, %v4808
        %v4810 = vsel %vm1052, %v4754, 0.0
        %v4811 = vsel %vm1052, %v4762, 0.0
        %v4812 = vadd.f32 %v4810, %v4811
        %v4813 = vsel %vm1052, %v4770, 0.0
        %v4814 = vadd.f32 %v4812, %v4813
        %v4815 = vsel %vm1052, %v4778, 0.0
        %v4816 = vadd.f32 %v4814, %v4815
        %v4817 = vsel %vm1052, %v4755, 0.0
        %v4818 = vsel %vm1052, %v4763, 0.0
        %v4819 = vadd.f32 %v4817, %v4818
        %v4820 = vsel %vm1052, %v4771, 0.0
        %v4821 = vadd.f32 %v4819, %v4820
        %v4822 = vsel %vm1052, %v4779, 0.0
        %v4823 = vadd.f32 %v4821, %v4822
        %v4824 = vsel %vm1052, %v4756, 0.0
        %v4825 = vsel %vm1052, %v4764, 0.0
        %v4826 = vadd.f32 %v4824, %v4825
        %v4827 = vsel %vm1052, %v4772, 0.0
        %v4828 = vadd.f32 %v4826, %v4827
        %v4829 = vsel %vm1052, %v4780, 0.0
        %v4830 = vadd.f32 %v4828, %v4829
        %v4831 = vsel %vm1052, %v4757, 0.0
        %v4832 = vsel %vm1052, %v4765, 0.0
        %v4833 = vadd.f32 %v4831, %v4832
        %v4834 = vsel %vm1052, %v4773, 0.0
        %v4835 = vadd.f32 %v4833, %v4834
        %v4836 = vsel %vm1052, %v4781, 0.0
        %v4837 = vadd.f32 %v4835, %v4836
        %s4838 = scalar_lea.vmem %s208, 200
        %v4839 = vld [vmem:[%s4838] sm:$0xff]
        %v4840 = vld [vmem:[%s4838 + $0x8] sm:$0xff]
        %v4841 = vld [vmem:[%s4838 + $0x10] sm:$0xff]
        %v4842 = vld [vmem:[%s4838 + $0x18] sm:$0xff]
        %v4843 = vld [vmem:[%s4838 + $0x20] sm:$0xf]
        %4852 = vrot.lane.b32.xlu0 %v4788, 92
        %v4853 = vpop.permute.xlu0 %4852
        %4854 = vrot.lane.b32.xlu0 %v4795, 92
        %v4855 = vpop.permute.xlu0 %4854
        %4856 = vrot.lane.b32.xlu0 %v4802, 92
        %v4857 = vpop.permute.xlu0 %4856
        %4858 = vrot.lane.b32.xlu0 %v4809, 92
        %v4859 = vpop.permute.xlu0 %4858
        %4860 = vrot.lane.b32.xlu0 %v4816, 92
        %v4861 = vpop.permute.xlu0 %4860
        %4862 = vrot.lane.b32.xlu0 %v4823, 92
        %v4863 = vpop.permute.xlu0 %4862
        %4864 = vrot.lane.b32.xlu0 %v4830, 92
        %v4865 = vpop.permute.xlu0 %4864
        %4866 = vrot.lane.b32.xlu0 %v4837, 92
        %v4867 = vpop.permute.xlu0 %4866
        %v4868 = vsel %vm638, %v4853, 0
        %v4870 = vsel %vm638, %v4855, 0
        %v4872 = vsel %vm638, %v4857, 0
        %v4874 = vsel %vm638, %v4859, 0
        %v4876 = vsel %vm638, %v4861, 0
        %v4878 = vsel %vm638, %v4863, 0
        %v4880 = vsel %vm638, %v4865, 0
        %v4882 = vsel %vm638, %v4867, 0
        %v4885 = vsel %vm343, %v4843, 0
        %4887 = vmatpush.msra.mxu0 0.0
        %4888 = vmatpush.msra.mxu0 0.0
        %4889 = vmatpush.msra.mxu0 0.0
        %4890 = vmatpush.msra.mxu0 0.0
        %4891 = vmatpush.msra.mxu0 0.0
        %4892 = vmatpush.msra.mxu0 0.0
        %4893 = vmatpush.msra.mxu0 0.0
        %4894 = vmatpush.msra.mxu0 0.0
        %4895 = vmatpush.msra.mxu0 0.0
        %4896 = vmatpush.msra.mxu0 0.0
        %4897 = vmatpush.msra.mxu0 0.0
        %4898 = vmatpush.msra.mxu0 %v4885
        %4899 = vmatpush.msra.mxu0 %v4842
        %4900 = vmatpush.msra.mxu0 %v4841
        %4901 = vmatpush.msra.mxu0 %v4840
        %4902 = vmatpush.msra.mxu0 %v4839
        %4903 = vmatmul.f32.gmra.mxu0 %v4868
        %v4904 = vpop.f32.mrf.mxu0
        %v4905 = vadd.f32 0.0, %v4904
        %4906 = vmatmul.f32.gmra.mxu0 %v4870
        %v4907 = vpop.f32.mrf.mxu0
        %v4908 = vadd.f32 0.0, %v4907
        %4909 = vmatmul.f32.gmra.mxu0 %v4872
        %v4910 = vpop.f32.mrf.mxu0
        %v4911 = vadd.f32 0.0, %v4910
        %4912 = vmatmul.f32.gmra.mxu0 %v4874
        %v4913 = vpop.f32.mrf.mxu0
        %v4914 = vadd.f32 0.0, %v4913
        %4915 = vmatmul.f32.gmra.mxu0 %v4876
        %v4916 = vpop.f32.mrf.mxu0
        %v4917 = vadd.f32 0.0, %v4916
        %4918 = vmatmul.f32.gmra.mxu0 %v4878
        %v4919 = vpop.f32.mrf.mxu0
        %v4920 = vadd.f32 0.0, %v4919
        %4921 = vmatmul.f32.gmra.mxu0 %v4880
        %v4922 = vpop.f32.mrf.mxu0
        %v4923 = vadd.f32 0.0, %v4922
        %4924 = vmatmul.f32.gmra.mxu0 %v4882
        %v4925 = vpop.f32.mrf.mxu0
        %v4926 = vadd.f32 0.0, %v4925
        %4927 = vdwg.mxu0
        %v4929 = vsel %vm638, %v4246, 0
        %v4932 = vsel %vm638, %v4253, 0
        %v4935 = vsel %vm638, %v4260, 0
        %v4938 = vsel %vm638, %v4267, 0
        %v4941 = vsel %vm638, %v4274, 0
        %v4944 = vsel %vm638, %v4281, 0
        %v4947 = vsel %vm638, %v4288, 0
        %v4950 = vsel %vm638, %v4295, 0
        %v4953 = vsel %vm343, %v4301, 0
        %4955 = vmatpush.msra.mxu0 0.0
        %4956 = vmatpush.msra.mxu0 0.0
        %4957 = vmatpush.msra.mxu0 0.0
        %4958 = vmatpush.msra.mxu0 0.0
        %4959 = vmatpush.msra.mxu0 0.0
        %4960 = vmatpush.msra.mxu0 0.0
        %4961 = vmatpush.msra.mxu0 0.0
        %4962 = vmatpush.msra.mxu0 0.0
        %4963 = vmatpush.msra.mxu0 0.0
        %4964 = vmatpush.msra.mxu0 0.0
        %4965 = vmatpush.msra.mxu0 0.0
        %4966 = vmatpush.msra.mxu0 %v4953
        %4967 = vmatpush.msra.mxu0 %v4300
        %4968 = vmatpush.msra.mxu0 %v4299
        %4969 = vmatpush.msra.mxu0 %v4298
        %4970 = vmatpush.msra.mxu0 %v4297
        %4971 = vmatmul.f32.gmra.mxu0 %v4929
        %v4972 = vpop.f32.mrf.mxu0
        %v4973 = vadd.f32 %v4905, %v4972
        %4974 = vmatmul.f32.gmra.mxu0 %v4932
        %v4975 = vpop.f32.mrf.mxu0
        %v4976 = vadd.f32 %v4908, %v4975
        %4977 = vmatmul.f32.gmra.mxu0 %v4935
        %v4978 = vpop.f32.mrf.mxu0
        %v4979 = vadd.f32 %v4911, %v4978
        %4980 = vmatmul.f32.gmra.mxu0 %v4938
        %v4981 = vpop.f32.mrf.mxu0
        %v4982 = vadd.f32 %v4914, %v4981
        %4983 = vmatmul.f32.gmra.mxu0 %v4941
        %v4984 = vpop.f32.mrf.mxu0
        %v4985 = vadd.f32 %v4917, %v4984
        %4986 = vmatmul.f32.gmra.mxu0 %v4944
        %v4987 = vpop.f32.mrf.mxu0
        %v4988 = vadd.f32 %v4920, %v4987
        %4989 = vmatmul.f32.gmra.mxu0 %v4947
        %v4990 = vpop.f32.mrf.mxu0
        %v4991 = vadd.f32 %v4923, %v4990
        %4992 = vmatmul.f32.gmra.mxu0 %v4950
        %v4993 = vpop.f32.mrf.mxu0
        %v4994 = vadd.f32 %v4926, %v4993
        %4995 = vdwg.mxu0
        %v4996 = vsel %vm1747, %v3824, -inf
        %4997 = vmax.xlane.f32.xlu0 %v4996
        %v4998 = vpop.xlane.xlu0 %4997
        %v4999 = vsel %vm1747, %v3826, -inf
        %5000 = vmax.xlane.f32.xlu0 %v4999
        %v5001 = vpop.xlane.xlu0 %5000
        %v5002 = vsel %vm1747, %v3828, -inf
        %5003 = vmax.xlane.f32.xlu0 %v5002
        %v5004 = vpop.xlane.xlu0 %5003
        %v5005 = vsel %vm1747, %v3830, -inf
        %5006 = vmax.xlane.f32.xlu0 %v5005
        %v5007 = vpop.xlane.xlu0 %5006
        %v5008 = vsel %vm1747, %v3832, -inf
        %5009 = vmax.xlane.f32.xlu0 %v5008
        %v5010 = vpop.xlane.xlu0 %5009
        %v5011 = vsel %vm1747, %v3834, -inf
        %5012 = vmax.xlane.f32.xlu0 %v5011
        %v5013 = vpop.xlane.xlu0 %5012
        %v5014 = vsel %vm1747, %v3836, -inf
        %5015 = vmax.xlane.f32.xlu0 %v5014
        %v5016 = vpop.xlane.xlu0 %5015
        %v5017 = vsel %vm1747, %v3838, -inf
        %5018 = vmax.xlane.f32.xlu0 %v5017
        %v5019 = vpop.xlane.xlu0 %5018
        %v5020 = vsel %vm1747, %v3840, -inf
        %5021 = vmax.xlane.f32.xlu0 %v5020
        %v5022 = vpop.xlane.xlu0 %5021
        %v5023 = vsel %vm1747, %v3842, -inf
        %5024 = vmax.xlane.f32.xlu0 %v5023
        %v5025 = vpop.xlane.xlu0 %5024
        %v5026 = vsel %vm1747, %v3844, -inf
        %5027 = vmax.xlane.f32.xlu0 %v5026
        %v5028 = vpop.xlane.xlu0 %5027
        %v5029 = vsel %vm1747, %v3846, -inf
        %5030 = vmax.xlane.f32.xlu0 %v5029
        %v5031 = vpop.xlane.xlu0 %5030
        %v5032 = vsel %vm1747, %v3848, -inf
        %5033 = vmax.xlane.f32.xlu0 %v5032
        %v5034 = vpop.xlane.xlu0 %5033
        %v5035 = vsel %vm1747, %v3850, -inf
        %5036 = vmax.xlane.f32.xlu0 %v5035
        %v5037 = vpop.xlane.xlu0 %5036
        %v5038 = vsel %vm1747, %v3852, -inf
        %5039 = vmax.xlane.f32.xlu0 %v5038
        %v5040 = vpop.xlane.xlu0 %5039
        %v5041 = vsel %vm1747, %v3854, -inf
        %5042 = vmax.xlane.f32.xlu0 %v5041
        %v5043 = vpop.xlane.xlu0 %5042
        %v5044 = vsel %vm1747, %v3856, -inf
        %5045 = vmax.xlane.f32.xlu0 %v5044
        %v5046 = vpop.xlane.xlu0 %5045
        %v5047 = vsel %vm1747, %v3858, -inf
        %5048 = vmax.xlane.f32.xlu0 %v5047
        %v5049 = vpop.xlane.xlu0 %5048
        %v5050 = vsel %vm1747, %v3860, -inf
        %5051 = vmax.xlane.f32.xlu0 %v5050
        %v5052 = vpop.xlane.xlu0 %5051
        %v5053 = vsel %vm1747, %v3862, -inf
        %5054 = vmax.xlane.f32.xlu0 %v5053
        %v5055 = vpop.xlane.xlu0 %5054
        %v5056 = vsel %vm1747, %v3864, -inf
        %5057 = vmax.xlane.f32.xlu0 %v5056
        %v5058 = vpop.xlane.xlu0 %5057
        %v5059 = vsel %vm1747, %v3866, -inf
        %5060 = vmax.xlane.f32.xlu0 %v5059
        %v5061 = vpop.xlane.xlu0 %5060
        %v5062 = vsel %vm1747, %v3868, -inf
        %5063 = vmax.xlane.f32.xlu0 %v5062
        %v5064 = vpop.xlane.xlu0 %5063
        %v5065 = vsel %vm1747, %v3870, -inf
        %5066 = vmax.xlane.f32.xlu0 %v5065
        %v5067 = vpop.xlane.xlu0 %5066
        %v5068 = vsel %vm1747, %v3872, -inf
        %5069 = vmax.xlane.f32.xlu0 %v5068
        %v5070 = vpop.xlane.xlu0 %5069
        %v5071 = vsel %vm1747, %v3874, -inf
        %5072 = vmax.xlane.f32.xlu0 %v5071
        %v5073 = vpop.xlane.xlu0 %5072
        %v5074 = vsel %vm1747, %v3876, -inf
        %5075 = vmax.xlane.f32.xlu0 %v5074
        %v5076 = vpop.xlane.xlu0 %5075
        %v5077 = vsel %vm1747, %v3878, -inf
        %5078 = vmax.xlane.f32.xlu0 %v5077
        %v5079 = vpop.xlane.xlu0 %5078
        %v5080 = vsel %vm1747, %v3880, -inf
        %5081 = vmax.xlane.f32.xlu0 %v5080
        %v5082 = vpop.xlane.xlu0 %5081
        %v5083 = vsel %vm1747, %v3882, -inf
        %5084 = vmax.xlane.f32.xlu0 %v5083
        %v5085 = vpop.xlane.xlu0 %5084
        %v5086 = vsel %vm1747, %v3884, -inf
        %5087 = vmax.xlane.f32.xlu0 %v5086
        %v5088 = vpop.xlane.xlu0 %5087
        %v5089 = vsel %vm1747, %v3886, -inf
        %5090 = vmax.xlane.f32.xlu0 %v5089
        %v5091 = vpop.xlane.xlu0 %5090
        %v5092 = vsub.f32 %v3824, %v4998
        %v5093 = vsub.f32 %v3826, %v5001
        %v5094 = vsub.f32 %v3828, %v5004
        %v5095 = vsub.f32 %v3830, %v5007
        %v5096 = vsub.f32 %v3832, %v5010
        %v5097 = vsub.f32 %v3834, %v5013
        %v5098 = vsub.f32 %v3836, %v5016
        %v5099 = vsub.f32 %v3838, %v5019
        %v5100 = vsub.f32 %v3840, %v5022
        %v5101 = vsub.f32 %v3842, %v5025
        %v5102 = vsub.f32 %v3844, %v5028
        %v5103 = vsub.f32 %v3846, %v5031
        %v5104 = vsub.f32 %v3848, %v5034
        %v5105 = vsub.f32 %v3850, %v5037
        %v5106 = vsub.f32 %v3852, %v5040
        %v5107 = vsub.f32 %v3854, %v5043
        %v5108 = vsub.f32 %v3856, %v5046
        %v5109 = vsub.f32 %v3858, %v5049
        %v5110 = vsub.f32 %v3860, %v5052
        %v5111 = vsub.f32 %v3862, %v5055
        %v5112 = vsub.f32 %v3864, %v5058
        %v5113 = vsub.f32 %v3866, %v5061
        %v5114 = vsub.f32 %v3868, %v5064
        %v5115 = vsub.f32 %v3870, %v5067
        %v5116 = vsub.f32 %v3872, %v5070
        %v5117 = vsub.f32 %v3874, %v5073
        %v5118 = vsub.f32 %v3876, %v5076
        %v5119 = vsub.f32 %v3878, %v5079
        %v5120 = vsub.f32 %v3880, %v5082
        %v5121 = vsub.f32 %v3882, %v5085
        %v5122 = vsub.f32 %v3884, %v5088
        %v5123 = vsub.f32 %v3886, %v5091
        %v5124 = vmul.f32 %v5092, 1.442695
        %v5125 = vpow.pop %v5124
        %v5126 = vmul.f32 %v5093, 1.442695
        %v5127 = vpow.pop %v5126
        %v5128 = vmul.f32 %v5094, 1.442695
        %v5129 = vpow.pop %v5128
        %v5130 = vmul.f32 %v5095, 1.442695
        %v5131 = vpow.pop %v5130
        %v5132 = vmul.f32 %v5096, 1.442695
        %v5133 = vpow.pop %v5132
        %v5134 = vmul.f32 %v5097, 1.442695
        %v5135 = vpow.pop %v5134
        %v5136 = vmul.f32 %v5098, 1.442695
        %v5137 = vpow.pop %v5136
        %v5138 = vmul.f32 %v5099, 1.442695
        %v5139 = vpow.pop %v5138
        %v5140 = vmul.f32 %v5100, 1.442695
        %v5141 = vpow.pop %v5140
        %v5142 = vmul.f32 %v5101, 1.442695
        %v5143 = vpow.pop %v5142
        %v5144 = vmul.f32 %v5102, 1.442695
        %v5145 = vpow.pop %v5144
        %v5146 = vmul.f32 %v5103, 1.442695
        %v5147 = vpow.pop %v5146
        %v5148 = vmul.f32 %v5104, 1.442695
        %v5149 = vpow.pop %v5148
        %v5150 = vmul.f32 %v5105, 1.442695
        %v5151 = vpow.pop %v5150
        %v5152 = vmul.f32 %v5106, 1.442695
        %v5153 = vpow.pop %v5152
        %v5154 = vmul.f32 %v5107, 1.442695
        %v5155 = vpow.pop %v5154
        %v5156 = vmul.f32 %v5108, 1.442695
        %v5157 = vpow.pop %v5156
        %v5158 = vmul.f32 %v5109, 1.442695
        %v5159 = vpow.pop %v5158
        %v5160 = vmul.f32 %v5110, 1.442695
        %v5161 = vpow.pop %v5160
        %v5162 = vmul.f32 %v5111, 1.442695
        %v5163 = vpow.pop %v5162
        %v5164 = vmul.f32 %v5112, 1.442695
        %v5165 = vpow.pop %v5164
        %v5166 = vmul.f32 %v5113, 1.442695
        %v5167 = vpow.pop %v5166
        %v5168 = vmul.f32 %v5114, 1.442695
        %v5169 = vpow.pop %v5168
        %v5170 = vmul.f32 %v5115, 1.442695
        %v5171 = vpow.pop %v5170
        %v5172 = vmul.f32 %v5116, 1.442695
        %v5173 = vpow.pop %v5172
        %v5174 = vmul.f32 %v5117, 1.442695
        %v5175 = vpow.pop %v5174
        %v5176 = vmul.f32 %v5118, 1.442695
        %v5177 = vpow.pop %v5176
        %v5178 = vmul.f32 %v5119, 1.442695
        %v5179 = vpow.pop %v5178
        %v5180 = vmul.f32 %v5120, 1.442695
        %v5181 = vpow.pop %v5180
        %v5182 = vmul.f32 %v5121, 1.442695
        %v5183 = vpow.pop %v5182
        %v5184 = vmul.f32 %v5122, 1.442695
        %v5185 = vpow.pop %v5184
        %v5186 = vmul.f32 %v5123, 1.442695
        %v5187 = vpow.pop %v5186
        %5220 = vrot.lane.b32.xlu0 %v5125, 56
        %v5221 = vpop.permute.xlu0 %5220
        %5222 = vrot.lane.b32.xlu0 %v5127, 56
        %v5223 = vpop.permute.xlu0 %5222
        %5224 = vrot.lane.b32.xlu0 %v5129, 56
        %v5225 = vpop.permute.xlu0 %5224
        %5226 = vrot.lane.b32.xlu0 %v5131, 56
        %v5227 = vpop.permute.xlu0 %5226
        %5228 = vrot.lane.b32.xlu0 %v5133, 56
        %v5229 = vpop.permute.xlu0 %5228
        %5230 = vrot.lane.b32.xlu0 %v5135, 56
        %v5231 = vpop.permute.xlu0 %5230
        %5232 = vrot.lane.b32.xlu0 %v5137, 56
        %v5233 = vpop.permute.xlu0 %5232
        %5234 = vrot.lane.b32.xlu0 %v5139, 56
        %v5235 = vpop.permute.xlu0 %5234
        %5236 = vrot.lane.b32.xlu0 %v5141, 56
        %v5237 = vpop.permute.xlu0 %5236
        %5238 = vrot.lane.b32.xlu0 %v5143, 56
        %v5239 = vpop.permute.xlu0 %5238
        %5240 = vrot.lane.b32.xlu0 %v5145, 56
        %v5241 = vpop.permute.xlu0 %5240
        %5242 = vrot.lane.b32.xlu0 %v5147, 56
        %v5243 = vpop.permute.xlu0 %5242
        %5244 = vrot.lane.b32.xlu0 %v5149, 56
        %v5245 = vpop.permute.xlu0 %5244
        %5246 = vrot.lane.b32.xlu0 %v5151, 56
        %v5247 = vpop.permute.xlu0 %5246
        %5248 = vrot.lane.b32.xlu0 %v5153, 56
        %v5249 = vpop.permute.xlu0 %5248
        %5250 = vrot.lane.b32.xlu0 %v5155, 56
        %v5251 = vpop.permute.xlu0 %5250
        %5252 = vrot.lane.b32.xlu0 %v5157, 56
        %v5253 = vpop.permute.xlu0 %5252
        %5254 = vrot.lane.b32.xlu0 %v5159, 56
        %v5255 = vpop.permute.xlu0 %5254
        %5256 = vrot.lane.b32.xlu0 %v5161, 56
        %v5257 = vpop.permute.xlu0 %5256
        %5258 = vrot.lane.b32.xlu0 %v5163, 56
        %v5259 = vpop.permute.xlu0 %5258
        %5260 = vrot.lane.b32.xlu0 %v5165, 56
        %v5261 = vpop.permute.xlu0 %5260
        %5262 = vrot.lane.b32.xlu0 %v5167, 56
        %v5263 = vpop.permute.xlu0 %5262
        %5264 = vrot.lane.b32.xlu0 %v5169, 56
        %v5265 = vpop.permute.xlu0 %5264
        %5266 = vrot.lane.b32.xlu0 %v5171, 56
        %v5267 = vpop.permute.xlu0 %5266
        %5268 = vrot.lane.b32.xlu0 %v5173, 56
        %v5269 = vpop.permute.xlu0 %5268
        %5270 = vrot.lane.b32.xlu0 %v5175, 56
        %v5271 = vpop.permute.xlu0 %5270
        %5272 = vrot.lane.b32.xlu0 %v5177, 56
        %v5273 = vpop.permute.xlu0 %5272
        %5274 = vrot.lane.b32.xlu0 %v5179, 56
        %v5275 = vpop.permute.xlu0 %5274
        %5276 = vrot.lane.b32.xlu0 %v5181, 56
        %v5277 = vpop.permute.xlu0 %5276
        %5278 = vrot.lane.b32.xlu0 %v5183, 56
        %v5279 = vpop.permute.xlu0 %5278
        %5280 = vrot.lane.b32.xlu0 %v5185, 56
        %v5281 = vpop.permute.xlu0 %5280
        %5282 = vrot.lane.b32.xlu0 %v5187, 56
        %v5283 = vpop.permute.xlu0 %5282
        %v5316 = vsel %vm638, %v5221, 0.0
        %5317 = vadd.xlane.f32.xlu0 %v5316
        %v5318 = vpop.xlane.xlu0 %5317
        %v5319 = vsel %vm638, %v5223, 0.0
        %5320 = vadd.xlane.f32.xlu0 %v5319
        %v5321 = vpop.xlane.xlu0 %5320
        %v5322 = vsel %vm638, %v5225, 0.0
        %5323 = vadd.xlane.f32.xlu0 %v5322
        %v5324 = vpop.xlane.xlu0 %5323
        %v5325 = vsel %vm638, %v5227, 0.0
        %5326 = vadd.xlane.f32.xlu0 %v5325
        %v5327 = vpop.xlane.xlu0 %5326
        %v5328 = vsel %vm638, %v5229, 0.0
        %5329 = vadd.xlane.f32.xlu0 %v5328
        %v5330 = vpop.xlane.xlu0 %5329
        %v5331 = vsel %vm638, %v5231, 0.0
        %5332 = vadd.xlane.f32.xlu0 %v5331
        %v5333 = vpop.xlane.xlu0 %5332
        %v5334 = vsel %vm638, %v5233, 0.0
        %5335 = vadd.xlane.f32.xlu0 %v5334
        %v5336 = vpop.xlane.xlu0 %5335
        %v5337 = vsel %vm638, %v5235, 0.0
        %5338 = vadd.xlane.f32.xlu0 %v5337
        %v5339 = vpop.xlane.xlu0 %5338
        %v5340 = vsel %vm638, %v5237, 0.0
        %5341 = vadd.xlane.f32.xlu0 %v5340
        %v5342 = vpop.xlane.xlu0 %5341
        %v5343 = vsel %vm638, %v5239, 0.0
        %5344 = vadd.xlane.f32.xlu0 %v5343
        %v5345 = vpop.xlane.xlu0 %5344
        %v5346 = vsel %vm638, %v5241, 0.0
        %5347 = vadd.xlane.f32.xlu0 %v5346
        %v5348 = vpop.xlane.xlu0 %5347
        %v5349 = vsel %vm638, %v5243, 0.0
        %5350 = vadd.xlane.f32.xlu0 %v5349
        %v5351 = vpop.xlane.xlu0 %5350
        %v5352 = vsel %vm638, %v5245, 0.0
        %5353 = vadd.xlane.f32.xlu0 %v5352
        %v5354 = vpop.xlane.xlu0 %5353
        %v5355 = vsel %vm638, %v5247, 0.0
        %5356 = vadd.xlane.f32.xlu0 %v5355
        %v5357 = vpop.xlane.xlu0 %5356
        %v5358 = vsel %vm638, %v5249, 0.0
        %5359 = vadd.xlane.f32.xlu0 %v5358
        %v5360 = vpop.xlane.xlu0 %5359
        %v5361 = vsel %vm638, %v5251, 0.0
        %5362 = vadd.xlane.f32.xlu0 %v5361
        %v5363 = vpop.xlane.xlu0 %5362
        %v5364 = vsel %vm638, %v5253, 0.0
        %5365 = vadd.xlane.f32.xlu0 %v5364
        %v5366 = vpop.xlane.xlu0 %5365
        %v5367 = vsel %vm638, %v5255, 0.0
        %5368 = vadd.xlane.f32.xlu0 %v5367
        %v5369 = vpop.xlane.xlu0 %5368
        %v5370 = vsel %vm638, %v5257, 0.0
        %5371 = vadd.xlane.f32.xlu0 %v5370
        %v5372 = vpop.xlane.xlu0 %5371
        %v5373 = vsel %vm638, %v5259, 0.0
        %5374 = vadd.xlane.f32.xlu0 %v5373
        %v5375 = vpop.xlane.xlu0 %5374
        %v5376 = vsel %vm638, %v5261, 0.0
        %5377 = vadd.xlane.f32.xlu0 %v5376
        %v5378 = vpop.xlane.xlu0 %5377
        %v5379 = vsel %vm638, %v5263, 0.0
        %5380 = vadd.xlane.f32.xlu0 %v5379
        %v5381 = vpop.xlane.xlu0 %5380
        %v5382 = vsel %vm638, %v5265, 0.0
        %5383 = vadd.xlane.f32.xlu0 %v5382
        %v5384 = vpop.xlane.xlu0 %5383
        %v5385 = vsel %vm638, %v5267, 0.0
        %5386 = vadd.xlane.f32.xlu0 %v5385
        %v5387 = vpop.xlane.xlu0 %5386
        %v5388 = vsel %vm638, %v5269, 0.0
        %5389 = vadd.xlane.f32.xlu0 %v5388
        %v5390 = vpop.xlane.xlu0 %5389
        %v5391 = vsel %vm638, %v5271, 0.0
        %5392 = vadd.xlane.f32.xlu0 %v5391
        %v5393 = vpop.xlane.xlu0 %5392
        %v5394 = vsel %vm638, %v5273, 0.0
        %5395 = vadd.xlane.f32.xlu0 %v5394
        %v5396 = vpop.xlane.xlu0 %5395
        %v5397 = vsel %vm638, %v5275, 0.0
        %5398 = vadd.xlane.f32.xlu0 %v5397
        %v5399 = vpop.xlane.xlu0 %5398
        %v5400 = vsel %vm638, %v5277, 0.0
        %5401 = vadd.xlane.f32.xlu0 %v5400
        %v5402 = vpop.xlane.xlu0 %5401
        %v5403 = vsel %vm638, %v5279, 0.0
        %5404 = vadd.xlane.f32.xlu0 %v5403
        %v5405 = vpop.xlane.xlu0 %5404
        %v5406 = vsel %vm638, %v5281, 0.0
        %5407 = vadd.xlane.f32.xlu0 %v5406
        %v5408 = vpop.xlane.xlu0 %5407
        %v5409 = vsel %vm638, %v5283, 0.0
        %5410 = vadd.xlane.f32.xlu0 %v5409
        %v5411 = vpop.xlane.xlu0 %5410
        %v5412 = vrcp.pop %v5318
        %v5413 = vrcp.pop %v5321
        %v5414 = vrcp.pop %v5324
        %v5415 = vrcp.pop %v5327
        %v5416 = vrcp.pop %v5330
        %v5417 = vrcp.pop %v5333
        %v5418 = vrcp.pop %v5336
        %v5419 = vrcp.pop %v5339
        %v5420 = vrcp.pop %v5342
        %v5421 = vrcp.pop %v5345
        %v5422 = vrcp.pop %v5348
        %v5423 = vrcp.pop %v5351
        %v5424 = vrcp.pop %v5354
        %v5425 = vrcp.pop %v5357
        %v5426 = vrcp.pop %v5360
        %v5427 = vrcp.pop %v5363
        %v5428 = vrcp.pop %v5366
        %v5429 = vrcp.pop %v5369
        %v5430 = vrcp.pop %v5372
        %v5431 = vrcp.pop %v5375
        %v5432 = vrcp.pop %v5378
        %v5433 = vrcp.pop %v5381
        %v5434 = vrcp.pop %v5384
        %v5435 = vrcp.pop %v5387
        %v5436 = vrcp.pop %v5390
        %v5437 = vrcp.pop %v5393
        %v5438 = vrcp.pop %v5396
        %v5439 = vrcp.pop %v5399
        %v5440 = vrcp.pop %v5402
        %v5441 = vrcp.pop %v5405
        %v5442 = vrcp.pop %v5408
        %v5443 = vrcp.pop %v5411
        %v5444 = vmul.f32 %v5125, %v5412
        %v5445 = vmul.f32 %v5127, %v5413
        %v5446 = vmul.f32 %v5129, %v5414
        %v5447 = vmul.f32 %v5131, %v5415
        %v5448 = vmul.f32 %v5133, %v5416
        %v5449 = vmul.f32 %v5135, %v5417
        %v5450 = vmul.f32 %v5137, %v5418
        %v5451 = vmul.f32 %v5139, %v5419
        %v5452 = vmul.f32 %v5141, %v5420
        %v5453 = vmul.f32 %v5143, %v5421
        %v5454 = vmul.f32 %v5145, %v5422
        %v5455 = vmul.f32 %v5147, %v5423
        %v5456 = vmul.f32 %v5149, %v5424
        %v5457 = vmul.f32 %v5151, %v5425
        %v5458 = vmul.f32 %v5153, %v5426
        %v5459 = vmul.f32 %v5155, %v5427
        %v5460 = vmul.f32 %v5157, %v5428
        %v5461 = vmul.f32 %v5159, %v5429
        %v5462 = vmul.f32 %v5161, %v5430
        %v5463 = vmul.f32 %v5163, %v5431
        %v5464 = vmul.f32 %v5165, %v5432
        %v5465 = vmul.f32 %v5167, %v5433
        %v5466 = vmul.f32 %v5169, %v5434
        %v5467 = vmul.f32 %v5171, %v5435
        %v5468 = vmul.f32 %v5173, %v5436
        %v5469 = vmul.f32 %v5175, %v5437
        %v5470 = vmul.f32 %v5177, %v5438
        %v5471 = vmul.f32 %v5179, %v5439
        %v5472 = vmul.f32 %v5181, %v5440
        %v5473 = vmul.f32 %v5183, %v5441
        %v5474 = vmul.f32 %v5185, %v5442
        %v5475 = vmul.f32 %v5187, %v5443
        %v5476 = vsel %vm1747, %v5444, 0.0
        %v5477 = vsel %vm1747, %v5452, 0.0
        %v5478 = vadd.f32 %v5476, %v5477
        %v5479 = vsel %vm1747, %v5460, 0.0
        %v5480 = vadd.f32 %v5478, %v5479
        %v5481 = vsel %vm1747, %v5468, 0.0
        %v5482 = vadd.f32 %v5480, %v5481
        %v5483 = vsel %vm1747, %v5445, 0.0
        %v5484 = vsel %vm1747, %v5453, 0.0
        %v5485 = vadd.f32 %v5483, %v5484
        %v5486 = vsel %vm1747, %v5461, 0.0
        %v5487 = vadd.f32 %v5485, %v5486
        %v5488 = vsel %vm1747, %v5469, 0.0
        %v5489 = vadd.f32 %v5487, %v5488
        %v5490 = vsel %vm1747, %v5446, 0.0
        %v5491 = vsel %vm1747, %v5454, 0.0
        %v5492 = vadd.f32 %v5490, %v5491
        %v5493 = vsel %vm1747, %v5462, 0.0
        %v5494 = vadd.f32 %v5492, %v5493
        %v5495 = vsel %vm1747, %v5470, 0.0
        %v5496 = vadd.f32 %v5494, %v5495
        %v5497 = vsel %vm1747, %v5447, 0.0
        %v5498 = vsel %vm1747, %v5455, 0.0
        %v5499 = vadd.f32 %v5497, %v5498
        %v5500 = vsel %vm1747, %v5463, 0.0
        %v5501 = vadd.f32 %v5499, %v5500
        %v5502 = vsel %vm1747, %v5471, 0.0
        %v5503 = vadd.f32 %v5501, %v5502
        %v5504 = vsel %vm1747, %v5448, 0.0
        %v5505 = vsel %vm1747, %v5456, 0.0
        %v5506 = vadd.f32 %v5504, %v5505
        %v5507 = vsel %vm1747, %v5464, 0.0
        %v5508 = vadd.f32 %v5506, %v5507
        %v5509 = vsel %vm1747, %v5472, 0.0
        %v5510 = vadd.f32 %v5508, %v5509
        %v5511 = vsel %vm1747, %v5449, 0.0
        %v5512 = vsel %vm1747, %v5457, 0.0
        %v5513 = vadd.f32 %v5511, %v5512
        %v5514 = vsel %vm1747, %v5465, 0.0
        %v5515 = vadd.f32 %v5513, %v5514
        %v5516 = vsel %vm1747, %v5473, 0.0
        %v5517 = vadd.f32 %v5515, %v5516
        %v5518 = vsel %vm1747, %v5450, 0.0
        %v5519 = vsel %vm1747, %v5458, 0.0
        %v5520 = vadd.f32 %v5518, %v5519
        %v5521 = vsel %vm1747, %v5466, 0.0
        %v5522 = vadd.f32 %v5520, %v5521
        %v5523 = vsel %vm1747, %v5474, 0.0
        %v5524 = vadd.f32 %v5522, %v5523
        %v5525 = vsel %vm1747, %v5451, 0.0
        %v5526 = vsel %vm1747, %v5459, 0.0
        %v5527 = vadd.f32 %v5525, %v5526
        %v5528 = vsel %vm1747, %v5467, 0.0
        %v5529 = vadd.f32 %v5527, %v5528
        %v5530 = vsel %vm1747, %v5475, 0.0
        %v5531 = vadd.f32 %v5529, %v5530
        %s5532 = scalar_lea.vmem %s208, 240
        %v5533 = vld [vmem:[%s5532] sm:$0xff]
        %v5534 = vld [vmem:[%s5532 + $0x8] sm:$0xff]
        %v5535 = vld [vmem:[%s5532 + $0x10] sm:$0xff]
        %v5536 = vld [vmem:[%s5532 + $0x18] sm:$0xff]
        %v5537 = vld [vmem:[%s5532 + $0x20] sm:$0xf]
        %5546 = vrot.lane.b32.xlu0 %v5482, 56
        %v5547 = vpop.permute.xlu0 %5546
        %5548 = vrot.lane.b32.xlu0 %v5489, 56
        %v5549 = vpop.permute.xlu0 %5548
        %5550 = vrot.lane.b32.xlu0 %v5496, 56
        %v5551 = vpop.permute.xlu0 %5550
        %5552 = vrot.lane.b32.xlu0 %v5503, 56
        %v5553 = vpop.permute.xlu0 %5552
        %5554 = vrot.lane.b32.xlu0 %v5510, 56
        %v5555 = vpop.permute.xlu0 %5554
        %5556 = vrot.lane.b32.xlu0 %v5517, 56
        %v5557 = vpop.permute.xlu0 %5556
        %5558 = vrot.lane.b32.xlu0 %v5524, 56
        %v5559 = vpop.permute.xlu0 %5558
        %5560 = vrot.lane.b32.xlu0 %v5531, 56
        %v5561 = vpop.permute.xlu0 %5560
        %v5562 = vsel %vm638, %v5547, 0
        %v5564 = vsel %vm638, %v5549, 0
        %v5566 = vsel %vm638, %v5551, 0
        %v5568 = vsel %vm638, %v5553, 0
        %v5570 = vsel %vm638, %v5555, 0
        %v5572 = vsel %vm638, %v5557, 0
        %v5574 = vsel %vm638, %v5559, 0
        %v5576 = vsel %vm638, %v5561, 0
        %v5579 = vsel %vm343, %v5537, 0
        %5581 = vmatpush.msra.mxu0 0.0
        %5582 = vmatpush.msra.mxu0 0.0
        %5583 = vmatpush.msra.mxu0 0.0
        %5584 = vmatpush.msra.mxu0 0.0
        %5585 = vmatpush.msra.mxu0 0.0
        %5586 = vmatpush.msra.mxu0 0.0
        %5587 = vmatpush.msra.mxu0 0.0
        %5588 = vmatpush.msra.mxu0 0.0
        %5589 = vmatpush.msra.mxu0 0.0
        %5590 = vmatpush.msra.mxu0 0.0
        %5591 = vmatpush.msra.mxu0 0.0
        %5592 = vmatpush.msra.mxu0 %v5579
        %5593 = vmatpush.msra.mxu0 %v5536
        %5594 = vmatpush.msra.mxu0 %v5535
        %5595 = vmatpush.msra.mxu0 %v5534
        %5596 = vmatpush.msra.mxu0 %v5533
        %5597 = vmatmul.f32.gmra.mxu0 %v5562
        %v5598 = vpop.f32.mrf.mxu0
        %v5599 = vadd.f32 0.0, %v5598
        %5600 = vmatmul.f32.gmra.mxu0 %v5564
        %v5601 = vpop.f32.mrf.mxu0
        %v5602 = vadd.f32 0.0, %v5601
        %5603 = vmatmul.f32.gmra.mxu0 %v5566
        %v5604 = vpop.f32.mrf.mxu0
        %v5605 = vadd.f32 0.0, %v5604
        %5606 = vmatmul.f32.gmra.mxu0 %v5568
        %v5607 = vpop.f32.mrf.mxu0
        %v5608 = vadd.f32 0.0, %v5607
        %5609 = vmatmul.f32.gmra.mxu0 %v5570
        %v5610 = vpop.f32.mrf.mxu0
        %v5611 = vadd.f32 0.0, %v5610
        %5612 = vmatmul.f32.gmra.mxu0 %v5572
        %v5613 = vpop.f32.mrf.mxu0
        %v5614 = vadd.f32 0.0, %v5613
        %5615 = vmatmul.f32.gmra.mxu0 %v5574
        %v5616 = vpop.f32.mrf.mxu0
        %v5617 = vadd.f32 0.0, %v5616
        %5618 = vmatmul.f32.gmra.mxu0 %v5576
        %v5619 = vpop.f32.mrf.mxu0
        %v5620 = vadd.f32 0.0, %v5619
        %5621 = vdwg.mxu0
        %v5622 = vadd.f32 %v4973, %v5599
        %v5623 = vadd.f32 %v4976, %v5602
        %v5624 = vadd.f32 %v4979, %v5605
        %v5625 = vadd.f32 %v4982, %v5608
        %v5626 = vadd.f32 %v4985, %v5611
        %v5627 = vadd.f32 %v4988, %v5614
        %v5628 = vadd.f32 %v4991, %v5617
        %v5629 = vadd.f32 %v4994, %v5620
        %v5630 = vsel %vm2382, %v3824, -inf
        %v5631 = vsel %vm2384, %v3825, -inf
        %v5632 = vmax.f32 %v5630, %v5631
        %5633 = vmax.xlane.f32.xlu0 %v5632
        %v5634 = vpop.xlane.xlu0 %5633
        %v5635 = vsel %vm2382, %v3826, -inf
        %v5636 = vsel %vm2384, %v3827, -inf
        %v5637 = vmax.f32 %v5635, %v5636
        %5638 = vmax.xlane.f32.xlu0 %v5637
        %v5639 = vpop.xlane.xlu0 %5638
        %v5640 = vsel %vm2382, %v3828, -inf
        %v5641 = vsel %vm2384, %v3829, -inf
        %v5642 = vmax.f32 %v5640, %v5641
        %5643 = vmax.xlane.f32.xlu0 %v5642
        %v5644 = vpop.xlane.xlu0 %5643
        %v5645 = vsel %vm2382, %v3830, -inf
        %v5646 = vsel %vm2384, %v3831, -inf
        %v5647 = vmax.f32 %v5645, %v5646
        %5648 = vmax.xlane.f32.xlu0 %v5647
        %v5649 = vpop.xlane.xlu0 %5648
        %v5650 = vsel %vm2382, %v3832, -inf
        %v5651 = vsel %vm2384, %v3833, -inf
        %v5652 = vmax.f32 %v5650, %v5651
        %5653 = vmax.xlane.f32.xlu0 %v5652
        %v5654 = vpop.xlane.xlu0 %5653
        %v5655 = vsel %vm2382, %v3834, -inf
        %v5656 = vsel %vm2384, %v3835, -inf
        %v5657 = vmax.f32 %v5655, %v5656
        %5658 = vmax.xlane.f32.xlu0 %v5657
        %v5659 = vpop.xlane.xlu0 %5658
        %v5660 = vsel %vm2382, %v3836, -inf
        %v5661 = vsel %vm2384, %v3837, -inf
        %v5662 = vmax.f32 %v5660, %v5661
        %5663 = vmax.xlane.f32.xlu0 %v5662
        %v5664 = vpop.xlane.xlu0 %5663
        %v5665 = vsel %vm2382, %v3838, -inf
        %v5666 = vsel %vm2384, %v3839, -inf
        %v5667 = vmax.f32 %v5665, %v5666
        %5668 = vmax.xlane.f32.xlu0 %v5667
        %v5669 = vpop.xlane.xlu0 %5668
        %v5670 = vsel %vm2382, %v3840, -inf
        %v5671 = vsel %vm2384, %v3841, -inf
        %v5672 = vmax.f32 %v5670, %v5671
        %5673 = vmax.xlane.f32.xlu0 %v5672
        %v5674 = vpop.xlane.xlu0 %5673
        %v5675 = vsel %vm2382, %v3842, -inf
        %v5676 = vsel %vm2384, %v3843, -inf
        %v5677 = vmax.f32 %v5675, %v5676
        %5678 = vmax.xlane.f32.xlu0 %v5677
        %v5679 = vpop.xlane.xlu0 %5678
        %v5680 = vsel %vm2382, %v3844, -inf
        %v5681 = vsel %vm2384, %v3845, -inf
        %v5682 = vmax.f32 %v5680, %v5681
        %5683 = vmax.xlane.f32.xlu0 %v5682
        %v5684 = vpop.xlane.xlu0 %5683
        %v5685 = vsel %vm2382, %v3846, -inf
        %v5686 = vsel %vm2384, %v3847, -inf
        %v5687 = vmax.f32 %v5685, %v5686
        %5688 = vmax.xlane.f32.xlu0 %v5687
        %v5689 = vpop.xlane.xlu0 %5688
        %v5690 = vsel %vm2382, %v3848, -inf
        %v5691 = vsel %vm2384, %v3849, -inf
        %v5692 = vmax.f32 %v5690, %v5691
        %5693 = vmax.xlane.f32.xlu0 %v5692
        %v5694 = vpop.xlane.xlu0 %5693
        %v5695 = vsel %vm2382, %v3850, -inf
        %v5696 = vsel %vm2384, %v3851, -inf
        %v5697 = vmax.f32 %v5695, %v5696
        %5698 = vmax.xlane.f32.xlu0 %v5697
        %v5699 = vpop.xlane.xlu0 %5698
        %v5700 = vsel %vm2382, %v3852, -inf
        %v5701 = vsel %vm2384, %v3853, -inf
        %v5702 = vmax.f32 %v5700, %v5701
        %5703 = vmax.xlane.f32.xlu0 %v5702
        %v5704 = vpop.xlane.xlu0 %5703
        %v5705 = vsel %vm2382, %v3854, -inf
        %v5706 = vsel %vm2384, %v3855, -inf
        %v5707 = vmax.f32 %v5705, %v5706
        %5708 = vmax.xlane.f32.xlu0 %v5707
        %v5709 = vpop.xlane.xlu0 %5708
        %v5710 = vsel %vm2382, %v3856, -inf
        %v5711 = vsel %vm2384, %v3857, -inf
        %v5712 = vmax.f32 %v5710, %v5711
        %5713 = vmax.xlane.f32.xlu0 %v5712
        %v5714 = vpop.xlane.xlu0 %5713
        %v5715 = vsel %vm2382, %v3858, -inf
        %v5716 = vsel %vm2384, %v3859, -inf
        %v5717 = vmax.f32 %v5715, %v5716
        %5718 = vmax.xlane.f32.xlu0 %v5717
        %v5719 = vpop.xlane.xlu0 %5718
        %v5720 = vsel %vm2382, %v3860, -inf
        %v5721 = vsel %vm2384, %v3861, -inf
        %v5722 = vmax.f32 %v5720, %v5721
        %5723 = vmax.xlane.f32.xlu0 %v5722
        %v5724 = vpop.xlane.xlu0 %5723
        %v5725 = vsel %vm2382, %v3862, -inf
        %v5726 = vsel %vm2384, %v3863, -inf
        %v5727 = vmax.f32 %v5725, %v5726
        %5728 = vmax.xlane.f32.xlu0 %v5727
        %v5729 = vpop.xlane.xlu0 %5728
        %v5730 = vsel %vm2382, %v3864, -inf
        %v5731 = vsel %vm2384, %v3865, -inf
        %v5732 = vmax.f32 %v5730, %v5731
        %5733 = vmax.xlane.f32.xlu0 %v5732
        %v5734 = vpop.xlane.xlu0 %5733
        %v5735 = vsel %vm2382, %v3866, -inf
        %v5736 = vsel %vm2384, %v3867, -inf
        %v5737 = vmax.f32 %v5735, %v5736
        %5738 = vmax.xlane.f32.xlu0 %v5737
        %v5739 = vpop.xlane.xlu0 %5738
        %v5740 = vsel %vm2382, %v3868, -inf
        %v5741 = vsel %vm2384, %v3869, -inf
        %v5742 = vmax.f32 %v5740, %v5741
        %5743 = vmax.xlane.f32.xlu0 %v5742
        %v5744 = vpop.xlane.xlu0 %5743
        %v5745 = vsel %vm2382, %v3870, -inf
        %v5746 = vsel %vm2384, %v3871, -inf
        %v5747 = vmax.f32 %v5745, %v5746
        %5748 = vmax.xlane.f32.xlu0 %v5747
        %v5749 = vpop.xlane.xlu0 %5748
        %v5750 = vsel %vm2382, %v3872, -inf
        %v5751 = vsel %vm2384, %v3873, -inf
        %v5752 = vmax.f32 %v5750, %v5751
        %5753 = vmax.xlane.f32.xlu0 %v5752
        %v5754 = vpop.xlane.xlu0 %5753
        %v5755 = vsel %vm2382, %v3874, -inf
        %v5756 = vsel %vm2384, %v3875, -inf
        %v5757 = vmax.f32 %v5755, %v5756
        %5758 = vmax.xlane.f32.xlu0 %v5757
        %v5759 = vpop.xlane.xlu0 %5758
        %v5760 = vsel %vm2382, %v3876, -inf
        %v5761 = vsel %vm2384, %v3877, -inf
        %v5762 = vmax.f32 %v5760, %v5761
        %5763 = vmax.xlane.f32.xlu0 %v5762
        %v5764 = vpop.xlane.xlu0 %5763
        %v5765 = vsel %vm2382, %v3878, -inf
        %v5766 = vsel %vm2384, %v3879, -inf
        %v5767 = vmax.f32 %v5765, %v5766
        %5768 = vmax.xlane.f32.xlu0 %v5767
        %v5769 = vpop.xlane.xlu0 %5768
        %v5770 = vsel %vm2382, %v3880, -inf
        %v5771 = vsel %vm2384, %v3881, -inf
        %v5772 = vmax.f32 %v5770, %v5771
        %5773 = vmax.xlane.f32.xlu0 %v5772
        %v5774 = vpop.xlane.xlu0 %5773
        %v5775 = vsel %vm2382, %v3882, -inf
        %v5776 = vsel %vm2384, %v3883, -inf
        %v5777 = vmax.f32 %v5775, %v5776
        %5778 = vmax.xlane.f32.xlu0 %v5777
        %v5779 = vpop.xlane.xlu0 %5778
        %v5780 = vsel %vm2382, %v3884, -inf
        %v5781 = vsel %vm2384, %v3885, -inf
        %v5782 = vmax.f32 %v5780, %v5781
        %5783 = vmax.xlane.f32.xlu0 %v5782
        %v5784 = vpop.xlane.xlu0 %5783
        %v5785 = vsel %vm2382, %v3886, -inf
        %v5786 = vsel %vm2384, %v3887, -inf
        %v5787 = vmax.f32 %v5785, %v5786
        %5788 = vmax.xlane.f32.xlu0 %v5787
        %v5789 = vpop.xlane.xlu0 %5788
        %v5790 = vsub.f32 %v3824, %v5634
        %v5791 = vsub.f32 %v3825, %v5634
        %v5792 = vsub.f32 %v3826, %v5639
        %v5793 = vsub.f32 %v3827, %v5639
        %v5794 = vsub.f32 %v3828, %v5644
        %v5795 = vsub.f32 %v3829, %v5644
        %v5796 = vsub.f32 %v3830, %v5649
        %v5797 = vsub.f32 %v3831, %v5649
        %v5798 = vsub.f32 %v3832, %v5654
        %v5799 = vsub.f32 %v3833, %v5654
        %v5800 = vsub.f32 %v3834, %v5659
        %v5801 = vsub.f32 %v3835, %v5659
        %v5802 = vsub.f32 %v3836, %v5664
        %v5803 = vsub.f32 %v3837, %v5664
        %v5804 = vsub.f32 %v3838, %v5669
        %v5805 = vsub.f32 %v3839, %v5669
        %v5806 = vsub.f32 %v3840, %v5674
        %v5807 = vsub.f32 %v3841, %v5674
        %v5808 = vsub.f32 %v3842, %v5679
        %v5809 = vsub.f32 %v3843, %v5679
        %v5810 = vsub.f32 %v3844, %v5684
        %v5811 = vsub.f32 %v3845, %v5684
        %v5812 = vsub.f32 %v3846, %v5689
        %v5813 = vsub.f32 %v3847, %v5689
        %v5814 = vsub.f32 %v3848, %v5694
        %v5815 = vsub.f32 %v3849, %v5694
        %v5816 = vsub.f32 %v3850, %v5699
        %v5817 = vsub.f32 %v3851, %v5699
        %v5818 = vsub.f32 %v3852, %v5704
        %v5819 = vsub.f32 %v3853, %v5704
        %v5820 = vsub.f32 %v3854, %v5709
        %v5821 = vsub.f32 %v3855, %v5709
        %v5822 = vsub.f32 %v3856, %v5714
        %v5823 = vsub.f32 %v3857, %v5714
        %v5824 = vsub.f32 %v3858, %v5719
        %v5825 = vsub.f32 %v3859, %v5719
        %v5826 = vsub.f32 %v3860, %v5724
        %v5827 = vsub.f32 %v3861, %v5724
        %v5828 = vsub.f32 %v3862, %v5729
        %v5829 = vsub.f32 %v3863, %v5729
        %v5830 = vsub.f32 %v3864, %v5734
        %v5831 = vsub.f32 %v3865, %v5734
        %v5832 = vsub.f32 %v3866, %v5739
        %v5833 = vsub.f32 %v3867, %v5739
        %v5834 = vsub.f32 %v3868, %v5744
        %v5835 = vsub.f32 %v3869, %v5744
        %v5836 = vsub.f32 %v3870, %v5749
        %v5837 = vsub.f32 %v3871, %v5749
        %v5838 = vsub.f32 %v3872, %v5754
        %v5839 = vsub.f32 %v3873, %v5754
        %v5840 = vsub.f32 %v3874, %v5759
        %v5841 = vsub.f32 %v3875, %v5759
        %v5842 = vsub.f32 %v3876, %v5764
        %v5843 = vsub.f32 %v3877, %v5764
        %v5844 = vsub.f32 %v3878, %v5769
        %v5845 = vsub.f32 %v3879, %v5769
        %v5846 = vsub.f32 %v3880, %v5774
        %v5847 = vsub.f32 %v3881, %v5774
        %v5848 = vsub.f32 %v3882, %v5779
        %v5849 = vsub.f32 %v3883, %v5779
        %v5850 = vsub.f32 %v3884, %v5784
        %v5851 = vsub.f32 %v3885, %v5784
        %v5852 = vsub.f32 %v3886, %v5789
        %v5853 = vsub.f32 %v3887, %v5789
        %v5854 = vmul.f32 %v5790, 1.442695
        %v5855 = vpow.pop %v5854
        %v5856 = vmul.f32 %v5791, 1.442695
        %v5857 = vpow.pop %v5856
        %v5858 = vmul.f32 %v5792, 1.442695
        %v5859 = vpow.pop %v5858
        %v5860 = vmul.f32 %v5793, 1.442695
        %v5861 = vpow.pop %v5860
        %v5862 = vmul.f32 %v5794, 1.442695
        %v5863 = vpow.pop %v5862
        %v5864 = vmul.f32 %v5795, 1.442695
        %v5865 = vpow.pop %v5864
        %v5866 = vmul.f32 %v5796, 1.442695
        %v5867 = vpow.pop %v5866
        %v5868 = vmul.f32 %v5797, 1.442695
        %v5869 = vpow.pop %v5868
        %v5870 = vmul.f32 %v5798, 1.442695
        %v5871 = vpow.pop %v5870
        %v5872 = vmul.f32 %v5799, 1.442695
        %v5873 = vpow.pop %v5872
        %v5874 = vmul.f32 %v5800, 1.442695
        %v5875 = vpow.pop %v5874
        %v5876 = vmul.f32 %v5801, 1.442695
        %v5877 = vpow.pop %v5876
        %v5878 = vmul.f32 %v5802, 1.442695
        %v5879 = vpow.pop %v5878
        %v5880 = vmul.f32 %v5803, 1.442695
        %v5881 = vpow.pop %v5880
        %v5882 = vmul.f32 %v5804, 1.442695
        %v5883 = vpow.pop %v5882
        %v5884 = vmul.f32 %v5805, 1.442695
        %v5885 = vpow.pop %v5884
        %v5886 = vmul.f32 %v5806, 1.442695
        %v5887 = vpow.pop %v5886
        %v5888 = vmul.f32 %v5807, 1.442695
        %v5889 = vpow.pop %v5888
        %v5890 = vmul.f32 %v5808, 1.442695
        %v5891 = vpow.pop %v5890
        %v5892 = vmul.f32 %v5809, 1.442695
        %v5893 = vpow.pop %v5892
        %v5894 = vmul.f32 %v5810, 1.442695
        %v5895 = vpow.pop %v5894
        %v5896 = vmul.f32 %v5811, 1.442695
        %v5897 = vpow.pop %v5896
        %v5898 = vmul.f32 %v5812, 1.442695
        %v5899 = vpow.pop %v5898
        %v5900 = vmul.f32 %v5813, 1.442695
        %v5901 = vpow.pop %v5900
        %v5902 = vmul.f32 %v5814, 1.442695
        %v5903 = vpow.pop %v5902
        %v5904 = vmul.f32 %v5815, 1.442695
        %v5905 = vpow.pop %v5904
        %v5906 = vmul.f32 %v5816, 1.442695
        %v5907 = vpow.pop %v5906
        %v5908 = vmul.f32 %v5817, 1.442695
        %v5909 = vpow.pop %v5908
        %v5910 = vmul.f32 %v5818, 1.442695
        %v5911 = vpow.pop %v5910
        %v5912 = vmul.f32 %v5819, 1.442695
        %v5913 = vpow.pop %v5912
        %v5914 = vmul.f32 %v5820, 1.442695
        %v5915 = vpow.pop %v5914
        %v5916 = vmul.f32 %v5821, 1.442695
        %v5917 = vpow.pop %v5916
        %v5918 = vmul.f32 %v5822, 1.442695
        %v5919 = vpow.pop %v5918
        %v5920 = vmul.f32 %v5823, 1.442695
        %v5921 = vpow.pop %v5920
        %v5922 = vmul.f32 %v5824, 1.442695
        %v5923 = vpow.pop %v5922
        %v5924 = vmul.f32 %v5825, 1.442695
        %v5925 = vpow.pop %v5924
        %v5926 = vmul.f32 %v5826, 1.442695
        %v5927 = vpow.pop %v5926
        %v5928 = vmul.f32 %v5827, 1.442695
        %v5929 = vpow.pop %v5928
        %v5930 = vmul.f32 %v5828, 1.442695
        %v5931 = vpow.pop %v5930
        %v5932 = vmul.f32 %v5829, 1.442695
        %v5933 = vpow.pop %v5932
        %v5934 = vmul.f32 %v5830, 1.442695
        %v5935 = vpow.pop %v5934
        %v5936 = vmul.f32 %v5831, 1.442695
        %v5937 = vpow.pop %v5936
        %v5938 = vmul.f32 %v5832, 1.442695
        %v5939 = vpow.pop %v5938
        %v5940 = vmul.f32 %v5833, 1.442695
        %v5941 = vpow.pop %v5940
        %v5942 = vmul.f32 %v5834, 1.442695
        %v5943 = vpow.pop %v5942
        %v5944 = vmul.f32 %v5835, 1.442695
        %v5945 = vpow.pop %v5944
        %v5946 = vmul.f32 %v5836, 1.442695
        %v5947 = vpow.pop %v5946
        %v5948 = vmul.f32 %v5837, 1.442695
        %v5949 = vpow.pop %v5948
        %v5950 = vmul.f32 %v5838, 1.442695
        %v5951 = vpow.pop %v5950
        %v5952 = vmul.f32 %v5839, 1.442695
        %v5953 = vpow.pop %v5952
        %v5954 = vmul.f32 %v5840, 1.442695
        %v5955 = vpow.pop %v5954
        %v5956 = vmul.f32 %v5841, 1.442695
        %v5957 = vpow.pop %v5956
        %v5958 = vmul.f32 %v5842, 1.442695
        %v5959 = vpow.pop %v5958
        %v5960 = vmul.f32 %v5843, 1.442695
        %v5961 = vpow.pop %v5960
        %v5962 = vmul.f32 %v5844, 1.442695
        %v5963 = vpow.pop %v5962
        %v5964 = vmul.f32 %v5845, 1.442695
        %v5965 = vpow.pop %v5964
        %v5966 = vmul.f32 %v5846, 1.442695
        %v5967 = vpow.pop %v5966
        %v5968 = vmul.f32 %v5847, 1.442695
        %v5969 = vpow.pop %v5968
        %v5970 = vmul.f32 %v5848, 1.442695
        %v5971 = vpow.pop %v5970
        %v5972 = vmul.f32 %v5849, 1.442695
        %v5973 = vpow.pop %v5972
        %v5974 = vmul.f32 %v5850, 1.442695
        %v5975 = vpow.pop %v5974
        %v5976 = vmul.f32 %v5851, 1.442695
        %v5977 = vpow.pop %v5976
        %v5978 = vmul.f32 %v5852, 1.442695
        %v5979 = vpow.pop %v5978
        %v5980 = vmul.f32 %v5853, 1.442695
        %v5981 = vpow.pop %v5980
        %6046 = vrot.lane.b32.xlu0 %v5855, 20
        %v6047 = vpop.permute.xlu0 %6046
        %6048 = vrot.lane.b32.xlu0 %v5857, 20
        %v6049 = vpop.permute.xlu0 %6048
        %6050 = vrot.lane.b32.xlu0 %v5859, 20
        %v6051 = vpop.permute.xlu0 %6050
        %6052 = vrot.lane.b32.xlu0 %v5861, 20
        %v6053 = vpop.permute.xlu0 %6052
        %6054 = vrot.lane.b32.xlu0 %v5863, 20
        %v6055 = vpop.permute.xlu0 %6054
        %6056 = vrot.lane.b32.xlu0 %v5865, 20
        %v6057 = vpop.permute.xlu0 %6056
        %6058 = vrot.lane.b32.xlu0 %v5867, 20
        %v6059 = vpop.permute.xlu0 %6058
        %6060 = vrot.lane.b32.xlu0 %v5869, 20
        %v6061 = vpop.permute.xlu0 %6060
        %6062 = vrot.lane.b32.xlu0 %v5871, 20
        %v6063 = vpop.permute.xlu0 %6062
        %6064 = vrot.lane.b32.xlu0 %v5873, 20
        %v6065 = vpop.permute.xlu0 %6064
        %6066 = vrot.lane.b32.xlu0 %v5875, 20
        %v6067 = vpop.permute.xlu0 %6066
        %6068 = vrot.lane.b32.xlu0 %v5877, 20
        %v6069 = vpop.permute.xlu0 %6068
        %6070 = vrot.lane.b32.xlu0 %v5879, 20
        %v6071 = vpop.permute.xlu0 %6070
        %6072 = vrot.lane.b32.xlu0 %v5881, 20
        %v6073 = vpop.permute.xlu0 %6072
        %6074 = vrot.lane.b32.xlu0 %v5883, 20
        %v6075 = vpop.permute.xlu0 %6074
        %6076 = vrot.lane.b32.xlu0 %v5885, 20
        %v6077 = vpop.permute.xlu0 %6076
        %6078 = vrot.lane.b32.xlu0 %v5887, 20
        %v6079 = vpop.permute.xlu0 %6078
        %6080 = vrot.lane.b32.xlu0 %v5889, 20
        %v6081 = vpop.permute.xlu0 %6080
        %6082 = vrot.lane.b32.xlu0 %v5891, 20
        %v6083 = vpop.permute.xlu0 %6082
        %6084 = vrot.lane.b32.xlu0 %v5893, 20
        %v6085 = vpop.permute.xlu0 %6084
        %6086 = vrot.lane.b32.xlu0 %v5895, 20
        %v6087 = vpop.permute.xlu0 %6086
        %6088 = vrot.lane.b32.xlu0 %v5897, 20
        %v6089 = vpop.permute.xlu0 %6088
        %6090 = vrot.lane.b32.xlu0 %v5899, 20
        %v6091 = vpop.permute.xlu0 %6090
        %6092 = vrot.lane.b32.xlu0 %v5901, 20
        %v6093 = vpop.permute.xlu0 %6092
        %6094 = vrot.lane.b32.xlu0 %v5903, 20
        %v6095 = vpop.permute.xlu0 %6094
        %6096 = vrot.lane.b32.xlu0 %v5905, 20
        %v6097 = vpop.permute.xlu0 %6096
        %6098 = vrot.lane.b32.xlu0 %v5907, 20
        %v6099 = vpop.permute.xlu0 %6098
        %6100 = vrot.lane.b32.xlu0 %v5909, 20
        %v6101 = vpop.permute.xlu0 %6100
        %6102 = vrot.lane.b32.xlu0 %v5911, 20
        %v6103 = vpop.permute.xlu0 %6102
        %6104 = vrot.lane.b32.xlu0 %v5913, 20
        %v6105 = vpop.permute.xlu0 %6104
        %6106 = vrot.lane.b32.xlu0 %v5915, 20
        %v6107 = vpop.permute.xlu0 %6106
        %6108 = vrot.lane.b32.xlu0 %v5917, 20
        %v6109 = vpop.permute.xlu0 %6108
        %6110 = vrot.lane.b32.xlu0 %v5919, 20
        %v6111 = vpop.permute.xlu0 %6110
        %6112 = vrot.lane.b32.xlu0 %v5921, 20
        %v6113 = vpop.permute.xlu0 %6112
        %6114 = vrot.lane.b32.xlu0 %v5923, 20
        %v6115 = vpop.permute.xlu0 %6114
        %6116 = vrot.lane.b32.xlu0 %v5925, 20
        %v6117 = vpop.permute.xlu0 %6116
        %6118 = vrot.lane.b32.xlu0 %v5927, 20
        %v6119 = vpop.permute.xlu0 %6118
        %6120 = vrot.lane.b32.xlu0 %v5929, 20
        %v6121 = vpop.permute.xlu0 %6120
        %6122 = vrot.lane.b32.xlu0 %v5931, 20
        %v6123 = vpop.permute.xlu0 %6122
        %6124 = vrot.lane.b32.xlu0 %v5933, 20
        %v6125 = vpop.permute.xlu0 %6124
        %6126 = vrot.lane.b32.xlu0 %v5935, 20
        %v6127 = vpop.permute.xlu0 %6126
        %6128 = vrot.lane.b32.xlu0 %v5937, 20
        %v6129 = vpop.permute.xlu0 %6128
        %6130 = vrot.lane.b32.xlu0 %v5939, 20
        %v6131 = vpop.permute.xlu0 %6130
        %6132 = vrot.lane.b32.xlu0 %v5941, 20
        %v6133 = vpop.permute.xlu0 %6132
        %6134 = vrot.lane.b32.xlu0 %v5943, 20
        %v6135 = vpop.permute.xlu0 %6134
        %6136 = vrot.lane.b32.xlu0 %v5945, 20
        %v6137 = vpop.permute.xlu0 %6136
        %6138 = vrot.lane.b32.xlu0 %v5947, 20
        %v6139 = vpop.permute.xlu0 %6138
        %6140 = vrot.lane.b32.xlu0 %v5949, 20
        %v6141 = vpop.permute.xlu0 %6140
        %6142 = vrot.lane.b32.xlu0 %v5951, 20
        %v6143 = vpop.permute.xlu0 %6142
        %6144 = vrot.lane.b32.xlu0 %v5953, 20
        %v6145 = vpop.permute.xlu0 %6144
        %6146 = vrot.lane.b32.xlu0 %v5955, 20
        %v6147 = vpop.permute.xlu0 %6146
        %6148 = vrot.lane.b32.xlu0 %v5957, 20
        %v6149 = vpop.permute.xlu0 %6148
        %6150 = vrot.lane.b32.xlu0 %v5959, 20
        %v6151 = vpop.permute.xlu0 %6150
        %6152 = vrot.lane.b32.xlu0 %v5961, 20
        %v6153 = vpop.permute.xlu0 %6152
        %6154 = vrot.lane.b32.xlu0 %v5963, 20
        %v6155 = vpop.permute.xlu0 %6154
        %6156 = vrot.lane.b32.xlu0 %v5965, 20
        %v6157 = vpop.permute.xlu0 %6156
        %6158 = vrot.lane.b32.xlu0 %v5967, 20
        %v6159 = vpop.permute.xlu0 %6158
        %6160 = vrot.lane.b32.xlu0 %v5969, 20
        %v6161 = vpop.permute.xlu0 %6160
        %6162 = vrot.lane.b32.xlu0 %v5971, 20
        %v6163 = vpop.permute.xlu0 %6162
        %6164 = vrot.lane.b32.xlu0 %v5973, 20
        %v6165 = vpop.permute.xlu0 %6164
        %6166 = vrot.lane.b32.xlu0 %v5975, 20
        %v6167 = vpop.permute.xlu0 %6166
        %6168 = vrot.lane.b32.xlu0 %v5977, 20
        %v6169 = vpop.permute.xlu0 %6168
        %6170 = vrot.lane.b32.xlu0 %v5979, 20
        %v6171 = vpop.permute.xlu0 %6170
        %6172 = vrot.lane.b32.xlu0 %v5981, 20
        %v6173 = vpop.permute.xlu0 %6172
        %v6174 = vsel %vm2928, %v6047, %v6049
        %v6175 = vsel %vm2928, %v6051, %v6053
        %v6176 = vsel %vm2928, %v6055, %v6057
        %v6177 = vsel %vm2928, %v6059, %v6061
        %v6178 = vsel %vm2928, %v6063, %v6065
        %v6179 = vsel %vm2928, %v6067, %v6069
        %v6180 = vsel %vm2928, %v6071, %v6073
        %v6181 = vsel %vm2928, %v6075, %v6077
        %v6182 = vsel %vm2928, %v6079, %v6081
        %v6183 = vsel %vm2928, %v6083, %v6085
        %v6184 = vsel %vm2928, %v6087, %v6089
        %v6185 = vsel %vm2928, %v6091, %v6093
        %v6186 = vsel %vm2928, %v6095, %v6097
        %v6187 = vsel %vm2928, %v6099, %v6101
        %v6188 = vsel %vm2928, %v6103, %v6105
        %v6189 = vsel %vm2928, %v6107, %v6109
        %v6190 = vsel %vm2928, %v6111, %v6113
        %v6191 = vsel %vm2928, %v6115, %v6117
        %v6192 = vsel %vm2928, %v6119, %v6121
        %v6193 = vsel %vm2928, %v6123, %v6125
        %v6194 = vsel %vm2928, %v6127, %v6129
        %v6195 = vsel %vm2928, %v6131, %v6133
        %v6196 = vsel %vm2928, %v6135, %v6137
        %v6197 = vsel %vm2928, %v6139, %v6141
        %v6198 = vsel %vm2928, %v6143, %v6145
        %v6199 = vsel %vm2928, %v6147, %v6149
        %v6200 = vsel %vm2928, %v6151, %v6153
        %v6201 = vsel %vm2928, %v6155, %v6157
        %v6202 = vsel %vm2928, %v6159, %v6161
        %v6203 = vsel %vm2928, %v6163, %v6165
        %v6204 = vsel %vm2928, %v6167, %v6169
        %v6205 = vsel %vm2928, %v6171, %v6173
        %v6238 = vsel %vm638, %v6174, 0.0
        %6239 = vadd.xlane.f32.xlu0 %v6238
        %v6240 = vpop.xlane.xlu0 %6239
        %v6241 = vsel %vm638, %v6175, 0.0
        %6242 = vadd.xlane.f32.xlu0 %v6241
        %v6243 = vpop.xlane.xlu0 %6242
        %v6244 = vsel %vm638, %v6176, 0.0
        %6245 = vadd.xlane.f32.xlu0 %v6244
        %v6246 = vpop.xlane.xlu0 %6245
        %v6247 = vsel %vm638, %v6177, 0.0
        %6248 = vadd.xlane.f32.xlu0 %v6247
        %v6249 = vpop.xlane.xlu0 %6248
        %v6250 = vsel %vm638, %v6178, 0.0
        %6251 = vadd.xlane.f32.xlu0 %v6250
        %v6252 = vpop.xlane.xlu0 %6251
        %v6253 = vsel %vm638, %v6179, 0.0
        %6254 = vadd.xlane.f32.xlu0 %v6253
        %v6255 = vpop.xlane.xlu0 %6254
        %v6256 = vsel %vm638, %v6180, 0.0
        %6257 = vadd.xlane.f32.xlu0 %v6256
        %v6258 = vpop.xlane.xlu0 %6257
        %v6259 = vsel %vm638, %v6181, 0.0
        %6260 = vadd.xlane.f32.xlu0 %v6259
        %v6261 = vpop.xlane.xlu0 %6260
        %v6262 = vsel %vm638, %v6182, 0.0
        %6263 = vadd.xlane.f32.xlu0 %v6262
        %v6264 = vpop.xlane.xlu0 %6263
        %v6265 = vsel %vm638, %v6183, 0.0
        %6266 = vadd.xlane.f32.xlu0 %v6265
        %v6267 = vpop.xlane.xlu0 %6266
        %v6268 = vsel %vm638, %v6184, 0.0
        %6269 = vadd.xlane.f32.xlu0 %v6268
        %v6270 = vpop.xlane.xlu0 %6269
        %v6271 = vsel %vm638, %v6185, 0.0
        %6272 = vadd.xlane.f32.xlu0 %v6271
        %v6273 = vpop.xlane.xlu0 %6272
        %v6274 = vsel %vm638, %v6186, 0.0
        %6275 = vadd.xlane.f32.xlu0 %v6274
        %v6276 = vpop.xlane.xlu0 %6275
        %v6277 = vsel %vm638, %v6187, 0.0
        %6278 = vadd.xlane.f32.xlu0 %v6277
        %v6279 = vpop.xlane.xlu0 %6278
        %v6280 = vsel %vm638, %v6188, 0.0
        %6281 = vadd.xlane.f32.xlu0 %v6280
        %v6282 = vpop.xlane.xlu0 %6281
        %v6283 = vsel %vm638, %v6189, 0.0
        %6284 = vadd.xlane.f32.xlu0 %v6283
        %v6285 = vpop.xlane.xlu0 %6284
        %v6286 = vsel %vm638, %v6190, 0.0
        %6287 = vadd.xlane.f32.xlu0 %v6286
        %v6288 = vpop.xlane.xlu0 %6287
        %v6289 = vsel %vm638, %v6191, 0.0
        %6290 = vadd.xlane.f32.xlu0 %v6289
        %v6291 = vpop.xlane.xlu0 %6290
        %v6292 = vsel %vm638, %v6192, 0.0
        %6293 = vadd.xlane.f32.xlu0 %v6292
        %v6294 = vpop.xlane.xlu0 %6293
        %v6295 = vsel %vm638, %v6193, 0.0
        %6296 = vadd.xlane.f32.xlu0 %v6295
        %v6297 = vpop.xlane.xlu0 %6296
        %v6298 = vsel %vm638, %v6194, 0.0
        %6299 = vadd.xlane.f32.xlu0 %v6298
        %v6300 = vpop.xlane.xlu0 %6299
        %v6301 = vsel %vm638, %v6195, 0.0
        %6302 = vadd.xlane.f32.xlu0 %v6301
        %v6303 = vpop.xlane.xlu0 %6302
        %v6304 = vsel %vm638, %v6196, 0.0
        %6305 = vadd.xlane.f32.xlu0 %v6304
        %v6306 = vpop.xlane.xlu0 %6305
        %v6307 = vsel %vm638, %v6197, 0.0
        %6308 = vadd.xlane.f32.xlu0 %v6307
        %v6309 = vpop.xlane.xlu0 %6308
        %v6310 = vsel %vm638, %v6198, 0.0
        %6311 = vadd.xlane.f32.xlu0 %v6310
        %v6312 = vpop.xlane.xlu0 %6311
        %v6313 = vsel %vm638, %v6199, 0.0
        %6314 = vadd.xlane.f32.xlu0 %v6313
        %v6315 = vpop.xlane.xlu0 %6314
        %v6316 = vsel %vm638, %v6200, 0.0
        %6317 = vadd.xlane.f32.xlu0 %v6316
        %v6318 = vpop.xlane.xlu0 %6317
        %v6319 = vsel %vm638, %v6201, 0.0
        %6320 = vadd.xlane.f32.xlu0 %v6319
        %v6321 = vpop.xlane.xlu0 %6320
        %v6322 = vsel %vm638, %v6202, 0.0
        %6323 = vadd.xlane.f32.xlu0 %v6322
        %v6324 = vpop.xlane.xlu0 %6323
        %v6325 = vsel %vm638, %v6203, 0.0
        %6326 = vadd.xlane.f32.xlu0 %v6325
        %v6327 = vpop.xlane.xlu0 %6326
        %v6328 = vsel %vm638, %v6204, 0.0
        %6329 = vadd.xlane.f32.xlu0 %v6328
        %v6330 = vpop.xlane.xlu0 %6329
        %v6331 = vsel %vm638, %v6205, 0.0
        %6332 = vadd.xlane.f32.xlu0 %v6331
        %v6333 = vpop.xlane.xlu0 %6332
        %v6334 = vrcp.pop %v6240
        %v6335 = vrcp.pop %v6243
        %v6336 = vrcp.pop %v6246
        %v6337 = vrcp.pop %v6249
        %v6338 = vrcp.pop %v6252
        %v6339 = vrcp.pop %v6255
        %v6340 = vrcp.pop %v6258
        %v6341 = vrcp.pop %v6261
        %v6342 = vrcp.pop %v6264
        %v6343 = vrcp.pop %v6267
        %v6344 = vrcp.pop %v6270
        %v6345 = vrcp.pop %v6273
        %v6346 = vrcp.pop %v6276
        %v6347 = vrcp.pop %v6279
        %v6348 = vrcp.pop %v6282
        %v6349 = vrcp.pop %v6285
        %v6350 = vrcp.pop %v6288
        %v6351 = vrcp.pop %v6291
        %v6352 = vrcp.pop %v6294
        %v6353 = vrcp.pop %v6297
        %v6354 = vrcp.pop %v6300
        %v6355 = vrcp.pop %v6303
        %v6356 = vrcp.pop %v6306
        %v6357 = vrcp.pop %v6309
        %v6358 = vrcp.pop %v6312
        %v6359 = vrcp.pop %v6315
        %v6360 = vrcp.pop %v6318
        %v6361 = vrcp.pop %v6321
        %v6362 = vrcp.pop %v6324
        %v6363 = vrcp.pop %v6327
        %v6364 = vrcp.pop %v6330
        %v6365 = vrcp.pop %v6333
        %v6366 = vmul.f32 %v5855, %v6334
        %v6367 = vmul.f32 %v5857, %v6334
        %v6368 = vmul.f32 %v5859, %v6335
        %v6369 = vmul.f32 %v5861, %v6335
        %v6370 = vmul.f32 %v5863, %v6336
        %v6371 = vmul.f32 %v5865, %v6336
        %v6372 = vmul.f32 %v5867, %v6337
        %v6373 = vmul.f32 %v5869, %v6337
        %v6374 = vmul.f32 %v5871, %v6338
        %v6375 = vmul.f32 %v5873, %v6338
        %v6376 = vmul.f32 %v5875, %v6339
        %v6377 = vmul.f32 %v5877, %v6339
        %v6378 = vmul.f32 %v5879, %v6340
        %v6379 = vmul.f32 %v5881, %v6340
        %v6380 = vmul.f32 %v5883, %v6341
        %v6381 = vmul.f32 %v5885, %v6341
        %v6382 = vmul.f32 %v5887, %v6342
        %v6383 = vmul.f32 %v5889, %v6342
        %v6384 = vmul.f32 %v5891, %v6343
        %v6385 = vmul.f32 %v5893, %v6343
        %v6386 = vmul.f32 %v5895, %v6344
        %v6387 = vmul.f32 %v5897, %v6344
        %v6388 = vmul.f32 %v5899, %v6345
        %v6389 = vmul.f32 %v5901, %v6345
        %v6390 = vmul.f32 %v5903, %v6346
        %v6391 = vmul.f32 %v5905, %v6346
        %v6392 = vmul.f32 %v5907, %v6347
        %v6393 = vmul.f32 %v5909, %v6347
        %v6394 = vmul.f32 %v5911, %v6348
        %v6395 = vmul.f32 %v5913, %v6348
        %v6396 = vmul.f32 %v5915, %v6349
        %v6397 = vmul.f32 %v5917, %v6349
        %v6398 = vmul.f32 %v5919, %v6350
        %v6399 = vmul.f32 %v5921, %v6350
        %v6400 = vmul.f32 %v5923, %v6351
        %v6401 = vmul.f32 %v5925, %v6351
        %v6402 = vmul.f32 %v5927, %v6352
        %v6403 = vmul.f32 %v5929, %v6352
        %v6404 = vmul.f32 %v5931, %v6353
        %v6405 = vmul.f32 %v5933, %v6353
        %v6406 = vmul.f32 %v5935, %v6354
        %v6407 = vmul.f32 %v5937, %v6354
        %v6408 = vmul.f32 %v5939, %v6355
        %v6409 = vmul.f32 %v5941, %v6355
        %v6410 = vmul.f32 %v5943, %v6356
        %v6411 = vmul.f32 %v5945, %v6356
        %v6412 = vmul.f32 %v5947, %v6357
        %v6413 = vmul.f32 %v5949, %v6357
        %v6414 = vmul.f32 %v5951, %v6358
        %v6415 = vmul.f32 %v5953, %v6358
        %v6416 = vmul.f32 %v5955, %v6359
        %v6417 = vmul.f32 %v5957, %v6359
        %v6418 = vmul.f32 %v5959, %v6360
        %v6419 = vmul.f32 %v5961, %v6360
        %v6420 = vmul.f32 %v5963, %v6361
        %v6421 = vmul.f32 %v5965, %v6361
        %v6422 = vmul.f32 %v5967, %v6362
        %v6423 = vmul.f32 %v5969, %v6362
        %v6424 = vmul.f32 %v5971, %v6363
        %v6425 = vmul.f32 %v5973, %v6363
        %v6426 = vmul.f32 %v5975, %v6364
        %v6427 = vmul.f32 %v5977, %v6364
        %v6428 = vmul.f32 %v5979, %v6365
        %v6429 = vmul.f32 %v5981, %v6365
        %v6430 = vsel %vm2382, %v6366, 0.0
        %v6431 = vsel %vm2382, %v6382, 0.0
        %v6432 = vadd.f32 %v6430, %v6431
        %v6433 = vsel %vm2382, %v6398, 0.0
        %v6434 = vadd.f32 %v6432, %v6433
        %v6435 = vsel %vm2382, %v6414, 0.0
        %v6436 = vadd.f32 %v6434, %v6435
        %v6437 = vsel %vm2384, %v6367, 0.0
        %v6438 = vsel %vm2384, %v6383, 0.0
        %v6439 = vadd.f32 %v6437, %v6438
        %v6440 = vsel %vm2384, %v6399, 0.0
        %v6441 = vadd.f32 %v6439, %v6440
        %v6442 = vsel %vm2384, %v6415, 0.0
        %v6443 = vadd.f32 %v6441, %v6442
        %v6444 = vsel %vm2382, %v6368, 0.0
        %v6445 = vsel %vm2382, %v6384, 0.0
        %v6446 = vadd.f32 %v6444, %v6445
        %v6447 = vsel %vm2382, %v6400, 0.0
        %v6448 = vadd.f32 %v6446, %v6447
        %v6449 = vsel %vm2382, %v6416, 0.0
        %v6450 = vadd.f32 %v6448, %v6449
        %v6451 = vsel %vm2384, %v6369, 0.0
        %v6452 = vsel %vm2384, %v6385, 0.0
        %v6453 = vadd.f32 %v6451, %v6452
        %v6454 = vsel %vm2384, %v6401, 0.0
        %v6455 = vadd.f32 %v6453, %v6454
        %v6456 = vsel %vm2384, %v6417, 0.0
        %v6457 = vadd.f32 %v6455, %v6456
        %v6458 = vsel %vm2382, %v6370, 0.0
        %v6459 = vsel %vm2382, %v6386, 0.0
        %v6460 = vadd.f32 %v6458, %v6459
        %v6461 = vsel %vm2382, %v6402, 0.0
        %v6462 = vadd.f32 %v6460, %v6461
        %v6463 = vsel %vm2382, %v6418, 0.0
        %v6464 = vadd.f32 %v6462, %v6463
        %v6465 = vsel %vm2384, %v6371, 0.0
        %v6466 = vsel %vm2384, %v6387, 0.0
        %v6467 = vadd.f32 %v6465, %v6466
        %v6468 = vsel %vm2384, %v6403, 0.0
        %v6469 = vadd.f32 %v6467, %v6468
        %v6470 = vsel %vm2384, %v6419, 0.0
        %v6471 = vadd.f32 %v6469, %v6470
        %v6472 = vsel %vm2382, %v6372, 0.0
        %v6473 = vsel %vm2382, %v6388, 0.0
        %v6474 = vadd.f32 %v6472, %v6473
        %v6475 = vsel %vm2382, %v6404, 0.0
        %v6476 = vadd.f32 %v6474, %v6475
        %v6477 = vsel %vm2382, %v6420, 0.0
        %v6478 = vadd.f32 %v6476, %v6477
        %v6479 = vsel %vm2384, %v6373, 0.0
        %v6480 = vsel %vm2384, %v6389, 0.0
        %v6481 = vadd.f32 %v6479, %v6480
        %v6482 = vsel %vm2384, %v6405, 0.0
        %v6483 = vadd.f32 %v6481, %v6482
        %v6484 = vsel %vm2384, %v6421, 0.0
        %v6485 = vadd.f32 %v6483, %v6484
        %v6486 = vsel %vm2382, %v6374, 0.0
        %v6487 = vsel %vm2382, %v6390, 0.0
        %v6488 = vadd.f32 %v6486, %v6487
        %v6489 = vsel %vm2382, %v6406, 0.0
        %v6490 = vadd.f32 %v6488, %v6489
        %v6491 = vsel %vm2382, %v6422, 0.0
        %v6492 = vadd.f32 %v6490, %v6491
        %v6493 = vsel %vm2384, %v6375, 0.0
        %v6494 = vsel %vm2384, %v6391, 0.0
        %v6495 = vadd.f32 %v6493, %v6494
        %v6496 = vsel %vm2384, %v6407, 0.0
        %v6497 = vadd.f32 %v6495, %v6496
        %v6498 = vsel %vm2384, %v6423, 0.0
        %v6499 = vadd.f32 %v6497, %v6498
        %v6500 = vsel %vm2382, %v6376, 0.0
        %v6501 = vsel %vm2382, %v6392, 0.0
        %v6502 = vadd.f32 %v6500, %v6501
        %v6503 = vsel %vm2382, %v6408, 0.0
        %v6504 = vadd.f32 %v6502, %v6503
        %v6505 = vsel %vm2382, %v6424, 0.0
        %v6506 = vadd.f32 %v6504, %v6505
        %v6507 = vsel %vm2384, %v6377, 0.0
        %v6508 = vsel %vm2384, %v6393, 0.0
        %v6509 = vadd.f32 %v6507, %v6508
        %v6510 = vsel %vm2384, %v6409, 0.0
        %v6511 = vadd.f32 %v6509, %v6510
        %v6512 = vsel %vm2384, %v6425, 0.0
        %v6513 = vadd.f32 %v6511, %v6512
        %v6514 = vsel %vm2382, %v6378, 0.0
        %v6515 = vsel %vm2382, %v6394, 0.0
        %v6516 = vadd.f32 %v6514, %v6515
        %v6517 = vsel %vm2382, %v6410, 0.0
        %v6518 = vadd.f32 %v6516, %v6517
        %v6519 = vsel %vm2382, %v6426, 0.0
        %v6520 = vadd.f32 %v6518, %v6519
        %v6521 = vsel %vm2384, %v6379, 0.0
        %v6522 = vsel %vm2384, %v6395, 0.0
        %v6523 = vadd.f32 %v6521, %v6522
        %v6524 = vsel %vm2384, %v6411, 0.0
        %v6525 = vadd.f32 %v6523, %v6524
        %v6526 = vsel %vm2384, %v6427, 0.0
        %v6527 = vadd.f32 %v6525, %v6526
        %v6528 = vsel %vm2382, %v6380, 0.0
        %v6529 = vsel %vm2382, %v6396, 0.0
        %v6530 = vadd.f32 %v6528, %v6529
        %v6531 = vsel %vm2382, %v6412, 0.0
        %v6532 = vadd.f32 %v6530, %v6531
        %v6533 = vsel %vm2382, %v6428, 0.0
        %v6534 = vadd.f32 %v6532, %v6533
        %v6535 = vsel %vm2384, %v6381, 0.0
        %v6536 = vsel %vm2384, %v6397, 0.0
        %v6537 = vadd.f32 %v6535, %v6536
        %v6538 = vsel %vm2384, %v6413, 0.0
        %v6539 = vadd.f32 %v6537, %v6538
        %v6540 = vsel %vm2384, %v6429, 0.0
        %v6541 = vadd.f32 %v6539, %v6540
        %s6542 = scalar_lea.vmem %s208, 280
        %v6543 = vld [vmem:[%s6542] sm:$0xff]
        %v6544 = vld [vmem:[%s6542 + $0x8] sm:$0xff]
        %v6545 = vld [vmem:[%s6542 + $0x10] sm:$0xff]
        %v6546 = vld [vmem:[%s6542 + $0x18] sm:$0xff]
        %v6547 = vld [vmem:[%s6542 + $0x20] sm:$0xf]
        %6564 = vrot.lane.b32.xlu0 %v6436, 20
        %v6565 = vpop.permute.xlu0 %6564
        %6566 = vrot.lane.b32.xlu0 %v6443, 20
        %v6567 = vpop.permute.xlu0 %6566
        %6568 = vrot.lane.b32.xlu0 %v6450, 20
        %v6569 = vpop.permute.xlu0 %6568
        %6570 = vrot.lane.b32.xlu0 %v6457, 20
        %v6571 = vpop.permute.xlu0 %6570
        %6572 = vrot.lane.b32.xlu0 %v6464, 20
        %v6573 = vpop.permute.xlu0 %6572
        %6574 = vrot.lane.b32.xlu0 %v6471, 20
        %v6575 = vpop.permute.xlu0 %6574
        %6576 = vrot.lane.b32.xlu0 %v6478, 20
        %v6577 = vpop.permute.xlu0 %6576
        %6578 = vrot.lane.b32.xlu0 %v6485, 20
        %v6579 = vpop.permute.xlu0 %6578
        %6580 = vrot.lane.b32.xlu0 %v6492, 20
        %v6581 = vpop.permute.xlu0 %6580
        %6582 = vrot.lane.b32.xlu0 %v6499, 20
        %v6583 = vpop.permute.xlu0 %6582
        %6584 = vrot.lane.b32.xlu0 %v6506, 20
        %v6585 = vpop.permute.xlu0 %6584
        %6586 = vrot.lane.b32.xlu0 %v6513, 20
        %v6587 = vpop.permute.xlu0 %6586
        %6588 = vrot.lane.b32.xlu0 %v6520, 20
        %v6589 = vpop.permute.xlu0 %6588
        %6590 = vrot.lane.b32.xlu0 %v6527, 20
        %v6591 = vpop.permute.xlu0 %6590
        %6592 = vrot.lane.b32.xlu0 %v6534, 20
        %v6593 = vpop.permute.xlu0 %6592
        %6594 = vrot.lane.b32.xlu0 %v6541, 20
        %v6595 = vpop.permute.xlu0 %6594
        %v6596 = vsel %vm2928, %v6565, %v6567
        %v6597 = vsel %vm2928, %v6569, %v6571
        %v6598 = vsel %vm2928, %v6573, %v6575
        %v6599 = vsel %vm2928, %v6577, %v6579
        %v6600 = vsel %vm2928, %v6581, %v6583
        %v6601 = vsel %vm2928, %v6585, %v6587
        %v6602 = vsel %vm2928, %v6589, %v6591
        %v6603 = vsel %vm2928, %v6593, %v6595
        %v6604 = vsel %vm638, %v6596, 0
        %v6606 = vsel %vm638, %v6597, 0
        %v6608 = vsel %vm638, %v6598, 0
        %v6610 = vsel %vm638, %v6599, 0
        %v6612 = vsel %vm638, %v6600, 0
        %v6614 = vsel %vm638, %v6601, 0
        %v6616 = vsel %vm638, %v6602, 0
        %v6618 = vsel %vm638, %v6603, 0
        %v6621 = vsel %vm343, %v6547, 0
        %6623 = vmatpush.msra.mxu0 0.0
        %6624 = vmatpush.msra.mxu0 0.0
        %6625 = vmatpush.msra.mxu0 0.0
        %6626 = vmatpush.msra.mxu0 0.0
        %6627 = vmatpush.msra.mxu0 0.0
        %6628 = vmatpush.msra.mxu0 0.0
        %6629 = vmatpush.msra.mxu0 0.0
        %6630 = vmatpush.msra.mxu0 0.0
        %6631 = vmatpush.msra.mxu0 0.0
        %6632 = vmatpush.msra.mxu0 0.0
        %6633 = vmatpush.msra.mxu0 0.0
        %6634 = vmatpush.msra.mxu0 %v6621
        %6635 = vmatpush.msra.mxu0 %v6546
        %6636 = vmatpush.msra.mxu0 %v6545
        %6637 = vmatpush.msra.mxu0 %v6544
        %6638 = vmatpush.msra.mxu0 %v6543
        %6639 = vmatmul.f32.gmra.mxu0 %v6604
        %v6640 = vpop.f32.mrf.mxu0
        %v6641 = vadd.f32 0.0, %v6640
        %6642 = vmatmul.f32.gmra.mxu0 %v6606
        %v6643 = vpop.f32.mrf.mxu0
        %v6644 = vadd.f32 0.0, %v6643
        %6645 = vmatmul.f32.gmra.mxu0 %v6608
        %v6646 = vpop.f32.mrf.mxu0
        %v6647 = vadd.f32 0.0, %v6646
        %6648 = vmatmul.f32.gmra.mxu0 %v6610
        %v6649 = vpop.f32.mrf.mxu0
        %v6650 = vadd.f32 0.0, %v6649
        %6651 = vmatmul.f32.gmra.mxu0 %v6612
        %v6652 = vpop.f32.mrf.mxu0
        %v6653 = vadd.f32 0.0, %v6652
        %6654 = vmatmul.f32.gmra.mxu0 %v6614
        %v6655 = vpop.f32.mrf.mxu0
        %v6656 = vadd.f32 0.0, %v6655
        %6657 = vmatmul.f32.gmra.mxu0 %v6616
        %v6658 = vpop.f32.mrf.mxu0
        %v6659 = vadd.f32 0.0, %v6658
        %6660 = vmatmul.f32.gmra.mxu0 %v6618
        %v6661 = vpop.f32.mrf.mxu0
        %v6662 = vadd.f32 0.0, %v6661
        %6663 = vdwg.mxu0
        %v6664 = vadd.f32 %v5622, %v6641
        %v6665 = vadd.f32 %v5623, %v6644
        %v6666 = vadd.f32 %v5624, %v6647
        %v6667 = vadd.f32 %v5625, %v6650
        %v6668 = vadd.f32 %v5626, %v6653
        %v6669 = vadd.f32 %v5627, %v6656
        %v6670 = vadd.f32 %v5628, %v6659
        %v6671 = vadd.f32 %v5629, %v6662
        %6672 = vxpose.xlu0.b32.start [1/16] %v6664, 128
        %6673 = vxpose.xlu0.b32.cont [2/16] %v6665, 128
        %6674 = vxpose.xlu0.b32.cont [3/16] %v6666, 128
        %6675 = vxpose.xlu0.b32.cont [4/16] %v6667, 128
        %6676 = vxpose.xlu0.b32.cont [5/16] %v6668, 128
        %6677 = vxpose.xlu0.b32.cont [6/16] %v6669, 128
        %6678 = vxpose.xlu0.b32.cont [7/16] %v6670, 128
        %6679 = vxpose.xlu0.b32.cont [8/16] %v6671, 128
        %6680 = vxpose.xlu0.b32.cont [9/16] 0.0, 128
        %6681 = vxpose.xlu0.b32.cont [10/16] 0.0, 128
        %6682 = vxpose.xlu0.b32.cont [11/16] 0.0, 128
        %6683 = vxpose.xlu0.b32.cont [12/16] 0.0, 128
        %6684 = vxpose.xlu0.b32.cont [13/16] 0.0, 128
        %6685 = vxpose.xlu0.b32.cont [14/16] 0.0, 128
        %6686 = vxpose.xlu0.b32.cont [15/16] 0.0, 128
        %6687 = vxpose.xlu0.b32.end [16/16] 0.0, 128
        %v6688 = vpop.trf.xlu0
        %v6689 = vpop.trf.xlu0
        %v6690 = vpop.trf.xlu0
        %v6691 = vpop.trf.xlu0
        %v6692 = vpop.trf.xlu0
        %v6693 = vpop.trf.xlu0
        %v6694 = vpop.trf.xlu0
        %v6695 = vpop.trf.xlu0
        %v6696 = vpop.trf.xlu0
        %v6697 = vpop.trf.xlu0
        %v6698 = vpop.trf.xlu0
        %v6699 = vpop.trf.xlu0
        %v6700 = vpop.trf.xlu0
        %v6701 = vpop.trf.xlu0
        %v6702 = vpop.trf.xlu0
        %v6703 = vpop.trf.xlu0
        %6705 = vrot.lane.b32.xlu0 %v6688, 64
        %v6706 = vpop.permute.xlu0 %6705
        %vm6708 = vcmask 523264
        %v6709 = vsel %vm6708, %v3443, %v6706
        %6710 = vst [vmem:[%s193] sm:$0xf] %v6709
        %s6711 = sand.u32 %s103, 1
        %s6712 = scalar_lea.sflag [#allocation3], %s6711
        %s6713 = sand.u32 %s103, 1
        %s6714 = smul.addr %s6713, 4
        %s6715 = scalar_lea.vmem [#allocation2], %s6714
        // Predicated region
        $region33: #{tpu_custom_call.1} parent=31 // pred_check
          %p6716 = pneg %p113
        $region34: #{tpu_custom_call.1} parent=31 // pred_check_branch
          %6718 = sbr.rel (%p6716) target = $region36
        $region35: #{tpu_custom_call.1} parent=31 // pred_region
          %6720 = vsyncadd %s6712, 0
          %s6721 = smul.addr %s17, 4
          %s6722 = scalar_lea.hbm %s3, %s6721
          %s6724 = sshll.u32 %s6715, 4
          %s6725 = int_to_ptr.vmem [resolvable:$true] %s6724
          %s6726 = sshll.u32 %s6722, 4
          %s6727 = int_to_ptr.hbm [resolvable:$true] %s6726
          %6729 = dma.vmem_to_hbm [thread:$0]  %s6725, 64, %s6727, %s6712
        $region36: #{tpu_custom_call.1} parent=31 // pred_fallthru
          _
      $region32: #{tpu_custom_call.1} parent=5 // pred_fallthru
        _
      %p6730 = scmp.le.s32.totalorder 2, %s12
      // Predicated region
      $region37: #{tpu_custom_call.1} parent=5 // pred_check
        %p6731 = pneg %p6730
      $region38: #{tpu_custom_call.1} parent=5 // pred_check_branch
        %6733 = sbr.rel (%p6731) target = $region40
      $region39: #{tpu_custom_call.1} parent=5 // pred_region
        %s6734 = ssub.s32 %s12, 2
        // Predicated region
        $region41: #{tpu_custom_call.1} parent=39 // pred_check
          %p6735 = pneg %p119
        $region42: #{tpu_custom_call.1} parent=39 // pred_check_branch
          %6737 = sbr.rel (%p6735) target = $region44
        $region43: #{tpu_custom_call.1} parent=39 // pred_region
          %s6738 = sand.u32 %s104, 1
          %s6739 = scalar_lea.sflag [#allocation3], %s6738
          %s6740 = sand.u32 %s104, 1
          %s6741 = smul.addr %s6740, 4
          %s6742 = scalar_lea.vmem [#allocation2], %s6741
          %6744 = dma.done %s6739, 64
        $region44: #{tpu_custom_call.1} parent=39 // pred_fallthru
          _
      $region40: #{tpu_custom_call.1} parent=5 // pred_fallthru
        _
    $region6: #{tpu_custom_call.1} parent=1 // loop_footer
      %s16 = sadd.s32 1, %s12
    $region7: #{tpu_custom_call.1} parent=1 // loop_footer_branch
      %11 = sbr.rel target = $region3
    $region8: #{tpu_custom_call.1} parent=1 // loop_exit
      _
    %6745 = vsyncpa [#allocation3], 1
    %s6746 = scalar_lea.sflag [#allocation3], 1
    %6747 = vsyncpa %s6746, 1

</llo_original>
